<compile_context>
chip_gen: v6e
topology: v6e:2x2x1
jax: 0.10.0
libtpu: 0.0.40
codegen_flags: <defaults>
</compile_context>

<pallas_src>
import functools
import math

import jax
import jax.numpy as jnp
import numpy as np
from jax.experimental import pallas as pl
from jax.experimental.pallas import tpu as pltpu


# -----------------------------------------------------------------------------
# Kernel
# -----------------------------------------------------------------------------
def _transformer_block_kernel(
    x_ref,            # (S, dim)              f32  activations (one batch element)
    wqkv_ref,         # (dim, (H+2*KVH)*D)    cdt  fused wq|wk|wv (q/k cols de-interleaved, scale in wq)
    wo_ref,           # (H, D, dim)           cdt  output projection, per head
    w13_ref,          # (dim, 2*hid)          cdt  fused w1|w3
    w2_ref,           # (hid, dim)            cdt
    anw_ref, fnw_ref, # (1, dim)              f32  RMSNorm weights
    cos_ref, sin_ref, # (S, D)                f32  compact rotary tables (rotate-half layout)
    out_ref,          # (S, dim)              f32
    *, H, KVH, eps):
  S, dim = x_ref.shape
  D = cos_ref.shape[1]
  Dh = D // 2
  n_rep = H // KVH
  hid = w2_ref.shape[0]
  cdt = wqkv_ref.dtype            # MXU input dtype (bf16 in the fast path)

  x = x_ref[...]

  def rmsnorm(v, w_ref):
    ms = jnp.mean(v * v, axis=-1, keepdims=True)
    return (v * jax.lax.rsqrt(ms + eps)) * w_ref[...]

  # ------------------------------ attention ----------------------------------
  xn = rmsnorm(x, anw_ref).astype(cdt)
  # one wide fused QKV matmul
  qkv = jnp.dot(xn, wqkv_ref[...], preferred_element_type=jnp.float32)  # (S, (H+2*KVH)*D)

  cos = cos_ref[...]
  sin = sin_ref[...]

  def rope(t):
    # Columns de-interleaved per head host-side (rotate-half form), so RoPE on one
    # head's (S, D=128) slice is a single in-vreg lane rotation (XLU) + two FMAs.
    return t * cos + pltpu.roll(t, Dh, axis=1) * sin

  def head(off, h):                # 128-lane-aligned window of head h
    return qkv[:, off + h * D: off + (h + 1) * D]

  # heads become the leading (batch) axis: (H, S, D) — lane-aligned, no shuffles
  q_heads = jnp.stack([rope(head(0, h)) for h in range(H)], axis=0).astype(cdt)
  k_list = [rope(head(H * D, g)).astype(cdt) for g in range(KVH)]
  v_list = [head((H + KVH) * D, g).astype(cdt) for g in range(KVH)]
  # GQA: repeat K/V *activations* across query heads (weights stay at KVH heads)
  k_heads = jnp.stack([k_list[h // n_rep] for h in range(H)], axis=0)    # (H, S, D)
  v_heads = jnp.stack([v_list[h // n_rep] for h in range(H)], axis=0)    # (H, S, D)

  # single full-depth (d = D = 128) contraction per head; 1/sqrt(D) is already in wq
  sc = jnp.einsum("hqd,hkd->hqk", q_heads, k_heads,
                  preferred_element_type=jnp.float32)                    # (H, S, S)
  sc = sc - jnp.max(sc, axis=-1, keepdims=True)
  p = jnp.exp(sc)
  p = p * pl.reciprocal(jnp.sum(p, axis=-1, keepdims=True), approx=True)
  o = jnp.einsum("hqk,hkd->hqd", p.astype(cdt), v_heads,
                 preferred_element_type=jnp.float32)                     # (H, S, D)

  # head-concat folded into the output projection (wo is (H, D, dim))
  attn = jnp.einsum("hqd,hdo->hqo", o.astype(cdt), wo_ref[...],
                    preferred_element_type=jnp.float32).sum(axis=0)      # (S, dim)
  h1 = x + attn

  # ----------------------------- feed forward --------------------------------
  hn = rmsnorm(h1, fnw_ref).astype(cdt)
  z = jnp.dot(hn, w13_ref[...], preferred_element_type=jnp.float32)      # (S, 2*hid)
  z1 = z[:, :hid]
  z3 = z[:, hid:]
  swish = z1 * pl.reciprocal(1.0 + jnp.exp(-z1), approx=True)            # SiLU (exp + rcp on EUP)
  ff = jnp.dot((swish * z3).astype(cdt), w2_ref[...],
               preferred_element_type=jnp.float32)

  out_ref[...] = h1 + ff


# -----------------------------------------------------------------------------
# Host-side helpers
# -----------------------------------------------------------------------------
def _rope_angles(S, D, theta=10000.0):
  inv_freq = 1.0 / (theta ** (np.arange(0, D, 2, dtype=np.float64) / D))
  return np.outer(np.arange(S, dtype=np.float64), inv_freq)              # (S, D//2)


def _per_head_deinterleave(n_heads, head_dim):
  # within each head's D-block: evens first, then odds (rotate-half layout)
  D = head_dim
  Dh = D // 2
  cols = []
  for h in range(n_heads):
    evens = h * D + 2 * np.arange(Dh)
    cols.append(np.concatenate([evens, evens + 1]))
  return np.concatenate(cols).astype(np.int32)


# -----------------------------------------------------------------------------
# Wrapper
# -----------------------------------------------------------------------------
def transformer_block(x, params, *, n_heads, n_kv_heads, eps=1e-5,
                      compute_dtype=jnp.bfloat16, rope_theta=10000.0):
  """x: (B, S, dim) f32 -> (B, S, dim) f32."""
  B, S, dim = x.shape
  H, KVH = n_heads, n_kv_heads
  D = dim // H
  hid = params["w1"].shape[1]
  W3 = (H + 2 * KVH) * D
  cdt = compute_dtype

  # Per-head de-interleave of q/k columns (attention scores are invariant under a
  # per-head column permutation applied to both q and k); fold 1/sqrt(D) into wq.
  perm_q = jnp.asarray(_per_head_deinterleave(H, D))
  perm_k = jnp.asarray(_per_head_deinterleave(KVH, D))
  wq = jnp.take(params["wq"], perm_q, axis=1) * (1.0 / math.sqrt(D))
  wk = jnp.take(params["wk"], perm_k, axis=1)
  wqkv = jnp.concatenate([wq, wk, params["wv"]], axis=1).astype(cdt)     # (dim, W3)
  wo_h = params["wo"].reshape(H, D, dim).astype(cdt)                     # (H, D, dim)
  w13 = jnp.concatenate([params["w1"], params["w3"]], axis=1).astype(cdt)  # (dim, 2*hid)
  w2 = params["w2"].astype(cdt)
  anw = params["anw"].astype(jnp.float32).reshape(1, dim)
  fnw = params["fnw"].astype(jnp.float32).reshape(1, dim)

  # Compact (S, D) rotary tables in rotate-half layout, shared by q and k.
  ang = _rope_angles(S, D, rope_theta)                                   # (S, D//2)
  cos_t = jnp.asarray(np.concatenate([np.cos(ang), np.cos(ang)], axis=1).astype(np.float32))
  sin_t = jnp.asarray(np.concatenate([-np.sin(ang), np.sin(ang)], axis=1).astype(np.float32))

  def full_spec(shape):            # grid-invariant operand: fetched once, VMEM-resident
    n = len(shape)
    return pl.BlockSpec(shape, lambda b, n=n: (0,) * n)

  kernel = functools.partial(_transformer_block_kernel, H=H, KVH=KVH, eps=eps)
  out = pl.pallas_call(
      kernel,
      out_shape=jax.ShapeDtypeStruct((B, S, dim), jnp.float32),
      grid=(B,),                                   # one program per batch element
      in_specs=[
          pl.BlockSpec((None, S, dim), lambda b: (b, 0, 0)),             # x
          full_spec((dim, W3)),                                          # fused wq|wk|wv
          full_spec((H, D, dim)),                                        # wo (per head)
          full_spec((dim, 2 * hid)),                                     # fused w1|w3
          full_spec((hid, dim)),                                         # w2
          full_spec((1, dim)), full_spec((1, dim)),                      # RMSNorm weights
          full_spec((S, D)), full_spec((S, D)),                          # rope tables
      ],
      out_specs=pl.BlockSpec((None, S, dim), lambda b: (b, 0, 0)),
      compiler_params=pltpu.CompilerParams(
          dimension_semantics=("parallel",)),      # shard batch across TCs on v7x
  )(x, wqkv, wo_h, w13, w2, anw, fnw, cos_t, sin_t)
  return out


# -----------------------------------------------------------------------------
# Pure-JAX reference (mirrors the PyTorch module, start_pos = 0, mask unused)
# -----------------------------------------------------------------------------
def ref_block(x, params, *, n_heads, n_kv_heads, eps, rope_theta=10000.0):
  B, S, dim = x.shape
  H, KVH = n_heads, n_kv_heads
  D = dim // H
  n_rep = H // KVH

  def rms(v, w):
    return v * jax.lax.rsqrt(jnp.mean(v * v, axis=-1, keepdims=True) + eps) * w

  ang = _rope_angles(S, D, rope_theta)
  cosr = jnp.asarray(np.cos(ang).astype(np.float32))[None, :, None, :]
  sinr = jnp.asarray(np.sin(ang).astype(np.float32))[None, :, None, :]

  def rope_pairs(v):   # (B, S, nh, D) interleaved pairs == torch.view_as_complex
    vr = v.reshape(*v.shape[:-1], D // 2, 2)
    a, b = vr[..., 0], vr[..., 1]
    return jnp.stack([a * cosr - b * sinr, b * cosr + a * sinr],
                     axis=-1).reshape(v.shape)

  anw = params["anw"].reshape(dim)
  fnw = params["fnw"].reshape(dim)

  xn = rms(x, anw)
  xq = rope_pairs((xn @ params["wq"]).reshape(B, S, H, D))
  xk = rope_pairs((xn @ params["wk"]).reshape(B, S, KVH, D))
  xv = (xn @ params["wv"]).reshape(B, S, KVH, D)
  # start_pos = 0 prefill: cache slice == just-computed K/V; repeat_kv:
  keys = jnp.repeat(xk, n_rep, axis=2).transpose(0, 2, 1, 3)             # (B,H,S,D)
  vals = jnp.repeat(xv, n_rep, axis=2).transpose(0, 2, 1, 3)
  qt = xq.transpose(0, 2, 1, 3)
  scores = jnp.einsum("bhqd,bhkd->bhqk", qt, keys) / math.sqrt(D)
  scores = jax.nn.softmax(scores, axis=-1)
  o = jnp.einsum("bhqk,bhkd->bhqd", scores, vals)
  o = o.transpose(0, 2, 1, 3).reshape(B, S, H * D)
  h1 = x + o @ params["wo"]

  hn = rms(h1, fnw)
  ff = (jax.nn.silu(hn @ params["w1"]) * (hn @ params["w3"])) @ params["w2"]
  return h1 + ff


# -----------------------------------------------------------------------------
if __name__ == "__main__":
  B, S = 2, 8
  H, KVH = 2, 1            # GQA with n_rep = 2
  D = 128                  # head_dim (lane-dense)
  dim = H * D              # 256
  eps = 1e-5
  multiple_of = 128
  hid = int(2 * (4 * dim) / 3)
  hid = multiple_of * ((hid + multiple_of - 1) // multiple_of)           # 768

  key = jax.random.PRNGKey(0)
  ks = jax.random.split(key, 10)
  s_in = 1.0 / math.sqrt(dim)
  s_hid = 1.0 / math.sqrt(hid)
  params = {
      "wq": jax.random.normal(ks[0], (dim, H * D), jnp.float32) * s_in,
      "wk": jax.random.normal(ks[1], (dim, KVH * D), jnp.float32) * s_in,
      "wv": jax.random.normal(ks[2], (dim, KVH * D), jnp.float32) * s_in,
      "wo": jax.random.normal(ks[3], (H * D, dim), jnp.float32) * s_in,
      "w1": jax.random.normal(ks[4], (dim, hid), jnp.float32) * s_in,
      "w2": jax.random.normal(ks[5], (hid, dim), jnp.float32) * s_hid,
      "w3": jax.random.normal(ks[6], (dim, hid), jnp.float32) * s_in,
      "anw": 1.0 + 0.1 * jax.random.normal(ks[7], (1, dim), jnp.float32),
      "fnw": 1.0 + 0.1 * jax.random.normal(ks[8], (1, dim), jnp.float32),
  }
  x = jax.random.normal(ks[9], (B, S, dim), jnp.float32)

  ref = np.asarray(jax.block_until_ready(
      ref_block(x, params, n_heads=H, n_kv_heads=KVH, eps=eps)))

  # f32 MXU-input path (tight-ish check; approx reciprocals in softmax / SiLU).
  out_f32 = transformer_block(x, params, n_heads=H, n_kv_heads=KVH, eps=eps,
                              compute_dtype=jnp.float32)
  out_f32 = np.asarray(jax.block_until_ready(out_f32))
  np.testing.assert_allclose(out_f32, ref, rtol=2e-2, atol=2e-2)

  # bf16 MXU-input path (production config; looser tolerance).
  out_bf16 = transformer_block(x, params, n_heads=H, n_kv_heads=KVH, eps=eps,
                               compute_dtype=jnp.bfloat16)
  out_bf16 = np.asarray(jax.block_until_ready(out_bf16))
  np.testing.assert_allclose(out_bf16, ref, rtol=1e-1, atol=1e-1)

  print("KERNEL_OK")
</pallas_src>

<mosaic_0001>
module attributes {stable_mosaic.version = 11 : i64} {
  func.func @_transformer_block_kernel(%arg0: i32, %arg1: memref<1x8x256xf32, #tpu.memory_space<vmem>>, %arg2: memref<256x512xf32, #tpu.memory_space<vmem>>, %arg3: memref<2x128x256xf32, #tpu.memory_space<vmem>>, %arg4: memref<256x1536xf32, #tpu.memory_space<vmem>>, %arg5: memref<768x256xf32, #tpu.memory_space<vmem>>, %arg6: memref<1x256xf32, #tpu.memory_space<vmem>>, %arg7: memref<1x256xf32, #tpu.memory_space<vmem>>, %arg8: memref<8x128xf32, #tpu.memory_space<vmem>>, %arg9: memref<8x128xf32, #tpu.memory_space<vmem>>, %arg10: memref<1x8x256xf32, #tpu.memory_space<vmem>>) attributes {dimension_semantics = [#tpu.dimension_semantics<parallel>], iteration_bounds = array<i64: 2>, scalar_prefetch = 0 : i64, scratch_operands = 0 : i64, tpu.core_type = #tpu.core_type<tc>, window_params = [{transform_indices = @transform_0, window_bounds = array<i64: 1, 8, 256>}, {pipeline_mode = #tpu.pipeline_mode<synchronous>, transform_indices = @transform_1, window_bounds = array<i64: 256, 512>}, {pipeline_mode = #tpu.pipeline_mode<synchronous>, transform_indices = @transform_2, window_bounds = array<i64: 2, 128, 256>}, {pipeline_mode = #tpu.pipeline_mode<synchronous>, transform_indices = @transform_3, window_bounds = array<i64: 256, 1536>}, {pipeline_mode = #tpu.pipeline_mode<synchronous>, transform_indices = @transform_4, window_bounds = array<i64: 768, 256>}, {pipeline_mode = #tpu.pipeline_mode<synchronous>, transform_indices = @transform_5, window_bounds = array<i64: 1, 256>}, {pipeline_mode = #tpu.pipeline_mode<synchronous>, transform_indices = @transform_6, window_bounds = array<i64: 1, 256>}, {pipeline_mode = #tpu.pipeline_mode<synchronous>, transform_indices = @transform_7, window_bounds = array<i64: 8, 128>}, {pipeline_mode = #tpu.pipeline_mode<synchronous>, transform_indices = @transform_8, window_bounds = array<i64: 8, 128>}, {transform_indices = @transform_9, window_bounds = array<i64: 1, 8, 256>}]} {
    %c0 = arith.constant 0 : index
    %c0_0 = arith.constant 0 : index
    %c0_1 = arith.constant 0 : index
    %0 = vector.load %arg1[%c0, %c0_0, %c0_1] : memref<1x8x256xf32, #tpu.memory_space<vmem>>, vector<1x8x256xf32>
    %1 = vector.shape_cast %0 : vector<1x8x256xf32> to vector<8x256xf32>
    %2 = arith.mulf %1, %1 : vector<8x256xf32>
    %cst = arith.constant dense<0.000000e+00> : vector<8xf32>
    %3 = vector.multi_reduction <add>, %2, %cst [1] : vector<8x256xf32> to vector<8xf32>
    %4 = vector.shape_cast %3 : vector<8xf32> to vector<8x1xf32>
    %cst_2 = arith.constant 2.560000e+02 : f32
    %5 = vector.broadcast %cst_2 : f32 to vector<8x1xf32>
    %6 = arith.divf %4, %5 : vector<8x1xf32>
    %cst_3 = arith.constant 9.99999974E-6 : f32
    %7 = vector.broadcast %cst_3 : f32 to vector<8x1xf32>
    %8 = arith.addf %6, %7 : vector<8x1xf32>
    %9 = math.rsqrt %8 : vector<8x1xf32>
    %10 = vector.broadcast %9 : vector<8x1xf32> to vector<8x256xf32>
    %11 = arith.mulf %1, %10 : vector<8x256xf32>
    %c0_4 = arith.constant 0 : index
    %c0_5 = arith.constant 0 : index
    %12 = vector.load %arg6[%c0_4, %c0_5] : memref<1x256xf32, #tpu.memory_space<vmem>>, vector<1x256xf32>
    %13 = vector.broadcast %12 : vector<1x256xf32> to vector<8x256xf32>
    %14 = arith.mulf %11, %13 : vector<8x256xf32>
    %c0_6 = arith.constant 0 : index
    %c0_7 = arith.constant 0 : index
    %15 = vector.load %arg2[%c0_6, %c0_7] : memref<256x512xf32, #tpu.memory_space<vmem>>, vector<256x512xf32>
    %cst_8 = arith.constant dense<0.000000e+00> : vector<8x512xf32>
    %16 = tpu.matmul %14, %15, %cst_8 {dimension_numbers = #tpu.dot_dimension_numbers<[1], [0], [0], [1], [0, 0, 1, 1], [], []>} : vector<8x256xf32>, vector<256x512xf32>, vector<8x512xf32> -> vector<8x512xf32>
    %c0_9 = arith.constant 0 : index
    %c0_10 = arith.constant 0 : index
    %17 = vector.load %arg8[%c0_9, %c0_10] : memref<8x128xf32, #tpu.memory_space<vmem>>, vector<8x128xf32>
    %c0_11 = arith.constant 0 : index
    %c0_12 = arith.constant 0 : index
    %18 = vector.load %arg9[%c0_11, %c0_12] : memref<8x128xf32, #tpu.memory_space<vmem>>, vector<8x128xf32>
    %19 = vector.extract_strided_slice %16 {offsets = [0, 0], sizes = [8, 128], strides = [1, 1]} : vector<8x512xf32> to vector<8x128xf32>
    %20 = arith.mulf %19, %17 : vector<8x128xf32>
    %c64_i32 = arith.constant 64 : i32
    %21 = tpu.dynamic_rotate %19 by %c64_i32 dim 1 : vector<8x128xf32>, i32 -> vector<8x128xf32>
    %22 = arith.mulf %21, %18 : vector<8x128xf32>
    %23 = arith.addf %20, %22 : vector<8x128xf32>
    %24 = vector.extract_strided_slice %16 {offsets = [0, 128], sizes = [8, 128], strides = [1, 1]} : vector<8x512xf32> to vector<8x128xf32>
    %25 = arith.mulf %24, %17 : vector<8x128xf32>
    %c64_i32_13 = arith.constant 64 : i32
    %26 = tpu.dynamic_rotate %24 by %c64_i32_13 dim 1 : vector<8x128xf32>, i32 -> vector<8x128xf32>
    %27 = arith.mulf %26, %18 : vector<8x128xf32>
    %28 = arith.addf %25, %27 : vector<8x128xf32>
    %29 = vector.shape_cast %23 : vector<8x128xf32> to vector<1x8x128xf32>
    %30 = vector.shape_cast %28 : vector<8x128xf32> to vector<1x8x128xf32>
    %31 = tpu.concatenate %29, %30 in 0 : vector<1x8x128xf32>, vector<1x8x128xf32> -> vector<2x8x128xf32>
    %32 = vector.extract_strided_slice %16 {offsets = [0, 256], sizes = [8, 128], strides = [1, 1]} : vector<8x512xf32> to vector<8x128xf32>
    %33 = arith.mulf %32, %17 : vector<8x128xf32>
    %c64_i32_14 = arith.constant 64 : i32
    %34 = tpu.dynamic_rotate %32 by %c64_i32_14 dim 1 : vector<8x128xf32>, i32 -> vector<8x128xf32>
    %35 = arith.mulf %34, %18 : vector<8x128xf32>
    %36 = arith.addf %33, %35 : vector<8x128xf32>
    %37 = vector.extract_strided_slice %16 {offsets = [0, 384], sizes = [8, 128], strides = [1, 1]} : vector<8x512xf32> to vector<8x128xf32>
    %38 = vector.shape_cast %36 : vector<8x128xf32> to vector<1x8x128xf32>
    %39 = vector.shape_cast %36 : vector<8x128xf32> to vector<1x8x128xf32>
    %40 = tpu.concatenate %38, %39 in 0 : vector<1x8x128xf32>, vector<1x8x128xf32> -> vector<2x8x128xf32>
    %41 = vector.shape_cast %37 : vector<8x128xf32> to vector<1x8x128xf32>
    %42 = vector.shape_cast %37 : vector<8x128xf32> to vector<1x8x128xf32>
    %43 = tpu.concatenate %41, %42 in 0 : vector<1x8x128xf32>, vector<1x8x128xf32> -> vector<2x8x128xf32>
    "tpu.trace_start"() <{level = 10 : i32, message = "hqd,hkd->hqk"}> : () -> ()
    %cst_15 = arith.constant dense<0.000000e+00> : vector<2x8x8xf32>
    %44 = tpu.matmul %31, %40, %cst_15 {dimension_numbers = #tpu.dot_dimension_numbers<[2], [2], [1], [1], [0, 0, 0, 1, 1, 1], [0], [0]>} : vector<2x8x128xf32>, vector<2x8x128xf32>, vector<2x8x8xf32> -> vector<2x8x8xf32>
    "tpu.trace_stop"() : () -> ()
    %cst_16 = arith.constant dense<0xFF800000> : vector<2x8xf32>
    %45 = vector.multi_reduction <maximumf>, %44, %cst_16 [2] : vector<2x8x8xf32> to vector<2x8xf32>
    %46 = vector.shape_cast %45 : vector<2x8xf32> to vector<2x8x1xf32>
    %47 = vector.broadcast %46 : vector<2x8x1xf32> to vector<2x8x8xf32>
    %48 = arith.subf %44, %47 : vector<2x8x8xf32>
    %49 = math.exp %48 : vector<2x8x8xf32>
    %cst_17 = arith.constant dense<0.000000e+00> : vector<2x8xf32>
    %50 = vector.multi_reduction <add>, %49, %cst_17 [2] : vector<2x8x8xf32> to vector<2x8xf32>
    %51 = vector.shape_cast %50 : vector<2x8xf32> to vector<2x8x1xf32>
    %52 = tpu.reciprocal %51 {approx = true} : vector<2x8x1xf32> -> vector<2x8x1xf32>
    %53 = vector.broadcast %52 : vector<2x8x1xf32> to vector<2x8x8xf32>
    %54 = arith.mulf %49, %53 : vector<2x8x8xf32>
    "tpu.trace_start"() <{level = 10 : i32, message = "hqk,hkd->hqd"}> : () -> ()
    %cst_18 = arith.constant dense<0.000000e+00> : vector<2x8x128xf32>
    %55 = tpu.matmul %54, %43, %cst_18 {dimension_numbers = #tpu.dot_dimension_numbers<[2], [1], [1], [2], [0, 0, 0, 1, 1, 2], [0], [0]>} : vector<2x8x8xf32>, vector<2x8x128xf32>, vector<2x8x128xf32> -> vector<2x8x128xf32>
    "tpu.trace_stop"() : () -> ()
    %c0_19 = arith.constant 0 : index
    %c0_20 = arith.constant 0 : index
    %c0_21 = arith.constant 0 : index
    %56 = vector.load %arg3[%c0_19, %c0_20, %c0_21] : memref<2x128x256xf32, #tpu.memory_space<vmem>>, vector<2x128x256xf32>
    "tpu.trace_start"() <{level = 10 : i32, message = "hqd,hdo->hqo"}> : () -> ()
    %cst_22 = arith.constant dense<0.000000e+00> : vector<2x8x256xf32>
    %57 = tpu.matmul %55, %56, %cst_22 {dimension_numbers = #tpu.dot_dimension_numbers<[2], [1], [1], [2], [0, 0, 0, 1, 1, 2], [0], [0]>} : vector<2x8x128xf32>, vector<2x128x256xf32>, vector<2x8x256xf32> -> vector<2x8x256xf32>
    "tpu.trace_stop"() : () -> ()
    %cst_23 = arith.constant dense<0.000000e+00> : vector<8x256xf32>
    %58 = vector.multi_reduction <add>, %57, %cst_23 [0] : vector<2x8x256xf32> to vector<8x256xf32>
    %59 = arith.addf %1, %58 : vector<8x256xf32>
    %60 = arith.mulf %59, %59 : vector<8x256xf32>
    %cst_24 = arith.constant dense<0.000000e+00> : vector<8xf32>
    %61 = vector.multi_reduction <add>, %60, %cst_24 [1] : vector<8x256xf32> to vector<8xf32>
    %62 = vector.shape_cast %61 : vector<8xf32> to vector<8x1xf32>
    %cst_25 = arith.constant 2.560000e+02 : f32
    %63 = vector.broadcast %cst_25 : f32 to vector<8x1xf32>
    %64 = arith.divf %62, %63 : vector<8x1xf32>
    %cst_26 = arith.constant 9.99999974E-6 : f32
    %65 = vector.broadcast %cst_26 : f32 to vector<8x1xf32>
    %66 = arith.addf %64, %65 : vector<8x1xf32>
    %67 = math.rsqrt %66 : vector<8x1xf32>
    %68 = vector.broadcast %67 : vector<8x1xf32> to vector<8x256xf32>
    %69 = arith.mulf %59, %68 : vector<8x256xf32>
    %c0_27 = arith.constant 0 : index
    %c0_28 = arith.constant 0 : index
    %70 = vector.load %arg7[%c0_27, %c0_28] : memref<1x256xf32, #tpu.memory_space<vmem>>, vector<1x256xf32>
    %71 = vector.broadcast %70 : vector<1x256xf32> to vector<8x256xf32>
    %72 = arith.mulf %69, %71 : vector<8x256xf32>
    %c0_29 = arith.constant 0 : index
    %c0_30 = arith.constant 0 : index
    %73 = vector.load %arg4[%c0_29, %c0_30] : memref<256x1536xf32, #tpu.memory_space<vmem>>, vector<256x1536xf32>
    %cst_31 = arith.constant dense<0.000000e+00> : vector<8x1536xf32>
    %74 = tpu.matmul %72, %73, %cst_31 {dimension_numbers = #tpu.dot_dimension_numbers<[1], [0], [0], [1], [0, 0, 1, 1], [], []>} : vector<8x256xf32>, vector<256x1536xf32>, vector<8x1536xf32> -> vector<8x1536xf32>
    %75 = vector.extract_strided_slice %74 {offsets = [0, 0], sizes = [8, 768], strides = [1, 1]} : vector<8x1536xf32> to vector<8x768xf32>
    %76 = vector.extract_strided_slice %74 {offsets = [0, 768], sizes = [8, 768], strides = [1, 1]} : vector<8x1536xf32> to vector<8x768xf32>
    %cst_32 = arith.constant 0.000000e+00 : f32
    %77 = vector.broadcast %cst_32 : f32 to vector<8x768xf32>
    %78 = arith.subf %77, %75 : vector<8x768xf32>
    %79 = math.exp %78 : vector<8x768xf32>
    %cst_33 = arith.constant 1.000000e+00 : f32
    %80 = vector.broadcast %cst_33 : f32 to vector<8x768xf32>
    %81 = arith.addf %80, %79 : vector<8x768xf32>
    %82 = tpu.reciprocal %81 {approx = true} : vector<8x768xf32> -> vector<8x768xf32>
    %83 = arith.mulf %75, %82 : vector<8x768xf32>
    %84 = arith.mulf %83, %76 : vector<8x768xf32>
    %c0_34 = arith.constant 0 : index
    %c0_35 = arith.constant 0 : index
    %85 = vector.load %arg5[%c0_34, %c0_35] : memref<768x256xf32, #tpu.memory_space<vmem>>, vector<768x256xf32>
    %cst_36 = arith.constant dense<0.000000e+00> : vector<8x256xf32>
    %86 = tpu.matmul %84, %85, %cst_36 {dimension_numbers = #tpu.dot_dimension_numbers<[1], [0], [0], [1], [0, 0, 1, 1], [], []>} : vector<8x768xf32>, vector<768x256xf32>, vector<8x256xf32> -> vector<8x256xf32>
    %87 = arith.addf %59, %86 : vector<8x256xf32>
    %c0_37 = arith.constant 0 : index
    %c0_38 = arith.constant 0 : index
    %c0_39 = arith.constant 0 : index
    %88 = vector.load %arg10[%c0_37, %c0_38, %c0_39] : memref<1x8x256xf32, #tpu.memory_space<vmem>>, vector<1x8x256xf32>
    %89 = vector.shape_cast %88 : vector<1x8x256xf32> to vector<8x256xf32>
    %90 = vector.shape_cast %87 : vector<8x256xf32> to vector<1x8x256xf32>
    tpu.vector_store %arg10[%c0_37, %c0_38, %c0_39], %90 {strides = array<i32>} : memref<1x8x256xf32, #tpu.memory_space<vmem>>, vector<1x8x256xf32>,
    return
  }
  func.func @transform_0(%arg0: i32) -> (i32, i32, i32) {
    %c0_i32 = arith.constant 0 : i32
    %c0_i32_0 = arith.constant 0 : i32
    %c0_i32_1 = arith.constant 0 : i32
    return %arg0, %c0_i32, %c0_i32_0 : i32, i32, i32
  }
  func.func @transform_1(%arg0: i32) -> (i32, i32) {
    %c0_i32 = arith.constant 0 : i32
    %c0_i32_0 = arith.constant 0 : i32
    %c0_i32_1 = arith.constant 0 : i32
    return %c0_i32, %c0_i32_0 : i32, i32
  }
  func.func @transform_2(%arg0: i32) -> (i32, i32, i32) {
    %c0_i32 = arith.constant 0 : i32
    %c0_i32_0 = arith.constant 0 : i32
    %c0_i32_1 = arith.constant 0 : i32
    %c0_i32_2 = arith.constant 0 : i32
    return %c0_i32, %c0_i32_0, %c0_i32_1 : i32, i32, i32
  }
  func.func @transform_3(%arg0: i32) -> (i32, i32) {
    %c0_i32 = arith.constant 0 : i32
    %c0_i32_0 = arith.constant 0 : i32
    %c0_i32_1 = arith.constant 0 : i32
    return %c0_i32, %c0_i32_0 : i32, i32
  }
  func.func @transform_4(%arg0: i32) -> (i32, i32) {
    %c0_i32 = arith.constant 0 : i32
    %c0_i32_0 = arith.constant 0 : i32
    %c0_i32_1 = arith.constant 0 : i32
    return %c0_i32, %c0_i32_0 : i32, i32
  }
  func.func @transform_5(%arg0: i32) -> (i32, i32) {
    %c0_i32 = arith.constant 0 : i32
    %c0_i32_0 = arith.constant 0 : i32
    %c0_i32_1 = arith.constant 0 : i32
    return %c0_i32, %c0_i32_0 : i32, i32
  }
  func.func @transform_6(%arg0: i32) -> (i32, i32) {
    %c0_i32 = arith.constant 0 : i32
    %c0_i32_0 = arith.constant 0 : i32
    %c0_i32_1 = arith.constant 0 : i32
    return %c0_i32, %c0_i32_0 : i32, i32
  }
  func.func @transform_7(%arg0: i32) -> (i32, i32) {
    %c0_i32 = arith.constant 0 : i32
    %c0_i32_0 = arith.constant 0 : i32
    %c0_i32_1 = arith.constant 0 : i32
    return %c0_i32, %c0_i32_0 : i32, i32
  }
  func.func @transform_8(%arg0: i32) -> (i32, i32) {
    %c0_i32 = arith.constant 0 : i32
    %c0_i32_0 = arith.constant 0 : i32
    %c0_i32_1 = arith.constant 0 : i32
    return %c0_i32, %c0_i32_0 : i32, i32
  }
  func.func @transform_9(%arg0: i32) -> (i32, i32, i32) {
    %c0_i32 = arith.constant 0 : i32
    %c0_i32_0 = arith.constant 0 : i32
    %c0_i32_1 = arith.constant 0 : i32
    return %arg0, %c0_i32, %c0_i32_0 : i32, i32, i32
  }
}

</mosaic_0001>

<llo_original>
// kernel: tpu_custom_call.1
$region0: #{tpu_custom_call.1}
  #allocation0 [shape = 'u32[]', space=smem, size = 0x4, offset = 0x4, fixed_abs, tag = 'smem constant byte address 0x4 - core index']
  #allocation1 [shape = 'u32[144,128]{1,0:T(1,128)}', space=vmem, size = 0x12000, scoped, tag = 'internal scratch']
  %s0 = inlined_call_operand.hbm [shape: f32[2,8,256], index: 0, kind: input, shape index: {}]
  %s1 = inlined_call_operand.hbm [shape: f32[256,512], index: 1, kind: input, shape index: {}]
  %s2 = inlined_call_operand.hbm [shape: f32[2,128,256], index: 2, kind: input, shape index: {}]
  %s3 = inlined_call_operand.hbm [shape: f32[256,1536], index: 3, kind: input, shape index: {}]
  %s4 = inlined_call_operand.hbm [shape: f32[768,256], index: 4, kind: input, shape index: {}]
  %s5 = inlined_call_operand.hbm [shape: f32[1,256], index: 5, kind: input, shape index: {}]
  %s6 = inlined_call_operand.hbm [shape: f32[1,256], index: 6, kind: input, shape index: {}]
  %s7 = inlined_call_operand.hbm [shape: f32[8,128], index: 7, kind: input, shape index: {}]
  %s8 = inlined_call_operand.hbm [shape: f32[8,128], index: 8, kind: input, shape index: {}]
  %s9 = inlined_call_operand.hbm [shape: f32[2,8,256], index: 9, kind: output, shape index: {}]
  %s10 = sld [smem:[#allocation0]]
  $region105: #{tpu_custom_call.1} parent=0
    _
  %s12 = ssub.s32 1, %s10
  %s13 = scalar_select 0, %s12, %s10
  $region1: #{tpu_custom_call.1} parent=0
    #allocation2 [shape = 'u8[16384]{0}', space=vmem, size = 0x4000, scoped, tag = 'input window, operand 0']
    #allocation3 [shape = 's32[2]{0}', space=sflag, size = 0x8, scoped, tag = 'scoped memory for tpu_custom_call.1']
    #allocation4 [shape = 's32[2]{0}', space=sflag, size = 0x8, scoped, tag = 'scoped memory for tpu_custom_call.1']
    #allocation5 [shape = 'u8[524288]{0}', space=vmem, size = 0x80000, scoped, tag = 'input window, operand 1, single buffered']
    #allocation6 [shape = 's32[1]{0}', space=sflag, size = 0x4, scoped, tag = 'scoped memory for tpu_custom_call.1']
    #allocation7 [shape = 'u8[262144]{0}', space=vmem, size = 0x40000, scoped, tag = 'input window, operand 2, single buffered']
    #allocation8 [shape = 'u8[1572864]{0}', space=vmem, size = 0x180000, scoped, tag = 'input window, operand 3, single buffered']
    #allocation9 [shape = 's32[1]{0}', space=sflag, size = 0x4, scoped, tag = 'scoped memory for tpu_custom_call.1']
    #allocation10 [shape = 'u8[786432]{0}', space=vmem, size = 0xc0000, scoped, tag = 'input window, operand 4, single buffered']
    #allocation11 [shape = 'u8[1024]{0}', space=vmem, size = 0x400, scoped, tag = 'input window, operand 5, single buffered']
    #allocation12 [shape = 's32[1]{0}', space=sflag, size = 0x4, scoped, tag = 'scoped memory for tpu_custom_call.1']
    #allocation13 [shape = 'u8[1024]{0}', space=vmem, size = 0x400, scoped, tag = 'input window, operand 6, single buffered']
    #allocation14 [shape = 'u8[4096]{0}', space=vmem, size = 0x1000, scoped, tag = 'input window, operand 7, single buffered']
    #allocation15 [shape = 's32[1]{0}', space=sflag, size = 0x4, scoped, tag = 'scoped memory for tpu_custom_call.1']
    #allocation16 [shape = 'u8[4096]{0}', space=vmem, size = 0x1000, scoped, tag = 'input window, operand 8, single buffered']
    #allocation17 [shape = 'u8[16384]{0}', space=vmem, size = 0x4000, scoped, tag = 'output window, operand 0']
    %14 = vsyncpa [#allocation3], 0
    %s15 = scalar_lea.sflag [#allocation3], 1
    %16 = vsyncpa %s15, 0
    %17 = vsyncpa [#allocation6], 0
    %18 = vsyncpa [#allocation9], 0
    %19 = vsyncpa [#allocation12], 0
    %20 = vsyncpa [#allocation15], 0
    %21 = vsyncpa [#allocation4], 0
    %s22 = scalar_lea.sflag [#allocation4], 1
    %23 = vsyncpa %s22, 0
    loop: start=0, step=1, limit=4
    $region2: #{tpu_custom_call.1} parent=1 // loop_pre_header
      _
    $region3: #{tpu_custom_call.1} parent=1 // loop_header
      %s25 = sphi 0, %s29
      %p26 = scmp.ge.s32.totalorder %s25, 4
      %s35 = sphi 0, %s37
      %s38 = sphi 0, %s35
      %s39 = sphi 0, %s38
      %s55 = sphi 0, %s39
      %s59 = sphi 0, %s59
      %s61 = sphi 0, %s59
      %s62 = sphi 0, %s61
      %s76 = sphi 0, %s62
      %s80 = sphi 0, %s80
      %s82 = sphi 0, %s80
      %s83 = sphi 0, %s82
      %s97 = sphi 0, %s83
      %s101 = sphi 0, %s101
      %s103 = sphi 0, %s101
      %s104 = sphi 0, %s103
      %s118 = sphi 0, %s104
      %s122 = sphi 0, %s122
      %s124 = sphi 0, %s122
      %s125 = sphi 0, %s124
      %s139 = sphi 0, %s125
      %s143 = sphi 0, %s143
      %s145 = sphi 0, %s143
      %s146 = sphi 0, %s145
      %s160 = sphi 0, %s146
      %s164 = sphi 0, %s164
      %s166 = sphi 0, %s164
      %s167 = sphi 0, %s166
      %s181 = sphi 0, %s167
      %s185 = sphi 0, %s185
      %s187 = sphi 0, %s185
      %s188 = sphi 0, %s187
      %s202 = sphi 0, %s188
      %s206 = sphi 0, %s206
      %s208 = sphi 0, %s206
      %s209 = sphi 0, %s208
      %s223 = sphi 0, %s209
      %s229 = sphi 0, %s231
      %s232 = sphi 0, %s229
      %s233 = sphi 0, %s232
      %s249 = sphi 0, %s233
    $region4: #{tpu_custom_call.1} parent=1 // loop_header_branch
      %28 = sbr.rel (%p26) target = $region8
    $region5: #{tpu_custom_call.1} parent=1 // loop_body
      %s30 = ssub.s32 %s25, 1
      %s31 = ssub.s32 %s25, 2
      %s32 = sadd.s32 %s25, 1
      %s33 = ssub.s32 %s25, %s32
      %p34 = scmp.eq.s32.totalorder %s33, 0
      %s36 = sadd.s32 %s35, 1
      %s37 = scalar_select %p34, %s35, %s36
      %p40 = pneg %p34
      %p41 = scmp.eq.s32.totalorder %s25, 1
      %p42 = por %p40, %p41
      %p43 = scmp.ne.s32.totalorder %s35, %s38
      %p44 = scmp.eq.s32.totalorder %s25, 0
      %p45 = por %p43, %p44
      %p46 = scmp.ne.s32.totalorder %s35, %s38
      %p47 = scmp.eq.s32.totalorder %s30, 1
      %p48 = por %p46, %p47
      %p49 = scmp.ne.s32.totalorder %s38, %s39
      %p50 = scmp.eq.s32.totalorder %s30, 0
      %p51 = por %p49, %p50
      %p52 = scmp.ne.s32.totalorder %s38, %s39
      %p53 = scmp.eq.s32.totalorder %s31, 1
      %p54 = por %p52, %p53
      %p56 = scmp.ne.s32.totalorder %s39, %s55
      %p57 = scmp.eq.s32.totalorder %s31, 0
      %p58 = por %p56, %p57
      %s60 = sadd.s32 %s59, 1
      %p63 = scmp.eq.s32.totalorder %s25, 1
      %p64 = scmp.ne.s32.totalorder %s59, %s61
      %p65 = scmp.eq.s32.totalorder %s25, 0
      %p66 = por %p64, %p65
      %p67 = scmp.ne.s32.totalorder %s59, %s61
      %p68 = scmp.eq.s32.totalorder %s30, 1
      %p69 = por %p67, %p68
      %p70 = scmp.ne.s32.totalorder %s61, %s62
      %p71 = scmp.eq.s32.totalorder %s30, 0
      %p72 = por %p70, %p71
      %p73 = scmp.ne.s32.totalorder %s61, %s62
      %p74 = scmp.eq.s32.totalorder %s31, 1
      %p75 = por %p73, %p74
      %p77 = scmp.ne.s32.totalorder %s62, %s76
      %p78 = scmp.eq.s32.totalorder %s31, 0
      %p79 = por %p77, %p78
      %s81 = sadd.s32 %s80, 1
      %p84 = scmp.eq.s32.totalorder %s25, 1
      %p85 = scmp.ne.s32.totalorder %s80, %s82
      %p86 = scmp.eq.s32.totalorder %s25, 0
      %p87 = por %p85, %p86
      %p88 = scmp.ne.s32.totalorder %s80, %s82
      %p89 = scmp.eq.s32.totalorder %s30, 1
      %p90 = por %p88, %p89
      %p91 = scmp.ne.s32.totalorder %s82, %s83
      %p92 = scmp.eq.s32.totalorder %s30, 0
      %p93 = por %p91, %p92
      %p94 = scmp.ne.s32.totalorder %s82, %s83
      %p95 = scmp.eq.s32.totalorder %s31, 1
      %p96 = por %p94, %p95
      %p98 = scmp.ne.s32.totalorder %s83, %s97
      %p99 = scmp.eq.s32.totalorder %s31, 0
      %p100 = por %p98, %p99
      %s102 = sadd.s32 %s101, 1
      %p105 = scmp.eq.s32.totalorder %s25, 1
      %p106 = scmp.ne.s32.totalorder %s101, %s103
      %p107 = scmp.eq.s32.totalorder %s25, 0
      %p108 = por %p106, %p107
      %p109 = scmp.ne.s32.totalorder %s101, %s103
      %p110 = scmp.eq.s32.totalorder %s30, 1
      %p111 = por %p109, %p110
      %p112 = scmp.ne.s32.totalorder %s103, %s104
      %p113 = scmp.eq.s32.totalorder %s30, 0
      %p114 = por %p112, %p113
      %p115 = scmp.ne.s32.totalorder %s103, %s104
      %p116 = scmp.eq.s32.totalorder %s31, 1
      %p117 = por %p115, %p116
      %p119 = scmp.ne.s32.totalorder %s104, %s118
      %p120 = scmp.eq.s32.totalorder %s31, 0
      %p121 = por %p119, %p120
      %s123 = sadd.s32 %s122, 1
      %p126 = scmp.eq.s32.totalorder %s25, 1
      %p127 = scmp.ne.s32.totalorder %s122, %s124
      %p128 = scmp.eq.s32.totalorder %s25, 0
      %p129 = por %p127, %p128
      %p130 = scmp.ne.s32.totalorder %s122, %s124
      %p131 = scmp.eq.s32.totalorder %s30, 1
      %p132 = por %p130, %p131
      %p133 = scmp.ne.s32.totalorder %s124, %s125
      %p134 = scmp.eq.s32.totalorder %s30, 0
      %p135 = por %p133, %p134
      %p136 = scmp.ne.s32.totalorder %s124, %s125
      %p137 = scmp.eq.s32.totalorder %s31, 1
      %p138 = por %p136, %p137
      %p140 = scmp.ne.s32.totalorder %s125, %s139
      %p141 = scmp.eq.s32.totalorder %s31, 0
      %p142 = por %p140, %p141
      %s144 = sadd.s32 %s143, 1
      %p147 = scmp.eq.s32.totalorder %s25, 1
      %p148 = scmp.ne.s32.totalorder %s143, %s145
      %p149 = scmp.eq.s32.totalorder %s25, 0
      %p150 = por %p148, %p149
      %p151 = scmp.ne.s32.totalorder %s143, %s145
      %p152 = scmp.eq.s32.totalorder %s30, 1
      %p153 = por %p151, %p152
      %p154 = scmp.ne.s32.totalorder %s145, %s146
      %p155 = scmp.eq.s32.totalorder %s30, 0
      %p156 = por %p154, %p155
      %p157 = scmp.ne.s32.totalorder %s145, %s146
      %p158 = scmp.eq.s32.totalorder %s31, 1
      %p159 = por %p157, %p158
      %p161 = scmp.ne.s32.totalorder %s146, %s160
      %p162 = scmp.eq.s32.totalorder %s31, 0
      %p163 = por %p161, %p162
      %s165 = sadd.s32 %s164, 1
      %p168 = scmp.eq.s32.totalorder %s25, 1
      %p169 = scmp.ne.s32.totalorder %s164, %s166
      %p170 = scmp.eq.s32.totalorder %s25, 0
      %p171 = por %p169, %p170
      %p172 = scmp.ne.s32.totalorder %s164, %s166
      %p173 = scmp.eq.s32.totalorder %s30, 1
      %p174 = por %p172, %p173
      %p175 = scmp.ne.s32.totalorder %s166, %s167
      %p176 = scmp.eq.s32.totalorder %s30, 0
      %p177 = por %p175, %p176
      %p178 = scmp.ne.s32.totalorder %s166, %s167
      %p179 = scmp.eq.s32.totalorder %s31, 1
      %p180 = por %p178, %p179
      %p182 = scmp.ne.s32.totalorder %s167, %s181
      %p183 = scmp.eq.s32.totalorder %s31, 0
      %p184 = por %p182, %p183
      %s186 = sadd.s32 %s185, 1
      %p189 = scmp.eq.s32.totalorder %s25, 1
      %p190 = scmp.ne.s32.totalorder %s185, %s187
      %p191 = scmp.eq.s32.totalorder %s25, 0
      %p192 = por %p190, %p191
      %p193 = scmp.ne.s32.totalorder %s185, %s187
      %p194 = scmp.eq.s32.totalorder %s30, 1
      %p195 = por %p193, %p194
      %p196 = scmp.ne.s32.totalorder %s187, %s188
      %p197 = scmp.eq.s32.totalorder %s30, 0
      %p198 = por %p196, %p197
      %p199 = scmp.ne.s32.totalorder %s187, %s188
      %p200 = scmp.eq.s32.totalorder %s31, 1
      %p201 = por %p199, %p200
      %p203 = scmp.ne.s32.totalorder %s188, %s202
      %p204 = scmp.eq.s32.totalorder %s31, 0
      %p205 = por %p203, %p204
      %s207 = sadd.s32 %s206, 1
      %p210 = scmp.eq.s32.totalorder %s25, 1
      %p211 = scmp.ne.s32.totalorder %s206, %s208
      %p212 = scmp.eq.s32.totalorder %s25, 0
      %p213 = por %p211, %p212
      %p214 = scmp.ne.s32.totalorder %s206, %s208
      %p215 = scmp.eq.s32.totalorder %s30, 1
      %p216 = por %p214, %p215
      %p217 = scmp.ne.s32.totalorder %s208, %s209
      %p218 = scmp.eq.s32.totalorder %s30, 0
      %p219 = por %p217, %p218
      %p220 = scmp.ne.s32.totalorder %s208, %s209
      %p221 = scmp.eq.s32.totalorder %s31, 1
      %p222 = por %p220, %p221
      %p224 = scmp.ne.s32.totalorder %s209, %s223
      %p225 = scmp.eq.s32.totalorder %s31, 0
      %p226 = por %p224, %p225
      %s227 = ssub.s32 %s25, %s32
      %p228 = scmp.eq.s32.totalorder %s227, 0
      %s230 = sadd.s32 %s229, 1
      %s231 = scalar_select %p228, %s229, %s230
      %p234 = pneg %p228
      %p235 = scmp.eq.s32.totalorder %s25, 1
      %p236 = por %p234, %p235
      %p237 = scmp.ne.s32.totalorder %s229, %s232
      %p238 = scmp.eq.s32.totalorder %s25, 0
      %p239 = por %p237, %p238
      %p240 = scmp.ne.s32.totalorder %s229, %s232
      %p241 = scmp.eq.s32.totalorder %s30, 1
      %p242 = por %p240, %p241
      %p243 = scmp.ne.s32.totalorder %s232, %s233
      %p244 = scmp.eq.s32.totalorder %s30, 0
      %p245 = por %p243, %p244
      %p246 = scmp.ne.s32.totalorder %s232, %s233
      %p247 = scmp.eq.s32.totalorder %s31, 1
      %p248 = por %p246, %p247
      %p250 = scmp.ne.s32.totalorder %s233, %s249
      %p251 = scmp.eq.s32.totalorder %s31, 0
      %p252 = por %p250, %p251
      %p253 = scmp.le.s32.totalorder 1, %s25
      %p254 = scmp.lt.s32.totalorder %s25, 3
      %p255 = pnand %p253, %p254
      %p256 = pneg %p255
      // Predicated region
      $region9: #{tpu_custom_call.1} parent=5 // pred_check
        _
      $region10: #{tpu_custom_call.1} parent=5 // pred_check_branch
        %258 = sbr.rel (%p255) target = $region12
      $region11: #{tpu_custom_call.1} parent=5 // pred_region
        %s259 = ssub.s32 %s25, 1
        // Predicated region
        $region13: #{tpu_custom_call.1} parent=11 // pred_check
          %p260 = pneg %p72
        $region14: #{tpu_custom_call.1} parent=11 // pred_check_branch
          %262 = sbr.rel (%p260) target = $region16
        $region15: #{tpu_custom_call.1} parent=11 // pred_region
          %s264 = ssub.s32 16384, 16384
          %265 = vsyncadd [#allocation6], %s264
          %s266 = sshll.u32 [#allocation5], 4
          %s267 = int_to_ptr.vmem [resolvable:$true] %s266
          %272 = dma.hbm_to_vmem [thread:$0]  %s1, 16384, %s267, [#allocation6], 512, 512, 32
        $region16: #{tpu_custom_call.1} parent=11 // pred_fallthru
          _
        // Predicated region
        $region17: #{tpu_custom_call.1} parent=11 // pred_check
          %p273 = pneg %p93
        $region18: #{tpu_custom_call.1} parent=11 // pred_check_branch
          %275 = sbr.rel (%p273) target = $region20
        $region19: #{tpu_custom_call.1} parent=11 // pred_region
          %s277 = ssub.s32 8192, 8192
          %278 = vsyncadd [#allocation6], %s277
          %s279 = sshll.u32 [#allocation7], 4
          %s280 = int_to_ptr.vmem [resolvable:$true] %s279
          %285 = dma.hbm_to_vmem [thread:$0]  %s2, 8192, %s280, [#allocation6], 256, 256, 16
        $region20: #{tpu_custom_call.1} parent=11 // pred_fallthru
          _
        // Predicated region
        $region21: #{tpu_custom_call.1} parent=11 // pred_check
          %p286 = pneg %p114
        $region22: #{tpu_custom_call.1} parent=11 // pred_check_branch
          %288 = sbr.rel (%p286) target = $region24
        $region23: #{tpu_custom_call.1} parent=11 // pred_region
          %s290 = ssub.s32 49152, 49152
          %291 = vsyncadd [#allocation9], %s290
          %s292 = sshll.u32 [#allocation8], 4
          %s293 = int_to_ptr.vmem [resolvable:$true] %s292
          %298 = dma.hbm_to_vmem [thread:$0]  %s3, 49152, %s293, [#allocation9], 1536, 1536, 96
        $region24: #{tpu_custom_call.1} parent=11 // pred_fallthru
          _
        // Predicated region
        $region25: #{tpu_custom_call.1} parent=11 // pred_check
          %p299 = pneg %p135
        $region26: #{tpu_custom_call.1} parent=11 // pred_check_branch
          %301 = sbr.rel (%p299) target = $region28
        $region27: #{tpu_custom_call.1} parent=11 // pred_region
          %s303 = ssub.s32 24576, 24576
          %304 = vsyncadd [#allocation9], %s303
          %s305 = sshll.u32 [#allocation10], 4
          %s306 = int_to_ptr.vmem [resolvable:$true] %s305
          %311 = dma.hbm_to_vmem [thread:$0]  %s4, 24576, %s306, [#allocation9], 256, 256, 16
        $region28: #{tpu_custom_call.1} parent=11 // pred_fallthru
          _
        // Predicated region
        $region29: #{tpu_custom_call.1} parent=11 // pred_check
          %p312 = pneg %p156
        $region30: #{tpu_custom_call.1} parent=11 // pred_check_branch
          %314 = sbr.rel (%p312) target = $region32
        $region31: #{tpu_custom_call.1} parent=11 // pred_region
          %s316 = ssub.s32 32, 32
          %317 = vsyncadd [#allocation12], %s316
          %s319 = sshll.u32 [#allocation11], 4
          %s320 = int_to_ptr.vmem [resolvable:$true] %s319
          %322 = dma.hbm_to_vmem [thread:$0]  %s5, 32, %s320, [#allocation12]
        $region32: #{tpu_custom_call.1} parent=11 // pred_fallthru
          _
        // Predicated region
        $region33: #{tpu_custom_call.1} parent=11 // pred_check
          %p323 = pneg %p177
        $region34: #{tpu_custom_call.1} parent=11 // pred_check_branch
          %325 = sbr.rel (%p323) target = $region36
        $region35: #{tpu_custom_call.1} parent=11 // pred_region
          %s327 = ssub.s32 32, 32
          %328 = vsyncadd [#allocation12], %s327
          %s330 = sshll.u32 [#allocation13], 4
          %s331 = int_to_ptr.vmem [resolvable:$true] %s330
          %333 = dma.hbm_to_vmem [thread:$0]  %s6, 32, %s331, [#allocation12]
        $region36: #{tpu_custom_call.1} parent=11 // pred_fallthru
          _
        // Predicated region
        $region37: #{tpu_custom_call.1} parent=11 // pred_check
          %p334 = pneg %p198
        $region38: #{tpu_custom_call.1} parent=11 // pred_check_branch
          %336 = sbr.rel (%p334) target = $region40
        $region39: #{tpu_custom_call.1} parent=11 // pred_region
          %s338 = ssub.s32 128, 128
          %339 = vsyncadd [#allocation15], %s338
          %s341 = sshll.u32 [#allocation14], 4
          %s342 = int_to_ptr.vmem [resolvable:$true] %s341
          %344 = dma.hbm_to_vmem [thread:$0]  %s7, 128, %s342, [#allocation15]
        $region40: #{tpu_custom_call.1} parent=11 // pred_fallthru
          _
        // Predicated region
        $region41: #{tpu_custom_call.1} parent=11 // pred_check
          %p345 = pneg %p219
        $region42: #{tpu_custom_call.1} parent=11 // pred_check_branch
          %347 = sbr.rel (%p345) target = $region44
        $region43: #{tpu_custom_call.1} parent=11 // pred_region
          %s349 = ssub.s32 128, 128
          %350 = vsyncadd [#allocation15], %s349
          %s352 = sshll.u32 [#allocation16], 4
          %s353 = int_to_ptr.vmem [resolvable:$true] %s352
          %355 = dma.hbm_to_vmem [thread:$0]  %s8, 128, %s353, [#allocation15]
        $region44: #{tpu_custom_call.1} parent=11 // pred_fallthru
          _
      $region12: #{tpu_custom_call.1} parent=5 // pred_fallthru
        _
      %p356 = scmp.lt.s32.totalorder %s25, 2
      // Predicated region
      $region45: #{tpu_custom_call.1} parent=5 // pred_check
        %p357 = pneg %p356
      $region46: #{tpu_custom_call.1} parent=5 // pred_check_branch
        %359 = sbr.rel (%p357) target = $region48
      $region47: #{tpu_custom_call.1} parent=5 // pred_region
        // Predicated region
        $region49: #{tpu_custom_call.1} parent=47 // pred_check
          %p360 = pneg %p45
        $region50: #{tpu_custom_call.1} parent=47 // pred_check_branch
          %362 = sbr.rel (%p360) target = $region52
        $region51: #{tpu_custom_call.1} parent=47 // pred_region
          %s363 = sand.u32 %s35, 1
          %s364 = scalar_lea.sflag [#allocation3], %s363
          %s365 = sand.u32 %s35, 1
          %s366 = smul.addr %s365, 16
          %s367 = scalar_lea.vmem [#allocation2], %s366
          %s369 = ssub.s32 256, 256
          %370 = vsyncadd %s364, %s369
          %s371 = smul.addr %s25, 2
          %s372 = smul.addr %s371, 128
          %s373 = scalar_lea.hbm %s0, %s372
          %s375 = sshll.u32 %s367, 4
          %s376 = int_to_ptr.vmem [resolvable:$true] %s375
          %378 = dma.hbm_to_vmem [thread:$0]  %s373, 256, %s376, %s364
        $region52: #{tpu_custom_call.1} parent=47 // pred_fallthru
          _
      $region48: #{tpu_custom_call.1} parent=5 // pred_fallthru
        _
      %p379 = scmp.le.s32.totalorder 1, %s25
      %p380 = scmp.lt.s32.totalorder %s25, 3
      %p381 = pnand %p379, %p380
      %p382 = pneg %p381
      // Predicated region
      $region53: #{tpu_custom_call.1} parent=5 // pred_check
        _
      $region54: #{tpu_custom_call.1} parent=5 // pred_check_branch
        %384 = sbr.rel (%p381) target = $region56
      $region55: #{tpu_custom_call.1} parent=5 // pred_region
        %s385 = ssub.s32 %s25, 1
        %s386 = sand.u32 %s38, 1
        %s387 = scalar_lea.sflag [#allocation3], %s386
        %s388 = sand.u32 %s38, 1
        %s389 = smul.addr %s388, 16
        %s390 = scalar_lea.vmem [#allocation2], %s389
        // Predicated region
        $region57: #{tpu_custom_call.1} parent=55 // pred_check
          %p391 = pneg %p51
        $region58: #{tpu_custom_call.1} parent=55 // pred_check_branch
          %393 = sbr.rel (%p391) target = $region60
        $region59: #{tpu_custom_call.1} parent=55 // pred_region
          %394 = dma.done %s387, 256
        $region60: #{tpu_custom_call.1} parent=55 // pred_fallthru
          _
        // Predicated region
        $region61: #{tpu_custom_call.1} parent=55 // pred_check
          %p395 = pneg %p72
        $region62: #{tpu_custom_call.1} parent=55 // pred_check_branch
          %397 = sbr.rel (%p395) target = $region64
        $region63: #{tpu_custom_call.1} parent=55 // pred_region
          %398 = dma.done [#allocation6], 16384
        $region64: #{tpu_custom_call.1} parent=55 // pred_fallthru
          _
        // Predicated region
        $region65: #{tpu_custom_call.1} parent=55 // pred_check
          %p399 = pneg %p93
        $region66: #{tpu_custom_call.1} parent=55 // pred_check_branch
          %401 = sbr.rel (%p399) target = $region68
        $region67: #{tpu_custom_call.1} parent=55 // pred_region
          %402 = dma.done [#allocation6], 8192
        $region68: #{tpu_custom_call.1} parent=55 // pred_fallthru
          _
        // Predicated region
        $region69: #{tpu_custom_call.1} parent=55 // pred_check
          %p403 = pneg %p114
        $region70: #{tpu_custom_call.1} parent=55 // pred_check_branch
          %405 = sbr.rel (%p403) target = $region72
        $region71: #{tpu_custom_call.1} parent=55 // pred_region
          %406 = dma.done [#allocation9], 49152
        $region72: #{tpu_custom_call.1} parent=55 // pred_fallthru
          _
        // Predicated region
        $region73: #{tpu_custom_call.1} parent=55 // pred_check
          %p407 = pneg %p135
        $region74: #{tpu_custom_call.1} parent=55 // pred_check_branch
          %409 = sbr.rel (%p407) target = $region76
        $region75: #{tpu_custom_call.1} parent=55 // pred_region
          %410 = dma.done [#allocation9], 24576
        $region76: #{tpu_custom_call.1} parent=55 // pred_fallthru
          _
        // Predicated region
        $region77: #{tpu_custom_call.1} parent=55 // pred_check
          %p411 = pneg %p156
        $region78: #{tpu_custom_call.1} parent=55 // pred_check_branch
          %413 = sbr.rel (%p411) target = $region80
        $region79: #{tpu_custom_call.1} parent=55 // pred_region
          %414 = dma.done [#allocation12], 32
        $region80: #{tpu_custom_call.1} parent=55 // pred_fallthru
          _
        // Predicated region
        $region81: #{tpu_custom_call.1} parent=55 // pred_check
          %p415 = pneg %p177
        $region82: #{tpu_custom_call.1} parent=55 // pred_check_branch
          %417 = sbr.rel (%p415) target = $region84
        $region83: #{tpu_custom_call.1} parent=55 // pred_region
          %418 = dma.done [#allocation12], 32
        $region84: #{tpu_custom_call.1} parent=55 // pred_fallthru
          _
        // Predicated region
        $region85: #{tpu_custom_call.1} parent=55 // pred_check
          %p419 = pneg %p198
        $region86: #{tpu_custom_call.1} parent=55 // pred_check_branch
          %421 = sbr.rel (%p419) target = $region88
        $region87: #{tpu_custom_call.1} parent=55 // pred_region
          %422 = dma.done [#allocation15], 128
        $region88: #{tpu_custom_call.1} parent=55 // pred_fallthru
          _
        // Predicated region
        $region89: #{tpu_custom_call.1} parent=55 // pred_check
          %p423 = pneg %p219
        $region90: #{tpu_custom_call.1} parent=55 // pred_check_branch
          %425 = sbr.rel (%p423) target = $region92
        $region91: #{tpu_custom_call.1} parent=55 // pred_region
          %426 = dma.done [#allocation15], 128
        $region92: #{tpu_custom_call.1} parent=55 // pred_fallthru
          _
        %s427 = sand.u32 %s38, 1
        %s428 = scalar_lea.sflag [#allocation3], %s427
        %s429 = sand.u32 %s38, 1
        %s430 = smul.addr %s429, 16
        %s431 = scalar_lea.vmem [#allocation2], %s430
        %p432 = pneg %p51
        %p433 = pneg %p48
        %p434 = pneg %p72
        %p435 = pneg %p69
        %p436 = pneg %p93
        %p437 = pneg %p90
        %p438 = pneg %p114
        %p439 = pneg %p111
        %p440 = pneg %p135
        %p441 = pneg %p132
        %p442 = pneg %p156
        %p443 = pneg %p153
        %p444 = pneg %p177
        %p445 = pneg %p174
        %p446 = pneg %p198
        %p447 = pneg %p195
        %p448 = pneg %p219
        %p449 = pneg %p216
        %p450 = pneg %p245
        %p451 = pneg %p242
        %s452 = sand.u32 %s232, 1
        %s453 = scalar_lea.sflag [#allocation4], %s452
        %s454 = sand.u32 %s232, 1
        %s455 = smul.addr %s454, 16
        %s456 = scalar_lea.vmem [#allocation17], %s455
        %v457 = vld [vmem:[%s390] sm:$0xff]
        %v458 = vld [vmem:[%s390 + $0x8] sm:$0xff]
        %v459 = vmul.f32 %v457, %v457
        %v460 = vmul.f32 %v458, %v458
        %v461 = vadd.f32 %v459, %v460
        %462 = vadd.xlane.f32.xlu0 %v461
        %v463 = vpop.xlane.xlu0 %462
        %v464 = vrcp.pop 256.0
        %v465 = vmul.f32 %v463, %v464
        %v466 = vadd.f32 %v465, 1e-05
        %v467 = vrsqrt.pop %v466
        %v468 = vmul.f32 %v457, %v467
        %v469 = vmul.f32 %v458, %v467
        %v470 = vld [vmem:[#allocation11] sm:$0x3]
        %v472 = vlaneseq
        %v473 = vshrl.u32 %v472, 7
        %v474 = vsub.s32 0, %v473
        %v475 = vrot.slane %v470, %v474
        %v476 = vlaneseq
        %v477 = vshrl.u32 %v476, 7
        %v478 = vsub.s32 1, %v477
        %v479 = vrot.slane %v470, %v478
        %v482 = vmul.f32 %v468, %v475
        %v483 = vmul.f32 %v469, %v479
        %v484 = vld [vmem:[#allocation5] sm:$0xff]
        %v485 = vld [vmem:[#allocation5 + $0x8] sm:$0xff]
        %v486 = vld [vmem:[#allocation5 + $0x10] sm:$0xff]
        %v487 = vld [vmem:[#allocation5 + $0x18] sm:$0xff]
        %v488 = vld [vmem:[#allocation5 + $0x20] sm:$0xff]
        %v489 = vld [vmem:[#allocation5 + $0x28] sm:$0xff]
        %v490 = vld [vmem:[#allocation5 + $0x30] sm:$0xff]
        %v491 = vld [vmem:[#allocation5 + $0x38] sm:$0xff]
        %v492 = vld [vmem:[#allocation5 + $0x40] sm:$0xff]
        %v493 = vld [vmem:[#allocation5 + $0x48] sm:$0xff]
        %v494 = vld [vmem:[#allocation5 + $0x50] sm:$0xff]
        %v495 = vld [vmem:[#allocation5 + $0x58] sm:$0xff]
        %v496 = vld [vmem:[#allocation5 + $0x60] sm:$0xff]
        %v497 = vld [vmem:[#allocation5 + $0x68] sm:$0xff]
        %v498 = vld [vmem:[#allocation5 + $0x70] sm:$0xff]
        %v499 = vld [vmem:[#allocation5 + $0x78] sm:$0xff]
        %v500 = vld [vmem:[#allocation5 + $0x80] sm:$0xff]
        %v501 = vld [vmem:[#allocation5 + $0x88] sm:$0xff]
        %v502 = vld [vmem:[#allocation5 + $0x90] sm:$0xff]
        %v503 = vld [vmem:[#allocation5 + $0x98] sm:$0xff]
        %v504 = vld [vmem:[#allocation5 + $0xa0] sm:$0xff]
        %v505 = vld [vmem:[#allocation5 + $0xa8] sm:$0xff]
        %v506 = vld [vmem:[#allocation5 + $0xb0] sm:$0xff]
        %v507 = vld [vmem:[#allocation5 + $0xb8] sm:$0xff]
        %v508 = vld [vmem:[#allocation5 + $0xc0] sm:$0xff]
        %v509 = vld [vmem:[#allocation5 + $0xc8] sm:$0xff]
        %v510 = vld [vmem:[#allocation5 + $0xd0] sm:$0xff]
        %v511 = vld [vmem:[#allocation5 + $0xd8] sm:$0xff]
        %v512 = vld [vmem:[#allocation5 + $0xe0] sm:$0xff]
        %v513 = vld [vmem:[#allocation5 + $0xe8] sm:$0xff]
        %v514 = vld [vmem:[#allocation5 + $0xf0] sm:$0xff]
        %v515 = vld [vmem:[#allocation5 + $0xf8] sm:$0xff]
        %v516 = vld [vmem:[#allocation5 + $0x100] sm:$0xff]
        %v517 = vld [vmem:[#allocation5 + $0x108] sm:$0xff]
        %v518 = vld [vmem:[#allocation5 + $0x110] sm:$0xff]
        %v519 = vld [vmem:[#allocation5 + $0x118] sm:$0xff]
        %v520 = vld [vmem:[#allocation5 + $0x120] sm:$0xff]
        %v521 = vld [vmem:[#allocation5 + $0x128] sm:$0xff]
        %v522 = vld [vmem:[#allocation5 + $0x130] sm:$0xff]
        %v523 = vld [vmem:[#allocation5 + $0x138] sm:$0xff]
        %v524 = vld [vmem:[#allocation5 + $0x140] sm:$0xff]
        %v525 = vld [vmem:[#allocation5 + $0x148] sm:$0xff]
        %v526 = vld [vmem:[#allocation5 + $0x150] sm:$0xff]
        %v527 = vld [vmem:[#allocation5 + $0x158] sm:$0xff]
        %v528 = vld [vmem:[#allocation5 + $0x160] sm:$0xff]
        %v529 = vld [vmem:[#allocation5 + $0x168] sm:$0xff]
        %v530 = vld [vmem:[#allocation5 + $0x170] sm:$0xff]
        %v531 = vld [vmem:[#allocation5 + $0x178] sm:$0xff]
        %v532 = vld [vmem:[#allocation5 + $0x180] sm:$0xff]
        %v533 = vld [vmem:[#allocation5 + $0x188] sm:$0xff]
        %v534 = vld [vmem:[#allocation5 + $0x190] sm:$0xff]
        %v535 = vld [vmem:[#allocation5 + $0x198] sm:$0xff]
        %v536 = vld [vmem:[#allocation5 + $0x1a0] sm:$0xff]
        %v537 = vld [vmem:[#allocation5 + $0x1a8] sm:$0xff]
        %v538 = vld [vmem:[#allocation5 + $0x1b0] sm:$0xff]
        %v539 = vld [vmem:[#allocation5 + $0x1b8] sm:$0xff]
        %v540 = vld [vmem:[#allocation5 + $0x1c0] sm:$0xff]
        %v541 = vld [vmem:[#allocation5 + $0x1c8] sm:$0xff]
        %v542 = vld [vmem:[#allocation5 + $0x1d0] sm:$0xff]
        %v543 = vld [vmem:[#allocation5 + $0x1d8] sm:$0xff]
        %v544 = vld [vmem:[#allocation5 + $0x1e0] sm:$0xff]
        %v545 = vld [vmem:[#allocation5 + $0x1e8] sm:$0xff]
        %v546 = vld [vmem:[#allocation5 + $0x1f0] sm:$0xff]
        %v547 = vld [vmem:[#allocation5 + $0x1f8] sm:$0xff]
        %v548 = vld [vmem:[#allocation5 + $0x200] sm:$0xff]
        %v549 = vld [vmem:[#allocation5 + $0x208] sm:$0xff]
        %v550 = vld [vmem:[#allocation5 + $0x210] sm:$0xff]
        %v551 = vld [vmem:[#allocation5 + $0x218] sm:$0xff]
        %v552 = vld [vmem:[#allocation5 + $0x220] sm:$0xff]
        %v553 = vld [vmem:[#allocation5 + $0x228] sm:$0xff]
        %v554 = vld [vmem:[#allocation5 + $0x230] sm:$0xff]
        %v555 = vld [vmem:[#allocation5 + $0x238] sm:$0xff]
        %v556 = vld [vmem:[#allocation5 + $0x240] sm:$0xff]
        %v557 = vld [vmem:[#allocation5 + $0x248] sm:$0xff]
        %v558 = vld [vmem:[#allocation5 + $0x250] sm:$0xff]
        %v559 = vld [vmem:[#allocation5 + $0x258] sm:$0xff]
        %v560 = vld [vmem:[#allocation5 + $0x260] sm:$0xff]
        %v561 = vld [vmem:[#allocation5 + $0x268] sm:$0xff]
        %v562 = vld [vmem:[#allocation5 + $0x270] sm:$0xff]
        %v563 = vld [vmem:[#allocation5 + $0x278] sm:$0xff]
        %v564 = vld [vmem:[#allocation5 + $0x280] sm:$0xff]
        %v565 = vld [vmem:[#allocation5 + $0x288] sm:$0xff]
        %v566 = vld [vmem:[#allocation5 + $0x290] sm:$0xff]
        %v567 = vld [vmem:[#allocation5 + $0x298] sm:$0xff]
        %v568 = vld [vmem:[#allocation5 + $0x2a0] sm:$0xff]
        %v569 = vld [vmem:[#allocation5 + $0x2a8] sm:$0xff]
        %v570 = vld [vmem:[#allocation5 + $0x2b0] sm:$0xff]
        %v571 = vld [vmem:[#allocation5 + $0x2b8] sm:$0xff]
        %v572 = vld [vmem:[#allocation5 + $0x2c0] sm:$0xff]
        %v573 = vld [vmem:[#allocation5 + $0x2c8] sm:$0xff]
        %v574 = vld [vmem:[#allocation5 + $0x2d0] sm:$0xff]
        %v575 = vld [vmem:[#allocation5 + $0x2d8] sm:$0xff]
        %v576 = vld [vmem:[#allocation5 + $0x2e0] sm:$0xff]
        %v577 = vld [vmem:[#allocation5 + $0x2e8] sm:$0xff]
        %v578 = vld [vmem:[#allocation5 + $0x2f0] sm:$0xff]
        %v579 = vld [vmem:[#allocation5 + $0x2f8] sm:$0xff]
        %v580 = vld [vmem:[#allocation5 + $0x300] sm:$0xff]
        %v581 = vld [vmem:[#allocation5 + $0x308] sm:$0xff]
        %v582 = vld [vmem:[#allocation5 + $0x310] sm:$0xff]
        %v583 = vld [vmem:[#allocation5 + $0x318] sm:$0xff]
        %v584 = vld [vmem:[#allocation5 + $0x320] sm:$0xff]
        %v585 = vld [vmem:[#allocation5 + $0x328] sm:$0xff]
        %v586 = vld [vmem:[#allocation5 + $0x330] sm:$0xff]
        %v587 = vld [vmem:[#allocation5 + $0x338] sm:$0xff]
        %v588 = vld [vmem:[#allocation5 + $0x340] sm:$0xff]
        %v589 = vld [vmem:[#allocation5 + $0x348] sm:$0xff]
        %v590 = vld [vmem:[#allocation5 + $0x350] sm:$0xff]
        %v591 = vld [vmem:[#allocation5 + $0x358] sm:$0xff]
        %v592 = vld [vmem:[#allocation5 + $0x360] sm:$0xff]
        %v593 = vld [vmem:[#allocation5 + $0x368] sm:$0xff]
        %v594 = vld [vmem:[#allocation5 + $0x370] sm:$0xff]
        %v595 = vld [vmem:[#allocation5 + $0x378] sm:$0xff]
        %v596 = vld [vmem:[#allocation5 + $0x380] sm:$0xff]
        %v597 = vld [vmem:[#allocation5 + $0x388] sm:$0xff]
        %v598 = vld [vmem:[#allocation5 + $0x390] sm:$0xff]
        %v599 = vld [vmem:[#allocation5 + $0x398] sm:$0xff]
        %v600 = vld [vmem:[#allocation5 + $0x3a0] sm:$0xff]
        %v601 = vld [vmem:[#allocation5 + $0x3a8] sm:$0xff]
        %v602 = vld [vmem:[#allocation5 + $0x3b0] sm:$0xff]
        %v603 = vld [vmem:[#allocation5 + $0x3b8] sm:$0xff]
        %v604 = vld [vmem:[#allocation5 + $0x3c0] sm:$0xff]
        %v605 = vld [vmem:[#allocation5 + $0x3c8] sm:$0xff]
        %v606 = vld [vmem:[#allocation5 + $0x3d0] sm:$0xff]
        %v607 = vld [vmem:[#allocation5 + $0x3d8] sm:$0xff]
        %v608 = vld [vmem:[#allocation5 + $0x3e0] sm:$0xff]
        %v609 = vld [vmem:[#allocation5 + $0x3e8] sm:$0xff]
        %v610 = vld [vmem:[#allocation5 + $0x3f0] sm:$0xff]
        %v611 = vld [vmem:[#allocation5 + $0x3f8] sm:$0xff]
        %612 = vmatprep.subr.mxu0 %v545
        %613 = vmatpush1.msra.mxu0 %v544
        %614 = vmatprep.subr.mxu0 %v541
        %615 = vmatpush1.msra.mxu0 %v540
        %616 = vmatprep.subr.mxu0 %v537
        %617 = vmatpush1.msra.mxu0 %v536
        %618 = vmatprep.subr.mxu0 %v533
        %619 = vmatpush1.msra.mxu0 %v532
        %620 = vmatprep.subr.mxu0 %v529
        %621 = vmatpush1.msra.mxu0 %v528
        %622 = vmatprep.subr.mxu0 %v525
        %623 = vmatpush1.msra.mxu0 %v524
        %624 = vmatprep.subr.mxu0 %v521
        %625 = vmatpush1.msra.mxu0 %v520
        %626 = vmatprep.subr.mxu0 %v517
        %627 = vmatpush1.msra.mxu0 %v516
        %628 = vmatprep.subr.mxu0 %v513
        %629 = vmatpush1.msra.mxu0 %v512
        %630 = vmatprep.subr.mxu0 %v509
        %631 = vmatpush1.msra.mxu0 %v508
        %632 = vmatprep.subr.mxu0 %v505
        %633 = vmatpush1.msra.mxu0 %v504
        %634 = vmatprep.subr.mxu0 %v501
        %635 = vmatpush1.msra.mxu0 %v500
        %636 = vmatprep.subr.mxu0 %v497
        %637 = vmatpush1.msra.mxu0 %v496
        %638 = vmatprep.subr.mxu0 %v493
        %639 = vmatpush1.msra.mxu0 %v492
        %640 = vmatprep.subr.mxu0 %v489
        %641 = vmatpush1.msra.mxu0 %v488
        %642 = vmatprep.subr.mxu0 %v485
        %643 = vmatpush1.msra.mxu0 %v484
        %644 = vmatprep.subr.mxu0 %v609
        %645 = vmatpush2.msra.mxu0 %v608
        %646 = vmatprep.subr.mxu0 %v605
        %647 = vmatpush2.msra.mxu0 %v604
        %648 = vmatprep.subr.mxu0 %v601
        %649 = vmatpush2.msra.mxu0 %v600
        %650 = vmatprep.subr.mxu0 %v597
        %651 = vmatpush2.msra.mxu0 %v596
        %652 = vmatprep.subr.mxu0 %v593
        %653 = vmatpush2.msra.mxu0 %v592
        %654 = vmatprep.subr.mxu0 %v589
        %655 = vmatpush2.msra.mxu0 %v588
        %656 = vmatprep.subr.mxu0 %v585
        %657 = vmatpush2.msra.mxu0 %v584
        %658 = vmatprep.subr.mxu0 %v581
        %659 = vmatpush2.msra.mxu0 %v580
        %660 = vmatprep.subr.mxu0 %v577
        %661 = vmatpush2.msra.mxu0 %v576
        %662 = vmatprep.subr.mxu0 %v573
        %663 = vmatpush2.msra.mxu0 %v572
        %664 = vmatprep.subr.mxu0 %v569
        %665 = vmatpush2.msra.mxu0 %v568
        %666 = vmatprep.subr.mxu0 %v565
        %667 = vmatpush2.msra.mxu0 %v564
        %668 = vmatprep.subr.mxu0 %v561
        %669 = vmatpush2.msra.mxu0 %v560
        %670 = vmatprep.subr.mxu0 %v557
        %671 = vmatpush2.msra.mxu0 %v556
        %672 = vmatprep.subr.mxu0 %v553
        %673 = vmatpush2.msra.mxu0 %v552
        %674 = vmatprep.subr.mxu0 %v549
        %675 = vmatpush2.msra.mxu0 %v548
        %676 = vmatprep.mubr.f32.mxu0 %v483
        %677 = vmatmul.mubr.f32.gmra.mxu0 %v482
        %v678 = vpop.f32.mrf.mxu0
        %v679 = vadd.f32 0.0, %v678
        %v680 = vpop.f32.mrf.mxu0
        %v681 = vadd.f32 0.0, %v680
        %682 = vdwg.mxu0
        %683 = vmatprep.subr.mxu0 %v547
        %684 = vmatpush1.msra.mxu0 %v546
        %685 = vmatprep.subr.mxu0 %v543
        %686 = vmatpush1.msra.mxu0 %v542
        %687 = vmatprep.subr.mxu0 %v539
        %688 = vmatpush1.msra.mxu0 %v538
        %689 = vmatprep.subr.mxu0 %v535
        %690 = vmatpush1.msra.mxu0 %v534
        %691 = vmatprep.subr.mxu0 %v531
        %692 = vmatpush1.msra.mxu0 %v530
        %693 = vmatprep.subr.mxu0 %v527
        %694 = vmatpush1.msra.mxu0 %v526
        %695 = vmatprep.subr.mxu0 %v523
        %696 = vmatpush1.msra.mxu0 %v522
        %697 = vmatprep.subr.mxu0 %v519
        %698 = vmatpush1.msra.mxu0 %v518
        %699 = vmatprep.subr.mxu0 %v515
        %700 = vmatpush1.msra.mxu0 %v514
        %701 = vmatprep.subr.mxu0 %v511
        %702 = vmatpush1.msra.mxu0 %v510
        %703 = vmatprep.subr.mxu0 %v507
        %704 = vmatpush1.msra.mxu0 %v506
        %705 = vmatprep.subr.mxu0 %v503
        %706 = vmatpush1.msra.mxu0 %v502
        %707 = vmatprep.subr.mxu0 %v499
        %708 = vmatpush1.msra.mxu0 %v498
        %709 = vmatprep.subr.mxu0 %v495
        %710 = vmatpush1.msra.mxu0 %v494
        %711 = vmatprep.subr.mxu0 %v491
        %712 = vmatpush1.msra.mxu0 %v490
        %713 = vmatprep.subr.mxu0 %v487
        %714 = vmatpush1.msra.mxu0 %v486
        %715 = vmatprep.subr.mxu0 %v611
        %716 = vmatpush2.msra.mxu0 %v610
        %717 = vmatprep.subr.mxu0 %v607
        %718 = vmatpush2.msra.mxu0 %v606
        %719 = vmatprep.subr.mxu0 %v603
        %720 = vmatpush2.msra.mxu0 %v602
        %721 = vmatprep.subr.mxu0 %v599
        %722 = vmatpush2.msra.mxu0 %v598
        %723 = vmatprep.subr.mxu0 %v595
        %724 = vmatpush2.msra.mxu0 %v594
        %725 = vmatprep.subr.mxu0 %v591
        %726 = vmatpush2.msra.mxu0 %v590
        %727 = vmatprep.subr.mxu0 %v587
        %728 = vmatpush2.msra.mxu0 %v586
        %729 = vmatprep.subr.mxu0 %v583
        %730 = vmatpush2.msra.mxu0 %v582
        %731 = vmatprep.subr.mxu0 %v579
        %732 = vmatpush2.msra.mxu0 %v578
        %733 = vmatprep.subr.mxu0 %v575
        %734 = vmatpush2.msra.mxu0 %v574
        %735 = vmatprep.subr.mxu0 %v571
        %736 = vmatpush2.msra.mxu0 %v570
        %737 = vmatprep.subr.mxu0 %v567
        %738 = vmatpush2.msra.mxu0 %v566
        %739 = vmatprep.subr.mxu0 %v563
        %740 = vmatpush2.msra.mxu0 %v562
        %741 = vmatprep.subr.mxu0 %v559
        %742 = vmatpush2.msra.mxu0 %v558
        %743 = vmatprep.subr.mxu0 %v555
        %744 = vmatpush2.msra.mxu0 %v554
        %745 = vmatprep.subr.mxu0 %v551
        %746 = vmatpush2.msra.mxu0 %v550
        %747 = vmatprep.mubr.f32.mxu0 %v483
        %748 = vmatmul.mubr.f32.gmra.mxu0 %v482
        %v749 = vpop.f32.mrf.mxu0
        %v750 = vadd.f32 0.0, %v749
        %v751 = vpop.f32.mrf.mxu0
        %v752 = vadd.f32 0.0, %v751
        %753 = vdwg.mxu0
        %v754 = vld [vmem:[#allocation14] sm:$0xff]
        %v755 = vld [vmem:[#allocation16] sm:$0xff]
        %v756 = vmul.f32 %v679, %v754
        %757 = vrot.lane.b32.xlu0 %v679, 64
        %v758 = vpop.permute.xlu0 %757
        %v759 = vmul.f32 %v758, %v755
        %v760 = vadd.f32 %v756, %v759
        %v761 = vmul.f32 %v681, %v754
        %762 = vrot.lane.b32.xlu0 %v681, 64
        %v763 = vpop.permute.xlu0 %762
        %v764 = vmul.f32 %v763, %v755
        %v765 = vadd.f32 %v761, %v764
        %v766 = vmul.f32 %v750, %v754
        %767 = vrot.lane.b32.xlu0 %v750, 64
        %v768 = vpop.permute.xlu0 %767
        %v769 = vmul.f32 %v768, %v755
        %v770 = vadd.f32 %v766, %v769
        %771 = vmatprep.subr.mxu0 0.0
        %772 = vmatpush1.xpose.msra.mxu0 0.0
        %773 = vmatprep.subr.mxu0 0.0
        %774 = vmatpush1.xpose.msra.mxu0 0.0
        %775 = vmatprep.subr.mxu0 0.0
        %776 = vmatpush1.xpose.msra.mxu0 0.0
        %777 = vmatprep.subr.mxu0 0.0
        %778 = vmatpush1.xpose.msra.mxu0 0.0
        %779 = vmatprep.subr.mxu0 0.0
        %780 = vmatpush1.xpose.msra.mxu0 0.0
        %781 = vmatprep.subr.mxu0 0.0
        %782 = vmatpush1.xpose.msra.mxu0 0.0
        %783 = vmatprep.subr.mxu0 0.0
        %784 = vmatpush1.xpose.msra.mxu0 0.0
        %785 = vmatprep.subr.mxu0 0.0
        %786 = vmatpush1.xpose.msra.mxu0 0.0
        %787 = vmatprep.subr.mxu0 0.0
        %788 = vmatpush1.xpose.msra.mxu0 0.0
        %789 = vmatprep.subr.mxu0 0.0
        %790 = vmatpush1.xpose.msra.mxu0 0.0
        %791 = vmatprep.subr.mxu0 0.0
        %792 = vmatpush1.xpose.msra.mxu0 0.0
        %793 = vmatprep.subr.mxu0 0.0
        %794 = vmatpush1.xpose.msra.mxu0 0.0
        %795 = vmatprep.subr.mxu0 0.0
        %796 = vmatpush1.xpose.msra.mxu0 0.0
        %797 = vmatprep.subr.mxu0 0.0
        %798 = vmatpush1.xpose.msra.mxu0 0.0
        %799 = vmatprep.subr.mxu0 0.0
        %800 = vmatpush1.xpose.msra.mxu0 0.0
        %801 = vmatprep.subr.mxu0 0.0
        %802 = vmatpush1.xpose.msra.mxu0 %v770
        %803 = vmatprep.subr.mxu0 0.0
        %804 = vmatpush2.xpose.msra.mxu0 0.0
        %805 = vmatprep.subr.mxu0 0.0
        %806 = vmatpush2.xpose.msra.mxu0 0.0
        %807 = vmatprep.subr.mxu0 0.0
        %808 = vmatpush2.xpose.msra.mxu0 0.0
        %809 = vmatprep.subr.mxu0 0.0
        %810 = vmatpush2.xpose.msra.mxu0 0.0
        %811 = vmatprep.subr.mxu0 0.0
        %812 = vmatpush2.xpose.msra.mxu0 0.0
        %813 = vmatprep.subr.mxu0 0.0
        %814 = vmatpush2.xpose.msra.mxu0 0.0
        %815 = vmatprep.subr.mxu0 0.0
        %816 = vmatpush2.xpose.msra.mxu0 0.0
        %817 = vmatprep.subr.mxu0 0.0
        %818 = vmatpush2.xpose.msra.mxu0 0.0
        %819 = vmatprep.subr.mxu0 0.0
        %820 = vmatpush2.xpose.msra.mxu0 0.0
        %821 = vmatprep.subr.mxu0 0.0
        %822 = vmatpush2.xpose.msra.mxu0 0.0
        %823 = vmatprep.subr.mxu0 0.0
        %824 = vmatpush2.xpose.msra.mxu0 0.0
        %825 = vmatprep.subr.mxu0 0.0
        %826 = vmatpush2.xpose.msra.mxu0 0.0
        %827 = vmatprep.subr.mxu0 0.0
        %828 = vmatpush2.xpose.msra.mxu0 0.0
        %829 = vmatprep.subr.mxu0 0.0
        %830 = vmatpush2.xpose.msra.mxu0 0.0
        %831 = vmatprep.subr.mxu0 0.0
        %832 = vmatpush2.xpose.msra.mxu0 0.0
        %833 = vmatprep.subr.mxu0 0.0
        %834 = vmatpush2.xpose.msra.mxu0 0.0
        %835 = vmatprep.mubr.f32.mxu0 0.0
        %836 = vmatmul.mubr.f32.gmra.mxu0 %v760
        %v837 = vpop.f32.mrf.mxu0
        %v838 = vadd.f32 0.0, %v837
        %v839 = vpop.f32.mrf.mxu0
        %840 = vdwg.mxu0
        %841 = vmatprep.subr.mxu0 0.0
        %842 = vmatpush1.xpose.msra.mxu0 0.0
        %843 = vmatprep.subr.mxu0 0.0
        %844 = vmatpush1.xpose.msra.mxu0 0.0
        %845 = vmatprep.subr.mxu0 0.0
        %846 = vmatpush1.xpose.msra.mxu0 0.0
        %847 = vmatprep.subr.mxu0 0.0
        %848 = vmatpush1.xpose.msra.mxu0 0.0
        %849 = vmatprep.subr.mxu0 0.0
        %850 = vmatpush1.xpose.msra.mxu0 0.0
        %851 = vmatprep.subr.mxu0 0.0
        %852 = vmatpush1.xpose.msra.mxu0 0.0
        %853 = vmatprep.subr.mxu0 0.0
        %854 = vmatpush1.xpose.msra.mxu0 0.0
        %855 = vmatprep.subr.mxu0 0.0
        %856 = vmatpush1.xpose.msra.mxu0 0.0
        %857 = vmatprep.subr.mxu0 0.0
        %858 = vmatpush1.xpose.msra.mxu0 0.0
        %859 = vmatprep.subr.mxu0 0.0
        %860 = vmatpush1.xpose.msra.mxu0 0.0
        %861 = vmatprep.subr.mxu0 0.0
        %862 = vmatpush1.xpose.msra.mxu0 0.0
        %863 = vmatprep.subr.mxu0 0.0
        %864 = vmatpush1.xpose.msra.mxu0 0.0
        %865 = vmatprep.subr.mxu0 0.0
        %866 = vmatpush1.xpose.msra.mxu0 0.0
        %867 = vmatprep.subr.mxu0 0.0
        %868 = vmatpush1.xpose.msra.mxu0 0.0
        %869 = vmatprep.subr.mxu0 0.0
        %870 = vmatpush1.xpose.msra.mxu0 0.0
        %871 = vmatprep.subr.mxu0 0.0
        %872 = vmatpush1.xpose.msra.mxu0 %v770
        %873 = vmatprep.subr.mxu0 0.0
        %874 = vmatpush2.xpose.msra.mxu0 0.0
        %875 = vmatprep.subr.mxu0 0.0
        %876 = vmatpush2.xpose.msra.mxu0 0.0
        %877 = vmatprep.subr.mxu0 0.0
        %878 = vmatpush2.xpose.msra.mxu0 0.0
        %879 = vmatprep.subr.mxu0 0.0
        %880 = vmatpush2.xpose.msra.mxu0 0.0
        %881 = vmatprep.subr.mxu0 0.0
        %882 = vmatpush2.xpose.msra.mxu0 0.0
        %883 = vmatprep.subr.mxu0 0.0
        %884 = vmatpush2.xpose.msra.mxu0 0.0
        %885 = vmatprep.subr.mxu0 0.0
        %886 = vmatpush2.xpose.msra.mxu0 0.0
        %887 = vmatprep.subr.mxu0 0.0
        %888 = vmatpush2.xpose.msra.mxu0 0.0
        %889 = vmatprep.subr.mxu0 0.0
        %890 = vmatpush2.xpose.msra.mxu0 0.0
        %891 = vmatprep.subr.mxu0 0.0
        %892 = vmatpush2.xpose.msra.mxu0 0.0
        %893 = vmatprep.subr.mxu0 0.0
        %894 = vmatpush2.xpose.msra.mxu0 0.0
        %895 = vmatprep.subr.mxu0 0.0
        %896 = vmatpush2.xpose.msra.mxu0 0.0
        %897 = vmatprep.subr.mxu0 0.0
        %898 = vmatpush2.xpose.msra.mxu0 0.0
        %899 = vmatprep.subr.mxu0 0.0
        %900 = vmatpush2.xpose.msra.mxu0 0.0
        %901 = vmatprep.subr.mxu0 0.0
        %902 = vmatpush2.xpose.msra.mxu0 0.0
        %903 = vmatprep.subr.mxu0 0.0
        %904 = vmatpush2.xpose.msra.mxu0 0.0
        %905 = vmatprep.mubr.f32.mxu0 0.0
        %906 = vmatmul.mubr.f32.gmra.mxu0 %v765
        %v907 = vpop.f32.mrf.mxu0
        %v908 = vadd.f32 0.0, %v907
        %v909 = vpop.f32.mrf.mxu0
        %910 = vdwg.mxu0
        %vm911 = vcmask 64512
        %v912 = vsel %vm911, %v838, -inf
        %913 = vmax.xlane.f32.xlu0 %v912
        %v914 = vpop.xlane.xlu0 %913
        %v915 = vsel %vm911, %v908, -inf
        %916 = vmax.xlane.f32.xlu0 %v915
        %v917 = vpop.xlane.xlu0 %916
        %v918 = vsub.f32 %v838, %v914
        %v919 = vsub.f32 %v908, %v917
        %v920 = vmul.f32 %v918, 1.442695
        %v921 = vpow.pop %v920
        %v922 = vmul.f32 %v919, 1.442695
        %v923 = vpow.pop %v922
        %v924 = vsel %vm911, %v921, 0.0
        %925 = vadd.xlane.f32.xlu0 %v924
        %v926 = vpop.xlane.xlu0 %925
        %v927 = vsel %vm911, %v923, 0.0
        %928 = vadd.xlane.f32.xlu0 %v927
        %v929 = vpop.xlane.xlu0 %928
        %v930 = vrcp.pop %v926
        %v931 = vrcp.pop %v929
        %v932 = vmul.f32 %v921, %v930
        %v933 = vmul.f32 %v923, %v931
        %v935 = vsel %vm911, %v932, 0
        %937 = vmatprep.subr.mxu0 0.0
        %938 = vmatpush1.msra.mxu0 0.0
        %939 = vmatprep.subr.mxu0 0.0
        %940 = vmatpush1.msra.mxu0 0.0
        %941 = vmatprep.subr.mxu0 0.0
        %942 = vmatpush1.msra.mxu0 0.0
        %943 = vmatprep.subr.mxu0 0.0
        %944 = vmatpush1.msra.mxu0 0.0
        %945 = vmatprep.subr.mxu0 0.0
        %946 = vmatpush1.msra.mxu0 0.0
        %947 = vmatprep.subr.mxu0 0.0
        %948 = vmatpush1.msra.mxu0 0.0
        %949 = vmatprep.subr.mxu0 0.0
        %950 = vmatpush1.msra.mxu0 0.0
        %951 = vmatprep.subr.mxu0 0.0
        %952 = vmatpush1.msra.mxu0 0.0
        %953 = vmatprep.subr.mxu0 0.0
        %954 = vmatpush1.msra.mxu0 0.0
        %955 = vmatprep.subr.mxu0 0.0
        %956 = vmatpush1.msra.mxu0 0.0
        %957 = vmatprep.subr.mxu0 0.0
        %958 = vmatpush1.msra.mxu0 0.0
        %959 = vmatprep.subr.mxu0 0.0
        %960 = vmatpush1.msra.mxu0 0.0
        %961 = vmatprep.subr.mxu0 0.0
        %962 = vmatpush1.msra.mxu0 0.0
        %963 = vmatprep.subr.mxu0 0.0
        %964 = vmatpush1.msra.mxu0 0.0
        %965 = vmatprep.subr.mxu0 0.0
        %966 = vmatpush1.msra.mxu0 0.0
        %967 = vmatprep.subr.mxu0 0.0
        %968 = vmatpush1.msra.mxu0 %v752
        %969 = vmatprep.subr.mxu0 0.0
        %970 = vmatpush2.msra.mxu0 0.0
        %971 = vmatprep.subr.mxu0 0.0
        %972 = vmatpush2.msra.mxu0 0.0
        %973 = vmatprep.subr.mxu0 0.0
        %974 = vmatpush2.msra.mxu0 0.0
        %975 = vmatprep.subr.mxu0 0.0
        %976 = vmatpush2.msra.mxu0 0.0
        %977 = vmatprep.subr.mxu0 0.0
        %978 = vmatpush2.msra.mxu0 0.0
        %979 = vmatprep.subr.mxu0 0.0
        %980 = vmatpush2.msra.mxu0 0.0
        %981 = vmatprep.subr.mxu0 0.0
        %982 = vmatpush2.msra.mxu0 0.0
        %983 = vmatprep.subr.mxu0 0.0
        %984 = vmatpush2.msra.mxu0 0.0
        %985 = vmatprep.subr.mxu0 0.0
        %986 = vmatpush2.msra.mxu0 0.0
        %987 = vmatprep.subr.mxu0 0.0
        %988 = vmatpush2.msra.mxu0 0.0
        %989 = vmatprep.subr.mxu0 0.0
        %990 = vmatpush2.msra.mxu0 0.0
        %991 = vmatprep.subr.mxu0 0.0
        %992 = vmatpush2.msra.mxu0 0.0
        %993 = vmatprep.subr.mxu0 0.0
        %994 = vmatpush2.msra.mxu0 0.0
        %995 = vmatprep.subr.mxu0 0.0
        %996 = vmatpush2.msra.mxu0 0.0
        %997 = vmatprep.subr.mxu0 0.0
        %998 = vmatpush2.msra.mxu0 0.0
        %999 = vmatprep.subr.mxu0 0.0
        %1000 = vmatpush2.msra.mxu0 0.0
        %1001 = vmatprep.mubr.f32.mxu0 0.0
        %1002 = vmatmul.mubr.f32.gmra.mxu0 %v935
        %v1003 = vpop.f32.mrf.mxu0
        %v1004 = vadd.f32 0.0, %v1003
        %v1005 = vpop.f32.mrf.mxu0
        %1006 = vdwg.mxu0
        %v1008 = vsel %vm911, %v933, 0
        %1010 = vmatprep.subr.mxu0 0.0
        %1011 = vmatpush1.msra.mxu0 0.0
        %1012 = vmatprep.subr.mxu0 0.0
        %1013 = vmatpush1.msra.mxu0 0.0
        %1014 = vmatprep.subr.mxu0 0.0
        %1015 = vmatpush1.msra.mxu0 0.0
        %1016 = vmatprep.subr.mxu0 0.0
        %1017 = vmatpush1.msra.mxu0 0.0
        %1018 = vmatprep.subr.mxu0 0.0
        %1019 = vmatpush1.msra.mxu0 0.0
        %1020 = vmatprep.subr.mxu0 0.0
        %1021 = vmatpush1.msra.mxu0 0.0
        %1022 = vmatprep.subr.mxu0 0.0
        %1023 = vmatpush1.msra.mxu0 0.0
        %1024 = vmatprep.subr.mxu0 0.0
        %1025 = vmatpush1.msra.mxu0 0.0
        %1026 = vmatprep.subr.mxu0 0.0
        %1027 = vmatpush1.msra.mxu0 0.0
        %1028 = vmatprep.subr.mxu0 0.0
        %1029 = vmatpush1.msra.mxu0 0.0
        %1030 = vmatprep.subr.mxu0 0.0
        %1031 = vmatpush1.msra.mxu0 0.0
        %1032 = vmatprep.subr.mxu0 0.0
        %1033 = vmatpush1.msra.mxu0 0.0
        %1034 = vmatprep.subr.mxu0 0.0
        %1035 = vmatpush1.msra.mxu0 0.0
        %1036 = vmatprep.subr.mxu0 0.0
        %1037 = vmatpush1.msra.mxu0 0.0
        %1038 = vmatprep.subr.mxu0 0.0
        %1039 = vmatpush1.msra.mxu0 0.0
        %1040 = vmatprep.subr.mxu0 0.0
        %1041 = vmatpush1.msra.mxu0 %v752
        %1042 = vmatprep.subr.mxu0 0.0
        %1043 = vmatpush2.msra.mxu0 0.0
        %1044 = vmatprep.subr.mxu0 0.0
        %1045 = vmatpush2.msra.mxu0 0.0
        %1046 = vmatprep.subr.mxu0 0.0
        %1047 = vmatpush2.msra.mxu0 0.0
        %1048 = vmatprep.subr.mxu0 0.0
        %1049 = vmatpush2.msra.mxu0 0.0
        %1050 = vmatprep.subr.mxu0 0.0
        %1051 = vmatpush2.msra.mxu0 0.0
        %1052 = vmatprep.subr.mxu0 0.0
        %1053 = vmatpush2.msra.mxu0 0.0
        %1054 = vmatprep.subr.mxu0 0.0
        %1055 = vmatpush2.msra.mxu0 0.0
        %1056 = vmatprep.subr.mxu0 0.0
        %1057 = vmatpush2.msra.mxu0 0.0
        %1058 = vmatprep.subr.mxu0 0.0
        %1059 = vmatpush2.msra.mxu0 0.0
        %1060 = vmatprep.subr.mxu0 0.0
        %1061 = vmatpush2.msra.mxu0 0.0
        %1062 = vmatprep.subr.mxu0 0.0
        %1063 = vmatpush2.msra.mxu0 0.0
        %1064 = vmatprep.subr.mxu0 0.0
        %1065 = vmatpush2.msra.mxu0 0.0
        %1066 = vmatprep.subr.mxu0 0.0
        %1067 = vmatpush2.msra.mxu0 0.0
        %1068 = vmatprep.subr.mxu0 0.0
        %1069 = vmatpush2.msra.mxu0 0.0
        %1070 = vmatprep.subr.mxu0 0.0
        %1071 = vmatpush2.msra.mxu0 0.0
        %1072 = vmatprep.subr.mxu0 0.0
        %1073 = vmatpush2.msra.mxu0 0.0
        %1074 = vmatprep.mubr.f32.mxu0 0.0
        %1075 = vmatmul.mubr.f32.gmra.mxu0 %v1008
        %v1076 = vpop.f32.mrf.mxu0
        %v1077 = vadd.f32 0.0, %v1076
        %v1078 = vpop.f32.mrf.mxu0
        %1079 = vdwg.mxu0
        %v1080 = vld [vmem:[#allocation7] sm:$0xff]
        %v1081 = vld [vmem:[#allocation7 + $0x8] sm:$0xff]
        %v1082 = vld [vmem:[#allocation7 + $0x10] sm:$0xff]
        %v1083 = vld [vmem:[#allocation7 + $0x18] sm:$0xff]
        %v1084 = vld [vmem:[#allocation7 + $0x20] sm:$0xff]
        %v1085 = vld [vmem:[#allocation7 + $0x28] sm:$0xff]
        %v1086 = vld [vmem:[#allocation7 + $0x30] sm:$0xff]
        %v1087 = vld [vmem:[#allocation7 + $0x38] sm:$0xff]
        %v1088 = vld [vmem:[#allocation7 + $0x40] sm:$0xff]
        %v1089 = vld [vmem:[#allocation7 + $0x48] sm:$0xff]
        %v1090 = vld [vmem:[#allocation7 + $0x50] sm:$0xff]
        %v1091 = vld [vmem:[#allocation7 + $0x58] sm:$0xff]
        %v1092 = vld [vmem:[#allocation7 + $0x60] sm:$0xff]
        %v1093 = vld [vmem:[#allocation7 + $0x68] sm:$0xff]
        %v1094 = vld [vmem:[#allocation7 + $0x70] sm:$0xff]
        %v1095 = vld [vmem:[#allocation7 + $0x78] sm:$0xff]
        %v1096 = vld [vmem:[#allocation7 + $0x80] sm:$0xff]
        %v1097 = vld [vmem:[#allocation7 + $0x88] sm:$0xff]
        %v1098 = vld [vmem:[#allocation7 + $0x90] sm:$0xff]
        %v1099 = vld [vmem:[#allocation7 + $0x98] sm:$0xff]
        %v1100 = vld [vmem:[#allocation7 + $0xa0] sm:$0xff]
        %v1101 = vld [vmem:[#allocation7 + $0xa8] sm:$0xff]
        %v1102 = vld [vmem:[#allocation7 + $0xb0] sm:$0xff]
        %v1103 = vld [vmem:[#allocation7 + $0xb8] sm:$0xff]
        %v1104 = vld [vmem:[#allocation7 + $0xc0] sm:$0xff]
        %v1105 = vld [vmem:[#allocation7 + $0xc8] sm:$0xff]
        %v1106 = vld [vmem:[#allocation7 + $0xd0] sm:$0xff]
        %v1107 = vld [vmem:[#allocation7 + $0xd8] sm:$0xff]
        %v1108 = vld [vmem:[#allocation7 + $0xe0] sm:$0xff]
        %v1109 = vld [vmem:[#allocation7 + $0xe8] sm:$0xff]
        %v1110 = vld [vmem:[#allocation7 + $0xf0] sm:$0xff]
        %v1111 = vld [vmem:[#allocation7 + $0xf8] sm:$0xff]
        %v1112 = vld [vmem:[#allocation7 + $0x100] sm:$0xff]
        %v1113 = vld [vmem:[#allocation7 + $0x108] sm:$0xff]
        %v1114 = vld [vmem:[#allocation7 + $0x110] sm:$0xff]
        %v1115 = vld [vmem:[#allocation7 + $0x118] sm:$0xff]
        %v1116 = vld [vmem:[#allocation7 + $0x120] sm:$0xff]
        %v1117 = vld [vmem:[#allocation7 + $0x128] sm:$0xff]
        %v1118 = vld [vmem:[#allocation7 + $0x130] sm:$0xff]
        %v1119 = vld [vmem:[#allocation7 + $0x138] sm:$0xff]
        %v1120 = vld [vmem:[#allocation7 + $0x140] sm:$0xff]
        %v1121 = vld [vmem:[#allocation7 + $0x148] sm:$0xff]
        %v1122 = vld [vmem:[#allocation7 + $0x150] sm:$0xff]
        %v1123 = vld [vmem:[#allocation7 + $0x158] sm:$0xff]
        %v1124 = vld [vmem:[#allocation7 + $0x160] sm:$0xff]
        %v1125 = vld [vmem:[#allocation7 + $0x168] sm:$0xff]
        %v1126 = vld [vmem:[#allocation7 + $0x170] sm:$0xff]
        %v1127 = vld [vmem:[#allocation7 + $0x178] sm:$0xff]
        %v1128 = vld [vmem:[#allocation7 + $0x180] sm:$0xff]
        %v1129 = vld [vmem:[#allocation7 + $0x188] sm:$0xff]
        %v1130 = vld [vmem:[#allocation7 + $0x190] sm:$0xff]
        %v1131 = vld [vmem:[#allocation7 + $0x198] sm:$0xff]
        %v1132 = vld [vmem:[#allocation7 + $0x1a0] sm:$0xff]
        %v1133 = vld [vmem:[#allocation7 + $0x1a8] sm:$0xff]
        %v1134 = vld [vmem:[#allocation7 + $0x1b0] sm:$0xff]
        %v1135 = vld [vmem:[#allocation7 + $0x1b8] sm:$0xff]
        %v1136 = vld [vmem:[#allocation7 + $0x1c0] sm:$0xff]
        %v1137 = vld [vmem:[#allocation7 + $0x1c8] sm:$0xff]
        %v1138 = vld [vmem:[#allocation7 + $0x1d0] sm:$0xff]
        %v1139 = vld [vmem:[#allocation7 + $0x1d8] sm:$0xff]
        %v1140 = vld [vmem:[#allocation7 + $0x1e0] sm:$0xff]
        %v1141 = vld [vmem:[#allocation7 + $0x1e8] sm:$0xff]
        %v1142 = vld [vmem:[#allocation7 + $0x1f0] sm:$0xff]
        %v1143 = vld [vmem:[#allocation7 + $0x1f8] sm:$0xff]
        %1144 = vmatprep.subr.mxu0 %v1111
        %1145 = vmatpush1.msra.mxu0 %v1110
        %1146 = vmatprep.subr.mxu0 %v1109
        %1147 = vmatpush1.msra.mxu0 %v1108
        %1148 = vmatprep.subr.mxu0 %v1107
        %1149 = vmatpush1.msra.mxu0 %v1106
        %1150 = vmatprep.subr.mxu0 %v1105
        %1151 = vmatpush1.msra.mxu0 %v1104
        %1152 = vmatprep.subr.mxu0 %v1103
        %1153 = vmatpush1.msra.mxu0 %v1102
        %1154 = vmatprep.subr.mxu0 %v1101
        %1155 = vmatpush1.msra.mxu0 %v1100
        %1156 = vmatprep.subr.mxu0 %v1099
        %1157 = vmatpush1.msra.mxu0 %v1098
        %1158 = vmatprep.subr.mxu0 %v1097
        %1159 = vmatpush1.msra.mxu0 %v1096
        %1160 = vmatprep.subr.mxu0 %v1095
        %1161 = vmatpush1.msra.mxu0 %v1094
        %1162 = vmatprep.subr.mxu0 %v1093
        %1163 = vmatpush1.msra.mxu0 %v1092
        %1164 = vmatprep.subr.mxu0 %v1091
        %1165 = vmatpush1.msra.mxu0 %v1090
        %1166 = vmatprep.subr.mxu0 %v1089
        %1167 = vmatpush1.msra.mxu0 %v1088
        %1168 = vmatprep.subr.mxu0 %v1087
        %1169 = vmatpush1.msra.mxu0 %v1086
        %1170 = vmatprep.subr.mxu0 %v1085
        %1171 = vmatpush1.msra.mxu0 %v1084
        %1172 = vmatprep.subr.mxu0 %v1083
        %1173 = vmatpush1.msra.mxu0 %v1082
        %1174 = vmatprep.subr.mxu0 %v1081
        %1175 = vmatpush1.msra.mxu0 %v1080
        %1176 = vmatprep.subr.mxu0 0.0
        %1177 = vmatpush2.msra.mxu0 0.0
        %1178 = vmatprep.subr.mxu0 0.0
        %1179 = vmatpush2.msra.mxu0 0.0
        %1180 = vmatprep.subr.mxu0 0.0
        %1181 = vmatpush2.msra.mxu0 0.0
        %1182 = vmatprep.subr.mxu0 0.0
        %1183 = vmatpush2.msra.mxu0 0.0
        %1184 = vmatprep.subr.mxu0 0.0
        %1185 = vmatpush2.msra.mxu0 0.0
        %1186 = vmatprep.subr.mxu0 0.0
        %1187 = vmatpush2.msra.mxu0 0.0
        %1188 = vmatprep.subr.mxu0 0.0
        %1189 = vmatpush2.msra.mxu0 0.0
        %1190 = vmatprep.subr.mxu0 0.0
        %1191 = vmatpush2.msra.mxu0 0.0
        %1192 = vmatprep.subr.mxu0 0.0
        %1193 = vmatpush2.msra.mxu0 0.0
        %1194 = vmatprep.subr.mxu0 0.0
        %1195 = vmatpush2.msra.mxu0 0.0
        %1196 = vmatprep.subr.mxu0 0.0
        %1197 = vmatpush2.msra.mxu0 0.0
        %1198 = vmatprep.subr.mxu0 0.0
        %1199 = vmatpush2.msra.mxu0 0.0
        %1200 = vmatprep.subr.mxu0 0.0
        %1201 = vmatpush2.msra.mxu0 0.0
        %1202 = vmatprep.subr.mxu0 0.0
        %1203 = vmatpush2.msra.mxu0 0.0
        %1204 = vmatprep.subr.mxu0 0.0
        %1205 = vmatpush2.msra.mxu0 0.0
        %1206 = vmatprep.subr.mxu0 0.0
        %1207 = vmatpush2.msra.mxu0 0.0
        %1208 = vmatprep.mubr.f32.mxu0 0.0
        %1209 = vmatmul.mubr.f32.gmra.mxu0 %v1004
        %v1210 = vpop.f32.mrf.mxu0
        %v1211 = vadd.f32 0.0, %v1210
        %v1212 = vpop.f32.mrf.mxu0
        %v1213 = vadd.f32 0.0, %v1212
        %1214 = vdwg.mxu0
        %1215 = vmatprep.subr.mxu0 %v1143
        %1216 = vmatpush1.msra.mxu0 %v1142
        %1217 = vmatprep.subr.mxu0 %v1141
        %1218 = vmatpush1.msra.mxu0 %v1140
        %1219 = vmatprep.subr.mxu0 %v1139
        %1220 = vmatpush1.msra.mxu0 %v1138
        %1221 = vmatprep.subr.mxu0 %v1137
        %1222 = vmatpush1.msra.mxu0 %v1136
        %1223 = vmatprep.subr.mxu0 %v1135
        %1224 = vmatpush1.msra.mxu0 %v1134
        %1225 = vmatprep.subr.mxu0 %v1133
        %1226 = vmatpush1.msra.mxu0 %v1132
        %1227 = vmatprep.subr.mxu0 %v1131
        %1228 = vmatpush1.msra.mxu0 %v1130
        %1229 = vmatprep.subr.mxu0 %v1129
        %1230 = vmatpush1.msra.mxu0 %v1128
        %1231 = vmatprep.subr.mxu0 %v1127
        %1232 = vmatpush1.msra.mxu0 %v1126
        %1233 = vmatprep.subr.mxu0 %v1125
        %1234 = vmatpush1.msra.mxu0 %v1124
        %1235 = vmatprep.subr.mxu0 %v1123
        %1236 = vmatpush1.msra.mxu0 %v1122
        %1237 = vmatprep.subr.mxu0 %v1121
        %1238 = vmatpush1.msra.mxu0 %v1120
        %1239 = vmatprep.subr.mxu0 %v1119
        %1240 = vmatpush1.msra.mxu0 %v1118
        %1241 = vmatprep.subr.mxu0 %v1117
        %1242 = vmatpush1.msra.mxu0 %v1116
        %1243 = vmatprep.subr.mxu0 %v1115
        %1244 = vmatpush1.msra.mxu0 %v1114
        %1245 = vmatprep.subr.mxu0 %v1113
        %1246 = vmatpush1.msra.mxu0 %v1112
        %1247 = vmatprep.subr.mxu0 0.0
        %1248 = vmatpush2.msra.mxu0 0.0
        %1249 = vmatprep.subr.mxu0 0.0
        %1250 = vmatpush2.msra.mxu0 0.0
        %1251 = vmatprep.subr.mxu0 0.0
        %1252 = vmatpush2.msra.mxu0 0.0
        %1253 = vmatprep.subr.mxu0 0.0
        %1254 = vmatpush2.msra.mxu0 0.0
        %1255 = vmatprep.subr.mxu0 0.0
        %1256 = vmatpush2.msra.mxu0 0.0
        %1257 = vmatprep.subr.mxu0 0.0
        %1258 = vmatpush2.msra.mxu0 0.0
        %1259 = vmatprep.subr.mxu0 0.0
        %1260 = vmatpush2.msra.mxu0 0.0
        %1261 = vmatprep.subr.mxu0 0.0
        %1262 = vmatpush2.msra.mxu0 0.0
        %1263 = vmatprep.subr.mxu0 0.0
        %1264 = vmatpush2.msra.mxu0 0.0
        %1265 = vmatprep.subr.mxu0 0.0
        %1266 = vmatpush2.msra.mxu0 0.0
        %1267 = vmatprep.subr.mxu0 0.0
        %1268 = vmatpush2.msra.mxu0 0.0
        %1269 = vmatprep.subr.mxu0 0.0
        %1270 = vmatpush2.msra.mxu0 0.0
        %1271 = vmatprep.subr.mxu0 0.0
        %1272 = vmatpush2.msra.mxu0 0.0
        %1273 = vmatprep.subr.mxu0 0.0
        %1274 = vmatpush2.msra.mxu0 0.0
        %1275 = vmatprep.subr.mxu0 0.0
        %1276 = vmatpush2.msra.mxu0 0.0
        %1277 = vmatprep.subr.mxu0 0.0
        %1278 = vmatpush2.msra.mxu0 0.0
        %1279 = vmatprep.mubr.f32.mxu0 0.0
        %1280 = vmatmul.mubr.f32.gmra.mxu0 %v1077
        %v1281 = vpop.f32.mrf.mxu0
        %v1282 = vadd.f32 0.0, %v1281
        %v1283 = vpop.f32.mrf.mxu0
        %v1284 = vadd.f32 0.0, %v1283
        %1285 = vdwg.mxu0
        %v1286 = vadd.f32 %v1211, %v1282
        %v1287 = vadd.f32 %v1213, %v1284
        %v1288 = vadd.f32 %v457, %v1286
        %v1289 = vadd.f32 %v458, %v1287
        %v1290 = vmul.f32 %v1288, %v1288
        %v1291 = vmul.f32 %v1289, %v1289
        %v1292 = vadd.f32 %v1290, %v1291
        %1293 = vadd.xlane.f32.xlu0 %v1292
        %v1294 = vpop.xlane.xlu0 %1293
        %v1295 = vmul.f32 %v1294, %v464
        %v1296 = vadd.f32 %v1295, 1e-05
        %v1297 = vrsqrt.pop %v1296
        %v1298 = vmul.f32 %v1288, %v1297
        %v1299 = vmul.f32 %v1289, %v1297
        %v1300 = vld [vmem:[#allocation13] sm:$0x3]
        %v1302 = vlaneseq
        %v1303 = vshrl.u32 %v1302, 7
        %v1304 = vsub.s32 0, %v1303
        %v1305 = vrot.slane %v1300, %v1304
        %v1306 = vlaneseq
        %v1307 = vshrl.u32 %v1306, 7
        %v1308 = vsub.s32 1, %v1307
        %v1309 = vrot.slane %v1300, %v1308
        %v1312 = vmul.f32 %v1298, %v1305
        %v1313 = vmul.f32 %v1299, %v1309
        %v1314 = vld [vmem:[#allocation8] sm:$0xff]
        %v1315 = vld [vmem:[#allocation8 + $0x8] sm:$0xff]
        %v1316 = vld [vmem:[#allocation8 + $0x10] sm:$0xff]
        %v1317 = vld [vmem:[#allocation8 + $0x18] sm:$0xff]
        %v1318 = vld [vmem:[#allocation8 + $0x20] sm:$0xff]
        %v1319 = vld [vmem:[#allocation8 + $0x28] sm:$0xff]
        %v1320 = vld [vmem:[#allocation8 + $0x30] sm:$0xff]
        %v1321 = vld [vmem:[#allocation8 + $0x38] sm:$0xff]
        %v1322 = vld [vmem:[#allocation8 + $0x40] sm:$0xff]
        %v1323 = vld [vmem:[#allocation8 + $0x48] sm:$0xff]
        %v1324 = vld [vmem:[#allocation8 + $0x50] sm:$0xff]
        %v1325 = vld [vmem:[#allocation8 + $0x58] sm:$0xff]
        %v1326 = vld [vmem:[#allocation8 + $0x60] sm:$0xff]
        %v1327 = vld [vmem:[#allocation8 + $0x68] sm:$0xff]
        %v1328 = vld [vmem:[#allocation8 + $0x70] sm:$0xff]
        %v1329 = vld [vmem:[#allocation8 + $0x78] sm:$0xff]
        %v1330 = vld [vmem:[#allocation8 + $0x80] sm:$0xff]
        %v1331 = vld [vmem:[#allocation8 + $0x88] sm:$0xff]
        %v1332 = vld [vmem:[#allocation8 + $0x90] sm:$0xff]
        %v1333 = vld [vmem:[#allocation8 + $0x98] sm:$0xff]
        %v1334 = vld [vmem:[#allocation8 + $0xa0] sm:$0xff]
        %v1335 = vld [vmem:[#allocation8 + $0xa8] sm:$0xff]
        %v1336 = vld [vmem:[#allocation8 + $0xb0] sm:$0xff]
        %v1337 = vld [vmem:[#allocation8 + $0xb8] sm:$0xff]
        %v1338 = vld [vmem:[#allocation8 + $0xc0] sm:$0xff]
        %v1339 = vld [vmem:[#allocation8 + $0xc8] sm:$0xff]
        %v1340 = vld [vmem:[#allocation8 + $0xd0] sm:$0xff]
        %v1341 = vld [vmem:[#allocation8 + $0xd8] sm:$0xff]
        %v1342 = vld [vmem:[#allocation8 + $0xe0] sm:$0xff]
        %v1343 = vld [vmem:[#allocation8 + $0xe8] sm:$0xff]
        %v1344 = vld [vmem:[#allocation8 + $0xf0] sm:$0xff]
        %v1345 = vld [vmem:[#allocation8 + $0xf8] sm:$0xff]
        %v1346 = vld [vmem:[#allocation8 + $0x100] sm:$0xff]
        %v1347 = vld [vmem:[#allocation8 + $0x108] sm:$0xff]
        %v1348 = vld [vmem:[#allocation8 + $0x110] sm:$0xff]
        %v1349 = vld [vmem:[#allocation8 + $0x118] sm:$0xff]
        %v1350 = vld [vmem:[#allocation8 + $0x120] sm:$0xff]
        %v1351 = vld [vmem:[#allocation8 + $0x128] sm:$0xff]
        %v1352 = vld [vmem:[#allocation8 + $0x130] sm:$0xff]
        %v1353 = vld [vmem:[#allocation8 + $0x138] sm:$0xff]
        %v1354 = vld [vmem:[#allocation8 + $0x140] sm:$0xff]
        %v1355 = vld [vmem:[#allocation8 + $0x148] sm:$0xff]
        %v1356 = vld [vmem:[#allocation8 + $0x150] sm:$0xff]
        %v1357 = vld [vmem:[#allocation8 + $0x158] sm:$0xff]
        %v1358 = vld [vmem:[#allocation8 + $0x160] sm:$0xff]
        %v1359 = vld [vmem:[#allocation8 + $0x168] sm:$0xff]
        %v1360 = vld [vmem:[#allocation8 + $0x170] sm:$0xff]
        %v1361 = vld [vmem:[#allocation8 + $0x178] sm:$0xff]
        %v1362 = vld [vmem:[#allocation8 + $0x180] sm:$0xff]
        %v1363 = vld [vmem:[#allocation8 + $0x188] sm:$0xff]
        %v1364 = vld [vmem:[#allocation8 + $0x190] sm:$0xff]
        %v1365 = vld [vmem:[#allocation8 + $0x198] sm:$0xff]
        %v1366 = vld [vmem:[#allocation8 + $0x1a0] sm:$0xff]
        %v1367 = vld [vmem:[#allocation8 + $0x1a8] sm:$0xff]
        %v1368 = vld [vmem:[#allocation8 + $0x1b0] sm:$0xff]
        %v1369 = vld [vmem:[#allocation8 + $0x1b8] sm:$0xff]
        %v1370 = vld [vmem:[#allocation8 + $0x1c0] sm:$0xff]
        %v1371 = vld [vmem:[#allocation8 + $0x1c8] sm:$0xff]
        %v1372 = vld [vmem:[#allocation8 + $0x1d0] sm:$0xff]
        %v1373 = vld [vmem:[#allocation8 + $0x1d8] sm:$0xff]
        %v1374 = vld [vmem:[#allocation8 + $0x1e0] sm:$0xff]
        %v1375 = vld [vmem:[#allocation8 + $0x1e8] sm:$0xff]
        %v1376 = vld [vmem:[#allocation8 + $0x1f0] sm:$0xff]
        %v1377 = vld [vmem:[#allocation8 + $0x1f8] sm:$0xff]
        %v1378 = vld [vmem:[#allocation8 + $0x200] sm:$0xff]
        %v1379 = vld [vmem:[#allocation8 + $0x208] sm:$0xff]
        %v1380 = vld [vmem:[#allocation8 + $0x210] sm:$0xff]
        %v1381 = vld [vmem:[#allocation8 + $0x218] sm:$0xff]
        %v1382 = vld [vmem:[#allocation8 + $0x220] sm:$0xff]
        %v1383 = vld [vmem:[#allocation8 + $0x228] sm:$0xff]
        %v1384 = vld [vmem:[#allocation8 + $0x230] sm:$0xff]
        %v1385 = vld [vmem:[#allocation8 + $0x238] sm:$0xff]
        %v1386 = vld [vmem:[#allocation8 + $0x240] sm:$0xff]
        %v1387 = vld [vmem:[#allocation8 + $0x248] sm:$0xff]
        %v1388 = vld [vmem:[#allocation8 + $0x250] sm:$0xff]
        %v1389 = vld [vmem:[#allocation8 + $0x258] sm:$0xff]
        %v1390 = vld [vmem:[#allocation8 + $0x260] sm:$0xff]
        %v1391 = vld [vmem:[#allocation8 + $0x268] sm:$0xff]
        %v1392 = vld [vmem:[#allocation8 + $0x270] sm:$0xff]
        %v1393 = vld [vmem:[#allocation8 + $0x278] sm:$0xff]
        %v1394 = vld [vmem:[#allocation8 + $0x280] sm:$0xff]
        %v1395 = vld [vmem:[#allocation8 + $0x288] sm:$0xff]
        %v1396 = vld [vmem:[#allocation8 + $0x290] sm:$0xff]
        %v1397 = vld [vmem:[#allocation8 + $0x298] sm:$0xff]
        %v1398 = vld [vmem:[#allocation8 + $0x2a0] sm:$0xff]
        %v1399 = vld [vmem:[#allocation8 + $0x2a8] sm:$0xff]
        %v1400 = vld [vmem:[#allocation8 + $0x2b0] sm:$0xff]
        %v1401 = vld [vmem:[#allocation8 + $0x2b8] sm:$0xff]
        %v1402 = vld [vmem:[#allocation8 + $0x2c0] sm:$0xff]
        %v1403 = vld [vmem:[#allocation8 + $0x2c8] sm:$0xff]
        %v1404 = vld [vmem:[#allocation8 + $0x2d0] sm:$0xff]
        %v1405 = vld [vmem:[#allocation8 + $0x2d8] sm:$0xff]
        %v1406 = vld [vmem:[#allocation8 + $0x2e0] sm:$0xff]
        %v1407 = vld [vmem:[#allocation8 + $0x2e8] sm:$0xff]
        %v1408 = vld [vmem:[#allocation8 + $0x2f0] sm:$0xff]
        %v1409 = vld [vmem:[#allocation8 + $0x2f8] sm:$0xff]
        %v1410 = vld [vmem:[#allocation8 + $0x300] sm:$0xff]
        %v1411 = vld [vmem:[#allocation8 + $0x308] sm:$0xff]
        %v1412 = vld [vmem:[#allocation8 + $0x310] sm:$0xff]
        %v1413 = vld [vmem:[#allocation8 + $0x318] sm:$0xff]
        %v1414 = vld [vmem:[#allocation8 + $0x320] sm:$0xff]
        %v1415 = vld [vmem:[#allocation8 + $0x328] sm:$0xff]
        %v1416 = vld [vmem:[#allocation8 + $0x330] sm:$0xff]
        %v1417 = vld [vmem:[#allocation8 + $0x338] sm:$0xff]
        %v1418 = vld [vmem:[#allocation8 + $0x340] sm:$0xff]
        %v1419 = vld [vmem:[#allocation8 + $0x348] sm:$0xff]
        %v1420 = vld [vmem:[#allocation8 + $0x350] sm:$0xff]
        %v1421 = vld [vmem:[#allocation8 + $0x358] sm:$0xff]
        %v1422 = vld [vmem:[#allocation8 + $0x360] sm:$0xff]
        %v1423 = vld [vmem:[#allocation8 + $0x368] sm:$0xff]
        %v1424 = vld [vmem:[#allocation8 + $0x370] sm:$0xff]
        %v1425 = vld [vmem:[#allocation8 + $0x378] sm:$0xff]
        %v1426 = vld [vmem:[#allocation8 + $0x380] sm:$0xff]
        %v1427 = vld [vmem:[#allocation8 + $0x388] sm:$0xff]
        %v1428 = vld [vmem:[#allocation8 + $0x390] sm:$0xff]
        %v1429 = vld [vmem:[#allocation8 + $0x398] sm:$0xff]
        %v1430 = vld [vmem:[#allocation8 + $0x3a0] sm:$0xff]
        %v1431 = vld [vmem:[#allocation8 + $0x3a8] sm:$0xff]
        %v1432 = vld [vmem:[#allocation8 + $0x3b0] sm:$0xff]
        %v1433 = vld [vmem:[#allocation8 + $0x3b8] sm:$0xff]
        %v1434 = vld [vmem:[#allocation8 + $0x3c0] sm:$0xff]
        %v1435 = vld [vmem:[#allocation8 + $0x3c8] sm:$0xff]
        %v1436 = vld [vmem:[#allocation8 + $0x3d0] sm:$0xff]
        %v1437 = vld [vmem:[#allocation8 + $0x3d8] sm:$0xff]
        %v1438 = vld [vmem:[#allocation8 + $0x3e0] sm:$0xff]
        %v1439 = vld [vmem:[#allocation8 + $0x3e8] sm:$0xff]
        %v1440 = vld [vmem:[#allocation8 + $0x3f0] sm:$0xff]
        %v1441 = vld [vmem:[#allocation8 + $0x3f8] sm:$0xff]
        %v1442 = vld [vmem:[#allocation8 + $0x400] sm:$0xff]
        %v1443 = vld [vmem:[#allocation8 + $0x408] sm:$0xff]
        %v1444 = vld [vmem:[#allocation8 + $0x410] sm:$0xff]
        %v1445 = vld [vmem:[#allocation8 + $0x418] sm:$0xff]
        %v1446 = vld [vmem:[#allocation8 + $0x420] sm:$0xff]
        %v1447 = vld [vmem:[#allocation8 + $0x428] sm:$0xff]
        %v1448 = vld [vmem:[#allocation8 + $0x430] sm:$0xff]
        %v1449 = vld [vmem:[#allocation8 + $0x438] sm:$0xff]
        %v1450 = vld [vmem:[#allocation8 + $0x440] sm:$0xff]
        %v1451 = vld [vmem:[#allocation8 + $0x448] sm:$0xff]
        %v1452 = vld [vmem:[#allocation8 + $0x450] sm:$0xff]
        %v1453 = vld [vmem:[#allocation8 + $0x458] sm:$0xff]
        %v1454 = vld [vmem:[#allocation8 + $0x460] sm:$0xff]
        %v1455 = vld [vmem:[#allocation8 + $0x468] sm:$0xff]
        %v1456 = vld [vmem:[#allocation8 + $0x470] sm:$0xff]
        %v1457 = vld [vmem:[#allocation8 + $0x478] sm:$0xff]
        %v1458 = vld [vmem:[#allocation8 + $0x480] sm:$0xff]
        %v1459 = vld [vmem:[#allocation8 + $0x488] sm:$0xff]
        %v1460 = vld [vmem:[#allocation8 + $0x490] sm:$0xff]
        %v1461 = vld [vmem:[#allocation8 + $0x498] sm:$0xff]
        %v1462 = vld [vmem:[#allocation8 + $0x4a0] sm:$0xff]
        %v1463 = vld [vmem:[#allocation8 + $0x4a8] sm:$0xff]
        %v1464 = vld [vmem:[#allocation8 + $0x4b0] sm:$0xff]
        %v1465 = vld [vmem:[#allocation8 + $0x4b8] sm:$0xff]
        %v1466 = vld [vmem:[#allocation8 + $0x4c0] sm:$0xff]
        %v1467 = vld [vmem:[#allocation8 + $0x4c8] sm:$0xff]
        %v1468 = vld [vmem:[#allocation8 + $0x4d0] sm:$0xff]
        %v1469 = vld [vmem:[#allocation8 + $0x4d8] sm:$0xff]
        %v1470 = vld [vmem:[#allocation8 + $0x4e0] sm:$0xff]
        %v1471 = vld [vmem:[#allocation8 + $0x4e8] sm:$0xff]
        %v1472 = vld [vmem:[#allocation8 + $0x4f0] sm:$0xff]
        %v1473 = vld [vmem:[#allocation8 + $0x4f8] sm:$0xff]
        %v1474 = vld [vmem:[#allocation8 + $0x500] sm:$0xff]
        %v1475 = vld [vmem:[#allocation8 + $0x508] sm:$0xff]
        %v1476 = vld [vmem:[#allocation8 + $0x510] sm:$0xff]
        %v1477 = vld [vmem:[#allocation8 + $0x518] sm:$0xff]
        %v1478 = vld [vmem:[#allocation8 + $0x520] sm:$0xff]
        %v1479 = vld [vmem:[#allocation8 + $0x528] sm:$0xff]
        %v1480 = vld [vmem:[#allocation8 + $0x530] sm:$0xff]
        %v1481 = vld [vmem:[#allocation8 + $0x538] sm:$0xff]
        %v1482 = vld [vmem:[#allocation8 + $0x540] sm:$0xff]
        %v1483 = vld [vmem:[#allocation8 + $0x548] sm:$0xff]
        %v1484 = vld [vmem:[#allocation8 + $0x550] sm:$0xff]
        %v1485 = vld [vmem:[#allocation8 + $0x558] sm:$0xff]
        %v1486 = vld [vmem:[#allocation8 + $0x560] sm:$0xff]
        %v1487 = vld [vmem:[#allocation8 + $0x568] sm:$0xff]
        %v1488 = vld [vmem:[#allocation8 + $0x570] sm:$0xff]
        %v1489 = vld [vmem:[#allocation8 + $0x578] sm:$0xff]
        %v1490 = vld [vmem:[#allocation8 + $0x580] sm:$0xff]
        %v1491 = vld [vmem:[#allocation8 + $0x588] sm:$0xff]
        %v1492 = vld [vmem:[#allocation8 + $0x590] sm:$0xff]
        %v1493 = vld [vmem:[#allocation8 + $0x598] sm:$0xff]
        %v1494 = vld [vmem:[#allocation8 + $0x5a0] sm:$0xff]
        %v1495 = vld [vmem:[#allocation8 + $0x5a8] sm:$0xff]
        %v1496 = vld [vmem:[#allocation8 + $0x5b0] sm:$0xff]
        %v1497 = vld [vmem:[#allocation8 + $0x5b8] sm:$0xff]
        %v1498 = vld [vmem:[#allocation8 + $0x5c0] sm:$0xff]
        %v1499 = vld [vmem:[#allocation8 + $0x5c8] sm:$0xff]
        %v1500 = vld [vmem:[#allocation8 + $0x5d0] sm:$0xff]
        %v1501 = vld [vmem:[#allocation8 + $0x5d8] sm:$0xff]
        %v1502 = vld [vmem:[#allocation8 + $0x5e0] sm:$0xff]
        %v1503 = vld [vmem:[#allocation8 + $0x5e8] sm:$0xff]
        %v1504 = vld [vmem:[#allocation8 + $0x5f0] sm:$0xff]
        %v1505 = vld [vmem:[#allocation8 + $0x5f8] sm:$0xff]
        %v1506 = vld [vmem:[#allocation8 + $0x600] sm:$0xff]
        %v1507 = vld [vmem:[#allocation8 + $0x608] sm:$0xff]
        %v1508 = vld [vmem:[#allocation8 + $0x610] sm:$0xff]
        %v1509 = vld [vmem:[#allocation8 + $0x618] sm:$0xff]
        %v1510 = vld [vmem:[#allocation8 + $0x620] sm:$0xff]
        %v1511 = vld [vmem:[#allocation8 + $0x628] sm:$0xff]
        %v1512 = vld [vmem:[#allocation8 + $0x630] sm:$0xff]
        %v1513 = vld [vmem:[#allocation8 + $0x638] sm:$0xff]
        %v1514 = vld [vmem:[#allocation8 + $0x640] sm:$0xff]
        %v1515 = vld [vmem:[#allocation8 + $0x648] sm:$0xff]
        %v1516 = vld [vmem:[#allocation8 + $0x650] sm:$0xff]
        %v1517 = vld [vmem:[#allocation8 + $0x658] sm:$0xff]
        %v1518 = vld [vmem:[#allocation8 + $0x660] sm:$0xff]
        %v1519 = vld [vmem:[#allocation8 + $0x668] sm:$0xff]
        %v1520 = vld [vmem:[#allocation8 + $0x670] sm:$0xff]
        %v1521 = vld [vmem:[#allocation8 + $0x678] sm:$0xff]
        %v1522 = vld [vmem:[#allocation8 + $0x680] sm:$0xff]
        %v1523 = vld [vmem:[#allocation8 + $0x688] sm:$0xff]
        %v1524 = vld [vmem:[#allocation8 + $0x690] sm:$0xff]
        %v1525 = vld [vmem:[#allocation8 + $0x698] sm:$0xff]
        %v1526 = vld [vmem:[#allocation8 + $0x6a0] sm:$0xff]
        %v1527 = vld [vmem:[#allocation8 + $0x6a8] sm:$0xff]
        %v1528 = vld [vmem:[#allocation8 + $0x6b0] sm:$0xff]
        %v1529 = vld [vmem:[#allocation8 + $0x6b8] sm:$0xff]
        %v1530 = vld [vmem:[#allocation8 + $0x6c0] sm:$0xff]
        %v1531 = vld [vmem:[#allocation8 + $0x6c8] sm:$0xff]
        %v1532 = vld [vmem:[#allocation8 + $0x6d0] sm:$0xff]
        %v1533 = vld [vmem:[#allocation8 + $0x6d8] sm:$0xff]
        %v1534 = vld [vmem:[#allocation8 + $0x6e0] sm:$0xff]
        %v1535 = vld [vmem:[#allocation8 + $0x6e8] sm:$0xff]
        %v1536 = vld [vmem:[#allocation8 + $0x6f0] sm:$0xff]
        %v1537 = vld [vmem:[#allocation8 + $0x6f8] sm:$0xff]
        %v1538 = vld [vmem:[#allocation8 + $0x700] sm:$0xff]
        %v1539 = vld [vmem:[#allocation8 + $0x708] sm:$0xff]
        %v1540 = vld [vmem:[#allocation8 + $0x710] sm:$0xff]
        %v1541 = vld [vmem:[#allocation8 + $0x718] sm:$0xff]
        %v1542 = vld [vmem:[#allocation8 + $0x720] sm:$0xff]
        %v1543 = vld [vmem:[#allocation8 + $0x728] sm:$0xff]
        %v1544 = vld [vmem:[#allocation8 + $0x730] sm:$0xff]
        %v1545 = vld [vmem:[#allocation8 + $0x738] sm:$0xff]
        %v1546 = vld [vmem:[#allocation8 + $0x740] sm:$0xff]
        %v1547 = vld [vmem:[#allocation8 + $0x748] sm:$0xff]
        %v1548 = vld [vmem:[#allocation8 + $0x750] sm:$0xff]
        %v1549 = vld [vmem:[#allocation8 + $0x758] sm:$0xff]
        %v1550 = vld [vmem:[#allocation8 + $0x760] sm:$0xff]
        %v1551 = vld [vmem:[#allocation8 + $0x768] sm:$0xff]
        %v1552 = vld [vmem:[#allocation8 + $0x770] sm:$0xff]
        %v1553 = vld [vmem:[#allocation8 + $0x778] sm:$0xff]
        %v1554 = vld [vmem:[#allocation8 + $0x780] sm:$0xff]
        %v1555 = vld [vmem:[#allocation8 + $0x788] sm:$0xff]
        %v1556 = vld [vmem:[#allocation8 + $0x790] sm:$0xff]
        %v1557 = vld [vmem:[#allocation8 + $0x798] sm:$0xff]
        %v1558 = vld [vmem:[#allocation8 + $0x7a0] sm:$0xff]
        %v1559 = vld [vmem:[#allocation8 + $0x7a8] sm:$0xff]
        %v1560 = vld [vmem:[#allocation8 + $0x7b0] sm:$0xff]
        %v1561 = vld [vmem:[#allocation8 + $0x7b8] sm:$0xff]
        %v1562 = vld [vmem:[#allocation8 + $0x7c0] sm:$0xff]
        %v1563 = vld [vmem:[#allocation8 + $0x7c8] sm:$0xff]
        %v1564 = vld [vmem:[#allocation8 + $0x7d0] sm:$0xff]
        %v1565 = vld [vmem:[#allocation8 + $0x7d8] sm:$0xff]
        %v1566 = vld [vmem:[#allocation8 + $0x7e0] sm:$0xff]
        %v1567 = vld [vmem:[#allocation8 + $0x7e8] sm:$0xff]
        %v1568 = vld [vmem:[#allocation8 + $0x7f0] sm:$0xff]
        %v1569 = vld [vmem:[#allocation8 + $0x7f8] sm:$0xff]
        %v1570 = vld [vmem:[#allocation8 + $0x800] sm:$0xff]
        %v1571 = vld [vmem:[#allocation8 + $0x808] sm:$0xff]
        %v1572 = vld [vmem:[#allocation8 + $0x810] sm:$0xff]
        %v1573 = vld [vmem:[#allocation8 + $0x818] sm:$0xff]
        %v1574 = vld [vmem:[#allocation8 + $0x820] sm:$0xff]
        %v1575 = vld [vmem:[#allocation8 + $0x828] sm:$0xff]
        %v1576 = vld [vmem:[#allocation8 + $0x830] sm:$0xff]
        %v1577 = vld [vmem:[#allocation8 + $0x838] sm:$0xff]
        %v1578 = vld [vmem:[#allocation8 + $0x840] sm:$0xff]
        %v1579 = vld [vmem:[#allocation8 + $0x848] sm:$0xff]
        %v1580 = vld [vmem:[#allocation8 + $0x850] sm:$0xff]
        %v1581 = vld [vmem:[#allocation8 + $0x858] sm:$0xff]
        %v1582 = vld [vmem:[#allocation8 + $0x860] sm:$0xff]
        %v1583 = vld [vmem:[#allocation8 + $0x868] sm:$0xff]
        %v1584 = vld [vmem:[#allocation8 + $0x870] sm:$0xff]
        %v1585 = vld [vmem:[#allocation8 + $0x878] sm:$0xff]
        %v1586 = vld [vmem:[#allocation8 + $0x880] sm:$0xff]
        %v1587 = vld [vmem:[#allocation8 + $0x888] sm:$0xff]
        %v1588 = vld [vmem:[#allocation8 + $0x890] sm:$0xff]
        %v1589 = vld [vmem:[#allocation8 + $0x898] sm:$0xff]
        %v1590 = vld [vmem:[#allocation8 + $0x8a0] sm:$0xff]
        %v1591 = vld [vmem:[#allocation8 + $0x8a8] sm:$0xff]
        %v1592 = vld [vmem:[#allocation8 + $0x8b0] sm:$0xff]
        %v1593 = vld [vmem:[#allocation8 + $0x8b8] sm:$0xff]
        %v1594 = vld [vmem:[#allocation8 + $0x8c0] sm:$0xff]
        %v1595 = vld [vmem:[#allocation8 + $0x8c8] sm:$0xff]
        %v1596 = vld [vmem:[#allocation8 + $0x8d0] sm:$0xff]
        %v1597 = vld [vmem:[#allocation8 + $0x8d8] sm:$0xff]
        %v1598 = vld [vmem:[#allocation8 + $0x8e0] sm:$0xff]
        %v1599 = vld [vmem:[#allocation8 + $0x8e8] sm:$0xff]
        %v1600 = vld [vmem:[#allocation8 + $0x8f0] sm:$0xff]
        %v1601 = vld [vmem:[#allocation8 + $0x8f8] sm:$0xff]
        %v1602 = vld [vmem:[#allocation8 + $0x900] sm:$0xff]
        %v1603 = vld [vmem:[#allocation8 + $0x908] sm:$0xff]
        %v1604 = vld [vmem:[#allocation8 + $0x910] sm:$0xff]
        %v1605 = vld [vmem:[#allocation8 + $0x918] sm:$0xff]
        %v1606 = vld [vmem:[#allocation8 + $0x920] sm:$0xff]
        %v1607 = vld [vmem:[#allocation8 + $0x928] sm:$0xff]
        %v1608 = vld [vmem:[#allocation8 + $0x930] sm:$0xff]
        %v1609 = vld [vmem:[#allocation8 + $0x938] sm:$0xff]
        %v1610 = vld [vmem:[#allocation8 + $0x940] sm:$0xff]
        %v1611 = vld [vmem:[#allocation8 + $0x948] sm:$0xff]
        %v1612 = vld [vmem:[#allocation8 + $0x950] sm:$0xff]
        %v1613 = vld [vmem:[#allocation8 + $0x958] sm:$0xff]
        %v1614 = vld [vmem:[#allocation8 + $0x960] sm:$0xff]
        %v1615 = vld [vmem:[#allocation8 + $0x968] sm:$0xff]
        %v1616 = vld [vmem:[#allocation8 + $0x970] sm:$0xff]
        %v1617 = vld [vmem:[#allocation8 + $0x978] sm:$0xff]
        %v1618 = vld [vmem:[#allocation8 + $0x980] sm:$0xff]
        %v1619 = vld [vmem:[#allocation8 + $0x988] sm:$0xff]
        %v1620 = vld [vmem:[#allocation8 + $0x990] sm:$0xff]
        %v1621 = vld [vmem:[#allocation8 + $0x998] sm:$0xff]
        %v1622 = vld [vmem:[#allocation8 + $0x9a0] sm:$0xff]
        %v1623 = vld [vmem:[#allocation8 + $0x9a8] sm:$0xff]
        %v1624 = vld [vmem:[#allocation8 + $0x9b0] sm:$0xff]
        %v1625 = vld [vmem:[#allocation8 + $0x9b8] sm:$0xff]
        %v1626 = vld [vmem:[#allocation8 + $0x9c0] sm:$0xff]
        %v1627 = vld [vmem:[#allocation8 + $0x9c8] sm:$0xff]
        %v1628 = vld [vmem:[#allocation8 + $0x9d0] sm:$0xff]
        %v1629 = vld [vmem:[#allocation8 + $0x9d8] sm:$0xff]
        %v1630 = vld [vmem:[#allocation8 + $0x9e0] sm:$0xff]
        %v1631 = vld [vmem:[#allocation8 + $0x9e8] sm:$0xff]
        %v1632 = vld [vmem:[#allocation8 + $0x9f0] sm:$0xff]
        %v1633 = vld [vmem:[#allocation8 + $0x9f8] sm:$0xff]
        %v1634 = vld [vmem:[#allocation8 + $0xa00] sm:$0xff]
        %v1635 = vld [vmem:[#allocation8 + $0xa08] sm:$0xff]
        %v1636 = vld [vmem:[#allocation8 + $0xa10] sm:$0xff]
        %v1637 = vld [vmem:[#allocation8 + $0xa18] sm:$0xff]
        %v1638 = vld [vmem:[#allocation8 + $0xa20] sm:$0xff]
        %v1639 = vld [vmem:[#allocation8 + $0xa28] sm:$0xff]
        %v1640 = vld [vmem:[#allocation8 + $0xa30] sm:$0xff]
        %v1641 = vld [vmem:[#allocation8 + $0xa38] sm:$0xff]
        %v1642 = vld [vmem:[#allocation8 + $0xa40] sm:$0xff]
        %v1643 = vld [vmem:[#allocation8 + $0xa48] sm:$0xff]
        %v1644 = vld [vmem:[#allocation8 + $0xa50] sm:$0xff]
        %v1645 = vld [vmem:[#allocation8 + $0xa58] sm:$0xff]
        %v1646 = vld [vmem:[#allocation8 + $0xa60] sm:$0xff]
        %v1647 = vld [vmem:[#allocation8 + $0xa68] sm:$0xff]
        %v1648 = vld [vmem:[#allocation8 + $0xa70] sm:$0xff]
        %v1649 = vld [vmem:[#allocation8 + $0xa78] sm:$0xff]
        %v1650 = vld [vmem:[#allocation8 + $0xa80] sm:$0xff]
        %v1651 = vld [vmem:[#allocation8 + $0xa88] sm:$0xff]
        %v1652 = vld [vmem:[#allocation8 + $0xa90] sm:$0xff]
        %v1653 = vld [vmem:[#allocation8 + $0xa98] sm:$0xff]
        %v1654 = vld [vmem:[#allocation8 + $0xaa0] sm:$0xff]
        %v1655 = vld [vmem:[#allocation8 + $0xaa8] sm:$0xff]
        %v1656 = vld [vmem:[#allocation8 + $0xab0] sm:$0xff]
        %v1657 = vld [vmem:[#allocation8 + $0xab8] sm:$0xff]
        %v1658 = vld [vmem:[#allocation8 + $0xac0] sm:$0xff]
        %v1659 = vld [vmem:[#allocation8 + $0xac8] sm:$0xff]
        %v1660 = vld [vmem:[#allocation8 + $0xad0] sm:$0xff]
        %v1661 = vld [vmem:[#allocation8 + $0xad8] sm:$0xff]
        %v1662 = vld [vmem:[#allocation8 + $0xae0] sm:$0xff]
        %v1663 = vld [vmem:[#allocation8 + $0xae8] sm:$0xff]
        %v1664 = vld [vmem:[#allocation8 + $0xaf0] sm:$0xff]
        %v1665 = vld [vmem:[#allocation8 + $0xaf8] sm:$0xff]
        %v1666 = vld [vmem:[#allocation8 + $0xb00] sm:$0xff]
        %v1667 = vld [vmem:[#allocation8 + $0xb08] sm:$0xff]
        %v1668 = vld [vmem:[#allocation8 + $0xb10] sm:$0xff]
        %v1669 = vld [vmem:[#allocation8 + $0xb18] sm:$0xff]
        %v1670 = vld [vmem:[#allocation8 + $0xb20] sm:$0xff]
        %v1671 = vld [vmem:[#allocation8 + $0xb28] sm:$0xff]
        %v1672 = vld [vmem:[#allocation8 + $0xb30] sm:$0xff]
        %v1673 = vld [vmem:[#allocation8 + $0xb38] sm:$0xff]
        %v1674 = vld [vmem:[#allocation8 + $0xb40] sm:$0xff]
        %v1675 = vld [vmem:[#allocation8 + $0xb48] sm:$0xff]
        %v1676 = vld [vmem:[#allocation8 + $0xb50] sm:$0xff]
        %v1677 = vld [vmem:[#allocation8 + $0xb58] sm:$0xff]
        %v1678 = vld [vmem:[#allocation8 + $0xb60] sm:$0xff]
        %v1679 = vld [vmem:[#allocation8 + $0xb68] sm:$0xff]
        %v1680 = vld [vmem:[#allocation8 + $0xb70] sm:$0xff]
        %v1681 = vld [vmem:[#allocation8 + $0xb78] sm:$0xff]
        %v1682 = vld [vmem:[#allocation8 + $0xb80] sm:$0xff]
        %v1683 = vld [vmem:[#allocation8 + $0xb88] sm:$0xff]
        %v1684 = vld [vmem:[#allocation8 + $0xb90] sm:$0xff]
        %v1685 = vld [vmem:[#allocation8 + $0xb98] sm:$0xff]
        %v1686 = vld [vmem:[#allocation8 + $0xba0] sm:$0xff]
        %v1687 = vld [vmem:[#allocation8 + $0xba8] sm:$0xff]
        %v1688 = vld [vmem:[#allocation8 + $0xbb0] sm:$0xff]
        %v1689 = vld [vmem:[#allocation8 + $0xbb8] sm:$0xff]
        %v1690 = vld [vmem:[#allocation8 + $0xbc0] sm:$0xff]
        %v1691 = vld [vmem:[#allocation8 + $0xbc8] sm:$0xff]
        %v1692 = vld [vmem:[#allocation8 + $0xbd0] sm:$0xff]
        %v1693 = vld [vmem:[#allocation8 + $0xbd8] sm:$0xff]
        %v1694 = vld [vmem:[#allocation8 + $0xbe0] sm:$0xff]
        %v1695 = vld [vmem:[#allocation8 + $0xbe8] sm:$0xff]
        %v1696 = vld [vmem:[#allocation8 + $0xbf0] sm:$0xff]
        %v1697 = vld [vmem:[#allocation8 + $0xbf8] sm:$0xff]
        %1698 = vmatprep.subr.mxu0 %v1495
        %1699 = vmatpush1.msra.mxu0 %v1494
        %1700 = vmatprep.subr.mxu0 %v1483
        %1701 = vmatpush1.msra.mxu0 %v1482
        %1702 = vmatprep.subr.mxu0 %v1471
        %1703 = vmatpush1.msra.mxu0 %v1470
        %1704 = vmatprep.subr.mxu0 %v1459
        %1705 = vmatpush1.msra.mxu0 %v1458
        %1706 = vmatprep.subr.mxu0 %v1447
        %1707 = vmatpush1.msra.mxu0 %v1446
        %1708 = vmatprep.subr.mxu0 %v1435
        %1709 = vmatpush1.msra.mxu0 %v1434
        %1710 = vmatprep.subr.mxu0 %v1423
        %1711 = vmatpush1.msra.mxu0 %v1422
        %1712 = vmatprep.subr.mxu0 %v1411
        %1713 = vmatpush1.msra.mxu0 %v1410
        %1714 = vmatprep.subr.mxu0 %v1399
        %1715 = vmatpush1.msra.mxu0 %v1398
        %1716 = vmatprep.subr.mxu0 %v1387
        %1717 = vmatpush1.msra.mxu0 %v1386
        %1718 = vmatprep.subr.mxu0 %v1375
        %1719 = vmatpush1.msra.mxu0 %v1374
        %1720 = vmatprep.subr.mxu0 %v1363
        %1721 = vmatpush1.msra.mxu0 %v1362
        %1722 = vmatprep.subr.mxu0 %v1351
        %1723 = vmatpush1.msra.mxu0 %v1350
        %1724 = vmatprep.subr.mxu0 %v1339
        %1725 = vmatpush1.msra.mxu0 %v1338
        %1726 = vmatprep.subr.mxu0 %v1327
        %1727 = vmatpush1.msra.mxu0 %v1326
        %1728 = vmatprep.subr.mxu0 %v1315
        %1729 = vmatpush1.msra.mxu0 %v1314
        %1730 = vmatprep.subr.mxu0 %v1687
        %1731 = vmatpush2.msra.mxu0 %v1686
        %1732 = vmatprep.subr.mxu0 %v1675
        %1733 = vmatpush2.msra.mxu0 %v1674
        %1734 = vmatprep.subr.mxu0 %v1663
        %1735 = vmatpush2.msra.mxu0 %v1662
        %1736 = vmatprep.subr.mxu0 %v1651
        %1737 = vmatpush2.msra.mxu0 %v1650
        %1738 = vmatprep.subr.mxu0 %v1639
        %1739 = vmatpush2.msra.mxu0 %v1638
        %1740 = vmatprep.subr.mxu0 %v1627
        %1741 = vmatpush2.msra.mxu0 %v1626
        %1742 = vmatprep.subr.mxu0 %v1615
        %1743 = vmatpush2.msra.mxu0 %v1614
        %1744 = vmatprep.subr.mxu0 %v1603
        %1745 = vmatpush2.msra.mxu0 %v1602
        %1746 = vmatprep.subr.mxu0 %v1591
        %1747 = vmatpush2.msra.mxu0 %v1590
        %1748 = vmatprep.subr.mxu0 %v1579
        %1749 = vmatpush2.msra.mxu0 %v1578
        %1750 = vmatprep.subr.mxu0 %v1567
        %1751 = vmatpush2.msra.mxu0 %v1566
        %1752 = vmatprep.subr.mxu0 %v1555
        %1753 = vmatpush2.msra.mxu0 %v1554
        %1754 = vmatprep.subr.mxu0 %v1543
        %1755 = vmatpush2.msra.mxu0 %v1542
        %1756 = vmatprep.subr.mxu0 %v1531
        %1757 = vmatpush2.msra.mxu0 %v1530
        %1758 = vmatprep.subr.mxu0 %v1519
        %1759 = vmatpush2.msra.mxu0 %v1518
        %1760 = vmatprep.subr.mxu0 %v1507
        %1761 = vmatpush2.msra.mxu0 %v1506
        %1762 = vmatprep.mubr.f32.mxu0 %v1313
        %1763 = vmatmul.mubr.f32.gmra.mxu0 %v1312
        %v1764 = vpop.f32.mrf.mxu0
        %v1765 = vadd.f32 0.0, %v1764
        %v1766 = vpop.f32.mrf.mxu0
        %v1767 = vadd.f32 0.0, %v1766
        %1768 = vdwg.mxu0
        %1769 = vmatprep.subr.mxu0 %v1497
        %1770 = vmatpush1.msra.mxu0 %v1496
        %1771 = vmatprep.subr.mxu0 %v1485
        %1772 = vmatpush1.msra.mxu0 %v1484
        %1773 = vmatprep.subr.mxu0 %v1473
        %1774 = vmatpush1.msra.mxu0 %v1472
        %1775 = vmatprep.subr.mxu0 %v1461
        %1776 = vmatpush1.msra.mxu0 %v1460
        %1777 = vmatprep.subr.mxu0 %v1449
        %1778 = vmatpush1.msra.mxu0 %v1448
        %1779 = vmatprep.subr.mxu0 %v1437
        %1780 = vmatpush1.msra.mxu0 %v1436
        %1781 = vmatprep.subr.mxu0 %v1425
        %1782 = vmatpush1.msra.mxu0 %v1424
        %1783 = vmatprep.subr.mxu0 %v1413
        %1784 = vmatpush1.msra.mxu0 %v1412
        %1785 = vmatprep.subr.mxu0 %v1401
        %1786 = vmatpush1.msra.mxu0 %v1400
        %1787 = vmatprep.subr.mxu0 %v1389
        %1788 = vmatpush1.msra.mxu0 %v1388
        %1789 = vmatprep.subr.mxu0 %v1377
        %1790 = vmatpush1.msra.mxu0 %v1376
        %1791 = vmatprep.subr.mxu0 %v1365
        %1792 = vmatpush1.msra.mxu0 %v1364
        %1793 = vmatprep.subr.mxu0 %v1353
        %1794 = vmatpush1.msra.mxu0 %v1352
        %1795 = vmatprep.subr.mxu0 %v1341
        %1796 = vmatpush1.msra.mxu0 %v1340
        %1797 = vmatprep.subr.mxu0 %v1329
        %1798 = vmatpush1.msra.mxu0 %v1328
        %1799 = vmatprep.subr.mxu0 %v1317
        %1800 = vmatpush1.msra.mxu0 %v1316
        %1801 = vmatprep.subr.mxu0 %v1689
        %1802 = vmatpush2.msra.mxu0 %v1688
        %1803 = vmatprep.subr.mxu0 %v1677
        %1804 = vmatpush2.msra.mxu0 %v1676
        %1805 = vmatprep.subr.mxu0 %v1665
        %1806 = vmatpush2.msra.mxu0 %v1664
        %1807 = vmatprep.subr.mxu0 %v1653
        %1808 = vmatpush2.msra.mxu0 %v1652
        %1809 = vmatprep.subr.mxu0 %v1641
        %1810 = vmatpush2.msra.mxu0 %v1640
        %1811 = vmatprep.subr.mxu0 %v1629
        %1812 = vmatpush2.msra.mxu0 %v1628
        %1813 = vmatprep.subr.mxu0 %v1617
        %1814 = vmatpush2.msra.mxu0 %v1616
        %1815 = vmatprep.subr.mxu0 %v1605
        %1816 = vmatpush2.msra.mxu0 %v1604
        %1817 = vmatprep.subr.mxu0 %v1593
        %1818 = vmatpush2.msra.mxu0 %v1592
        %1819 = vmatprep.subr.mxu0 %v1581
        %1820 = vmatpush2.msra.mxu0 %v1580
        %1821 = vmatprep.subr.mxu0 %v1569
        %1822 = vmatpush2.msra.mxu0 %v1568
        %1823 = vmatprep.subr.mxu0 %v1557
        %1824 = vmatpush2.msra.mxu0 %v1556
        %1825 = vmatprep.subr.mxu0 %v1545
        %1826 = vmatpush2.msra.mxu0 %v1544
        %1827 = vmatprep.subr.mxu0 %v1533
        %1828 = vmatpush2.msra.mxu0 %v1532
        %1829 = vmatprep.subr.mxu0 %v1521
        %1830 = vmatpush2.msra.mxu0 %v1520
        %1831 = vmatprep.subr.mxu0 %v1509
        %1832 = vmatpush2.msra.mxu0 %v1508
        %1833 = vmatprep.mubr.f32.mxu0 %v1313
        %1834 = vmatmul.mubr.f32.gmra.mxu0 %v1312
        %v1835 = vpop.f32.mrf.mxu0
        %v1836 = vadd.f32 0.0, %v1835
        %v1837 = vpop.f32.mrf.mxu0
        %v1838 = vadd.f32 0.0, %v1837
        %1839 = vdwg.mxu0
        %1840 = vmatprep.subr.mxu0 %v1499
        %1841 = vmatpush1.msra.mxu0 %v1498
        %1842 = vmatprep.subr.mxu0 %v1487
        %1843 = vmatpush1.msra.mxu0 %v1486
        %1844 = vmatprep.subr.mxu0 %v1475
        %1845 = vmatpush1.msra.mxu0 %v1474
        %1846 = vmatprep.subr.mxu0 %v1463
        %1847 = vmatpush1.msra.mxu0 %v1462
        %1848 = vmatprep.subr.mxu0 %v1451
        %1849 = vmatpush1.msra.mxu0 %v1450
        %1850 = vmatprep.subr.mxu0 %v1439
        %1851 = vmatpush1.msra.mxu0 %v1438
        %1852 = vmatprep.subr.mxu0 %v1427
        %1853 = vmatpush1.msra.mxu0 %v1426
        %1854 = vmatprep.subr.mxu0 %v1415
        %1855 = vmatpush1.msra.mxu0 %v1414
        %1856 = vmatprep.subr.mxu0 %v1403
        %1857 = vmatpush1.msra.mxu0 %v1402
        %1858 = vmatprep.subr.mxu0 %v1391
        %1859 = vmatpush1.msra.mxu0 %v1390
        %1860 = vmatprep.subr.mxu0 %v1379
        %1861 = vmatpush1.msra.mxu0 %v1378
        %1862 = vmatprep.subr.mxu0 %v1367
        %1863 = vmatpush1.msra.mxu0 %v1366
        %1864 = vmatprep.subr.mxu0 %v1355
        %1865 = vmatpush1.msra.mxu0 %v1354
        %1866 = vmatprep.subr.mxu0 %v1343
        %1867 = vmatpush1.msra.mxu0 %v1342
        %1868 = vmatprep.subr.mxu0 %v1331
        %1869 = vmatpush1.msra.mxu0 %v1330
        %1870 = vmatprep.subr.mxu0 %v1319
        %1871 = vmatpush1.msra.mxu0 %v1318
        %1872 = vmatprep.subr.mxu0 %v1691
        %1873 = vmatpush2.msra.mxu0 %v1690
        %1874 = vmatprep.subr.mxu0 %v1679
        %1875 = vmatpush2.msra.mxu0 %v1678
        %1876 = vmatprep.subr.mxu0 %v1667
        %1877 = vmatpush2.msra.mxu0 %v1666
        %1878 = vmatprep.subr.mxu0 %v1655
        %1879 = vmatpush2.msra.mxu0 %v1654
        %1880 = vmatprep.subr.mxu0 %v1643
        %1881 = vmatpush2.msra.mxu0 %v1642
        %1882 = vmatprep.subr.mxu0 %v1631
        %1883 = vmatpush2.msra.mxu0 %v1630
        %1884 = vmatprep.subr.mxu0 %v1619
        %1885 = vmatpush2.msra.mxu0 %v1618
        %1886 = vmatprep.subr.mxu0 %v1607
        %1887 = vmatpush2.msra.mxu0 %v1606
        %1888 = vmatprep.subr.mxu0 %v1595
        %1889 = vmatpush2.msra.mxu0 %v1594
        %1890 = vmatprep.subr.mxu0 %v1583
        %1891 = vmatpush2.msra.mxu0 %v1582
        %1892 = vmatprep.subr.mxu0 %v1571
        %1893 = vmatpush2.msra.mxu0 %v1570
        %1894 = vmatprep.subr.mxu0 %v1559
        %1895 = vmatpush2.msra.mxu0 %v1558
        %1896 = vmatprep.subr.mxu0 %v1547
        %1897 = vmatpush2.msra.mxu0 %v1546
        %1898 = vmatprep.subr.mxu0 %v1535
        %1899 = vmatpush2.msra.mxu0 %v1534
        %1900 = vmatprep.subr.mxu0 %v1523
        %1901 = vmatpush2.msra.mxu0 %v1522
        %1902 = vmatprep.subr.mxu0 %v1511
        %1903 = vmatpush2.msra.mxu0 %v1510
        %1904 = vmatprep.mubr.f32.mxu0 %v1313
        %1905 = vmatmul.mubr.f32.gmra.mxu0 %v1312
        %v1906 = vpop.f32.mrf.mxu0
        %v1907 = vadd.f32 0.0, %v1906
        %v1908 = vpop.f32.mrf.mxu0
        %v1909 = vadd.f32 0.0, %v1908
        %1910 = vdwg.mxu0
        %1911 = vmatprep.subr.mxu0 %v1501
        %1912 = vmatpush1.msra.mxu0 %v1500
        %1913 = vmatprep.subr.mxu0 %v1489
        %1914 = vmatpush1.msra.mxu0 %v1488
        %1915 = vmatprep.subr.mxu0 %v1477
        %1916 = vmatpush1.msra.mxu0 %v1476
        %1917 = vmatprep.subr.mxu0 %v1465
        %1918 = vmatpush1.msra.mxu0 %v1464
        %1919 = vmatprep.subr.mxu0 %v1453
        %1920 = vmatpush1.msra.mxu0 %v1452
        %1921 = vmatprep.subr.mxu0 %v1441
        %1922 = vmatpush1.msra.mxu0 %v1440
        %1923 = vmatprep.subr.mxu0 %v1429
        %1924 = vmatpush1.msra.mxu0 %v1428
        %1925 = vmatprep.subr.mxu0 %v1417
        %1926 = vmatpush1.msra.mxu0 %v1416
        %1927 = vmatprep.subr.mxu0 %v1405
        %1928 = vmatpush1.msra.mxu0 %v1404
        %1929 = vmatprep.subr.mxu0 %v1393
        %1930 = vmatpush1.msra.mxu0 %v1392
        %1931 = vmatprep.subr.mxu0 %v1381
        %1932 = vmatpush1.msra.mxu0 %v1380
        %1933 = vmatprep.subr.mxu0 %v1369
        %1934 = vmatpush1.msra.mxu0 %v1368
        %1935 = vmatprep.subr.mxu0 %v1357
        %1936 = vmatpush1.msra.mxu0 %v1356
        %1937 = vmatprep.subr.mxu0 %v1345
        %1938 = vmatpush1.msra.mxu0 %v1344
        %1939 = vmatprep.subr.mxu0 %v1333
        %1940 = vmatpush1.msra.mxu0 %v1332
        %1941 = vmatprep.subr.mxu0 %v1321
        %1942 = vmatpush1.msra.mxu0 %v1320
        %1943 = vmatprep.subr.mxu0 %v1693
        %1944 = vmatpush2.msra.mxu0 %v1692
        %1945 = vmatprep.subr.mxu0 %v1681
        %1946 = vmatpush2.msra.mxu0 %v1680
        %1947 = vmatprep.subr.mxu0 %v1669
        %1948 = vmatpush2.msra.mxu0 %v1668
        %1949 = vmatprep.subr.mxu0 %v1657
        %1950 = vmatpush2.msra.mxu0 %v1656
        %1951 = vmatprep.subr.mxu0 %v1645
        %1952 = vmatpush2.msra.mxu0 %v1644
        %1953 = vmatprep.subr.mxu0 %v1633
        %1954 = vmatpush2.msra.mxu0 %v1632
        %1955 = vmatprep.subr.mxu0 %v1621
        %1956 = vmatpush2.msra.mxu0 %v1620
        %1957 = vmatprep.subr.mxu0 %v1609
        %1958 = vmatpush2.msra.mxu0 %v1608
        %1959 = vmatprep.subr.mxu0 %v1597
        %1960 = vmatpush2.msra.mxu0 %v1596
        %1961 = vmatprep.subr.mxu0 %v1585
        %1962 = vmatpush2.msra.mxu0 %v1584
        %1963 = vmatprep.subr.mxu0 %v1573
        %1964 = vmatpush2.msra.mxu0 %v1572
        %1965 = vmatprep.subr.mxu0 %v1561
        %1966 = vmatpush2.msra.mxu0 %v1560
        %1967 = vmatprep.subr.mxu0 %v1549
        %1968 = vmatpush2.msra.mxu0 %v1548
        %1969 = vmatprep.subr.mxu0 %v1537
        %1970 = vmatpush2.msra.mxu0 %v1536
        %1971 = vmatprep.subr.mxu0 %v1525
        %1972 = vmatpush2.msra.mxu0 %v1524
        %1973 = vmatprep.subr.mxu0 %v1513
        %1974 = vmatpush2.msra.mxu0 %v1512
        %1975 = vmatprep.mubr.f32.mxu0 %v1313
        %1976 = vmatmul.mubr.f32.gmra.mxu0 %v1312
        %v1977 = vpop.f32.mrf.mxu0
        %v1978 = vadd.f32 0.0, %v1977
        %v1979 = vpop.f32.mrf.mxu0
        %v1980 = vadd.f32 0.0, %v1979
        %1981 = vdwg.mxu0
        %1982 = vmatprep.subr.mxu0 %v1503
        %1983 = vmatpush1.msra.mxu0 %v1502
        %1984 = vmatprep.subr.mxu0 %v1491
        %1985 = vmatpush1.msra.mxu0 %v1490
        %1986 = vmatprep.subr.mxu0 %v1479
        %1987 = vmatpush1.msra.mxu0 %v1478
        %1988 = vmatprep.subr.mxu0 %v1467
        %1989 = vmatpush1.msra.mxu0 %v1466
        %1990 = vmatprep.subr.mxu0 %v1455
        %1991 = vmatpush1.msra.mxu0 %v1454
        %1992 = vmatprep.subr.mxu0 %v1443
        %1993 = vmatpush1.msra.mxu0 %v1442
        %1994 = vmatprep.subr.mxu0 %v1431
        %1995 = vmatpush1.msra.mxu0 %v1430
        %1996 = vmatprep.subr.mxu0 %v1419
        %1997 = vmatpush1.msra.mxu0 %v1418
        %1998 = vmatprep.subr.mxu0 %v1407
        %1999 = vmatpush1.msra.mxu0 %v1406
        %2000 = vmatprep.subr.mxu0 %v1395
        %2001 = vmatpush1.msra.mxu0 %v1394
        %2002 = vmatprep.subr.mxu0 %v1383
        %2003 = vmatpush1.msra.mxu0 %v1382
        %2004 = vmatprep.subr.mxu0 %v1371
        %2005 = vmatpush1.msra.mxu0 %v1370
        %2006 = vmatprep.subr.mxu0 %v1359
        %2007 = vmatpush1.msra.mxu0 %v1358
        %2008 = vmatprep.subr.mxu0 %v1347
        %2009 = vmatpush1.msra.mxu0 %v1346
        %2010 = vmatprep.subr.mxu0 %v1335
        %2011 = vmatpush1.msra.mxu0 %v1334
        %2012 = vmatprep.subr.mxu0 %v1323
        %2013 = vmatpush1.msra.mxu0 %v1322
        %2014 = vmatprep.subr.mxu0 %v1695
        %2015 = vmatpush2.msra.mxu0 %v1694
        %2016 = vmatprep.subr.mxu0 %v1683
        %2017 = vmatpush2.msra.mxu0 %v1682
        %2018 = vmatprep.subr.mxu0 %v1671
        %2019 = vmatpush2.msra.mxu0 %v1670
        %2020 = vmatprep.subr.mxu0 %v1659
        %2021 = vmatpush2.msra.mxu0 %v1658
        %2022 = vmatprep.subr.mxu0 %v1647
        %2023 = vmatpush2.msra.mxu0 %v1646
        %2024 = vmatprep.subr.mxu0 %v1635
        %2025 = vmatpush2.msra.mxu0 %v1634
        %2026 = vmatprep.subr.mxu0 %v1623
        %2027 = vmatpush2.msra.mxu0 %v1622
        %2028 = vmatprep.subr.mxu0 %v1611
        %2029 = vmatpush2.msra.mxu0 %v1610
        %2030 = vmatprep.subr.mxu0 %v1599
        %2031 = vmatpush2.msra.mxu0 %v1598
        %2032 = vmatprep.subr.mxu0 %v1587
        %2033 = vmatpush2.msra.mxu0 %v1586
        %2034 = vmatprep.subr.mxu0 %v1575
        %2035 = vmatpush2.msra.mxu0 %v1574
        %2036 = vmatprep.subr.mxu0 %v1563
        %2037 = vmatpush2.msra.mxu0 %v1562
        %2038 = vmatprep.subr.mxu0 %v1551
        %2039 = vmatpush2.msra.mxu0 %v1550
        %2040 = vmatprep.subr.mxu0 %v1539
        %2041 = vmatpush2.msra.mxu0 %v1538
        %2042 = vmatprep.subr.mxu0 %v1527
        %2043 = vmatpush2.msra.mxu0 %v1526
        %2044 = vmatprep.subr.mxu0 %v1515
        %2045 = vmatpush2.msra.mxu0 %v1514
        %2046 = vmatprep.mubr.f32.mxu0 %v1313
        %2047 = vmatmul.mubr.f32.gmra.mxu0 %v1312
        %v2048 = vpop.f32.mrf.mxu0
        %v2049 = vadd.f32 0.0, %v2048
        %v2050 = vpop.f32.mrf.mxu0
        %v2051 = vadd.f32 0.0, %v2050
        %2052 = vdwg.mxu0
        %2053 = vmatprep.subr.mxu0 %v1505
        %2054 = vmatpush1.msra.mxu0 %v1504
        %2055 = vmatprep.subr.mxu0 %v1493
        %2056 = vmatpush1.msra.mxu0 %v1492
        %2057 = vmatprep.subr.mxu0 %v1481
        %2058 = vmatpush1.msra.mxu0 %v1480
        %2059 = vmatprep.subr.mxu0 %v1469
        %2060 = vmatpush1.msra.mxu0 %v1468
        %2061 = vmatprep.subr.mxu0 %v1457
        %2062 = vmatpush1.msra.mxu0 %v1456
        %2063 = vmatprep.subr.mxu0 %v1445
        %2064 = vmatpush1.msra.mxu0 %v1444
        %2065 = vmatprep.subr.mxu0 %v1433
        %2066 = vmatpush1.msra.mxu0 %v1432
        %2067 = vmatprep.subr.mxu0 %v1421
        %2068 = vmatpush1.msra.mxu0 %v1420
        %2069 = vmatprep.subr.mxu0 %v1409
        %2070 = vmatpush1.msra.mxu0 %v1408
        %2071 = vmatprep.subr.mxu0 %v1397
        %2072 = vmatpush1.msra.mxu0 %v1396
        %2073 = vmatprep.subr.mxu0 %v1385
        %2074 = vmatpush1.msra.mxu0 %v1384
        %2075 = vmatprep.subr.mxu0 %v1373
        %2076 = vmatpush1.msra.mxu0 %v1372
        %2077 = vmatprep.subr.mxu0 %v1361
        %2078 = vmatpush1.msra.mxu0 %v1360
        %2079 = vmatprep.subr.mxu0 %v1349
        %2080 = vmatpush1.msra.mxu0 %v1348
        %2081 = vmatprep.subr.mxu0 %v1337
        %2082 = vmatpush1.msra.mxu0 %v1336
        %2083 = vmatprep.subr.mxu0 %v1325
        %2084 = vmatpush1.msra.mxu0 %v1324
        %2085 = vmatprep.subr.mxu0 %v1697
        %2086 = vmatpush2.msra.mxu0 %v1696
        %2087 = vmatprep.subr.mxu0 %v1685
        %2088 = vmatpush2.msra.mxu0 %v1684
        %2089 = vmatprep.subr.mxu0 %v1673
        %2090 = vmatpush2.msra.mxu0 %v1672
        %2091 = vmatprep.subr.mxu0 %v1661
        %2092 = vmatpush2.msra.mxu0 %v1660
        %2093 = vmatprep.subr.mxu0 %v1649
        %2094 = vmatpush2.msra.mxu0 %v1648
        %2095 = vmatprep.subr.mxu0 %v1637
        %2096 = vmatpush2.msra.mxu0 %v1636
        %2097 = vmatprep.subr.mxu0 %v1625
        %2098 = vmatpush2.msra.mxu0 %v1624
        %2099 = vmatprep.subr.mxu0 %v1613
        %2100 = vmatpush2.msra.mxu0 %v1612
        %2101 = vmatprep.subr.mxu0 %v1601
        %2102 = vmatpush2.msra.mxu0 %v1600
        %2103 = vmatprep.subr.mxu0 %v1589
        %2104 = vmatpush2.msra.mxu0 %v1588
        %2105 = vmatprep.subr.mxu0 %v1577
        %2106 = vmatpush2.msra.mxu0 %v1576
        %2107 = vmatprep.subr.mxu0 %v1565
        %2108 = vmatpush2.msra.mxu0 %v1564
        %2109 = vmatprep.subr.mxu0 %v1553
        %2110 = vmatpush2.msra.mxu0 %v1552
        %2111 = vmatprep.subr.mxu0 %v1541
        %2112 = vmatpush2.msra.mxu0 %v1540
        %2113 = vmatprep.subr.mxu0 %v1529
        %2114 = vmatpush2.msra.mxu0 %v1528
        %2115 = vmatprep.subr.mxu0 %v1517
        %2116 = vmatpush2.msra.mxu0 %v1516
        %2117 = vmatprep.mubr.f32.mxu0 %v1313
        %2118 = vmatmul.mubr.f32.gmra.mxu0 %v1312
        %v2119 = vpop.f32.mrf.mxu0
        %v2120 = vadd.f32 0.0, %v2119
        %v2121 = vpop.f32.mrf.mxu0
        %v2122 = vadd.f32 0.0, %v2121
        %2123 = vdwg.mxu0
        %v2124 = vsub.f32 0.0, %v1765
        %v2125 = vsub.f32 0.0, %v1767
        %v2126 = vsub.f32 0.0, %v1836
        %v2127 = vsub.f32 0.0, %v1838
        %v2128 = vsub.f32 0.0, %v1907
        %v2129 = vsub.f32 0.0, %v1909
        %v2130 = vmul.f32 %v2124, 1.442695
        %v2131 = vpow.pop %v2130
        %v2132 = vmul.f32 %v2125, 1.442695
        %v2133 = vpow.pop %v2132
        %v2134 = vmul.f32 %v2126, 1.442695
        %v2135 = vpow.pop %v2134
        %v2136 = vmul.f32 %v2127, 1.442695
        %v2137 = vpow.pop %v2136
        %v2138 = vmul.f32 %v2128, 1.442695
        %v2139 = vpow.pop %v2138
        %v2140 = vmul.f32 %v2129, 1.442695
        %v2141 = vpow.pop %v2140
        %v2142 = vadd.f32 %v2131, 1.0
        %v2143 = vadd.f32 %v2133, 1.0
        %v2144 = vadd.f32 %v2135, 1.0
        %v2145 = vadd.f32 %v2137, 1.0
        %v2146 = vadd.f32 %v2139, 1.0
        %v2147 = vadd.f32 %v2141, 1.0
        %v2148 = vrcp.pop %v2142
        %v2149 = vrcp.pop %v2143
        %v2150 = vrcp.pop %v2144
        %v2151 = vrcp.pop %v2145
        %v2152 = vrcp.pop %v2146
        %v2153 = vrcp.pop %v2147
        %v2154 = vmul.f32 %v1765, %v2148
        %v2155 = vmul.f32 %v1767, %v2149
        %v2156 = vmul.f32 %v1836, %v2150
        %v2157 = vmul.f32 %v1838, %v2151
        %v2158 = vmul.f32 %v1907, %v2152
        %v2159 = vmul.f32 %v1909, %v2153
        %v2160 = vmul.f32 %v2154, %v1978
        %v2161 = vmul.f32 %v2155, %v1980
        %v2162 = vmul.f32 %v2156, %v2049
        %v2163 = vmul.f32 %v2157, %v2051
        %v2164 = vmul.f32 %v2158, %v2120
        %v2165 = vmul.f32 %v2159, %v2122
        %v2166 = vld [vmem:[#allocation10] sm:$0xff]
        %v2167 = vld [vmem:[#allocation10 + $0x8] sm:$0xff]
        %v2168 = vld [vmem:[#allocation10 + $0x10] sm:$0xff]
        %v2169 = vld [vmem:[#allocation10 + $0x18] sm:$0xff]
        %v2170 = vld [vmem:[#allocation10 + $0x20] sm:$0xff]
        %v2171 = vld [vmem:[#allocation10 + $0x28] sm:$0xff]
        %v2172 = vld [vmem:[#allocation10 + $0x30] sm:$0xff]
        %v2173 = vld [vmem:[#allocation10 + $0x38] sm:$0xff]
        %v2174 = vld [vmem:[#allocation10 + $0x40] sm:$0xff]
        %v2175 = vld [vmem:[#allocation10 + $0x48] sm:$0xff]
        %v2176 = vld [vmem:[#allocation10 + $0x50] sm:$0xff]
        %v2177 = vld [vmem:[#allocation10 + $0x58] sm:$0xff]
        %v2178 = vld [vmem:[#allocation10 + $0x60] sm:$0xff]
        %v2179 = vld [vmem:[#allocation10 + $0x68] sm:$0xff]
        %v2180 = vld [vmem:[#allocation10 + $0x70] sm:$0xff]
        %v2181 = vld [vmem:[#allocation10 + $0x78] sm:$0xff]
        %v2182 = vld [vmem:[#allocation10 + $0x80] sm:$0xff]
        %v2183 = vld [vmem:[#allocation10 + $0x88] sm:$0xff]
        %v2184 = vld [vmem:[#allocation10 + $0x90] sm:$0xff]
        %v2185 = vld [vmem:[#allocation10 + $0x98] sm:$0xff]
        %v2186 = vld [vmem:[#allocation10 + $0xa0] sm:$0xff]
        %v2187 = vld [vmem:[#allocation10 + $0xa8] sm:$0xff]
        %v2188 = vld [vmem:[#allocation10 + $0xb0] sm:$0xff]
        %v2189 = vld [vmem:[#allocation10 + $0xb8] sm:$0xff]
        %v2190 = vld [vmem:[#allocation10 + $0xc0] sm:$0xff]
        %v2191 = vld [vmem:[#allocation10 + $0xc8] sm:$0xff]
        %v2192 = vld [vmem:[#allocation10 + $0xd0] sm:$0xff]
        %v2193 = vld [vmem:[#allocation10 + $0xd8] sm:$0xff]
        %v2194 = vld [vmem:[#allocation10 + $0xe0] sm:$0xff]
        %v2195 = vld [vmem:[#allocation10 + $0xe8] sm:$0xff]
        %v2196 = vld [vmem:[#allocation10 + $0xf0] sm:$0xff]
        %v2197 = vld [vmem:[#allocation10 + $0xf8] sm:$0xff]
        %v2198 = vld [vmem:[#allocation10 + $0x100] sm:$0xff]
        %v2199 = vld [vmem:[#allocation10 + $0x108] sm:$0xff]
        %v2200 = vld [vmem:[#allocation10 + $0x110] sm:$0xff]
        %v2201 = vld [vmem:[#allocation10 + $0x118] sm:$0xff]
        %v2202 = vld [vmem:[#allocation10 + $0x120] sm:$0xff]
        %v2203 = vld [vmem:[#allocation10 + $0x128] sm:$0xff]
        %v2204 = vld [vmem:[#allocation10 + $0x130] sm:$0xff]
        %v2205 = vld [vmem:[#allocation10 + $0x138] sm:$0xff]
        %v2206 = vld [vmem:[#allocation10 + $0x140] sm:$0xff]
        %v2207 = vld [vmem:[#allocation10 + $0x148] sm:$0xff]
        %v2208 = vld [vmem:[#allocation10 + $0x150] sm:$0xff]
        %v2209 = vld [vmem:[#allocation10 + $0x158] sm:$0xff]
        %v2210 = vld [vmem:[#allocation10 + $0x160] sm:$0xff]
        %v2211 = vld [vmem:[#allocation10 + $0x168] sm:$0xff]
        %v2212 = vld [vmem:[#allocation10 + $0x170] sm:$0xff]
        %v2213 = vld [vmem:[#allocation10 + $0x178] sm:$0xff]
        %v2214 = vld [vmem:[#allocation10 + $0x180] sm:$0xff]
        %v2215 = vld [vmem:[#allocation10 + $0x188] sm:$0xff]
        %v2216 = vld [vmem:[#allocation10 + $0x190] sm:$0xff]
        %v2217 = vld [vmem:[#allocation10 + $0x198] sm:$0xff]
        %v2218 = vld [vmem:[#allocation10 + $0x1a0] sm:$0xff]
        %v2219 = vld [vmem:[#allocation10 + $0x1a8] sm:$0xff]
        %v2220 = vld [vmem:[#allocation10 + $0x1b0] sm:$0xff]
        %v2221 = vld [vmem:[#allocation10 + $0x1b8] sm:$0xff]
        %v2222 = vld [vmem:[#allocation10 + $0x1c0] sm:$0xff]
        %v2223 = vld [vmem:[#allocation10 + $0x1c8] sm:$0xff]
        %v2224 = vld [vmem:[#allocation10 + $0x1d0] sm:$0xff]
        %v2225 = vld [vmem:[#allocation10 + $0x1d8] sm:$0xff]
        %v2226 = vld [vmem:[#allocation10 + $0x1e0] sm:$0xff]
        %v2227 = vld [vmem:[#allocation10 + $0x1e8] sm:$0xff]
        %v2228 = vld [vmem:[#allocation10 + $0x1f0] sm:$0xff]
        %v2229 = vld [vmem:[#allocation10 + $0x1f8] sm:$0xff]
        %v2230 = vld [vmem:[#allocation10 + $0x200] sm:$0xff]
        %v2231 = vld [vmem:[#allocation10 + $0x208] sm:$0xff]
        %v2232 = vld [vmem:[#allocation10 + $0x210] sm:$0xff]
        %v2233 = vld [vmem:[#allocation10 + $0x218] sm:$0xff]
        %v2234 = vld [vmem:[#allocation10 + $0x220] sm:$0xff]
        %v2235 = vld [vmem:[#allocation10 + $0x228] sm:$0xff]
        %v2236 = vld [vmem:[#allocation10 + $0x230] sm:$0xff]
        %v2237 = vld [vmem:[#allocation10 + $0x238] sm:$0xff]
        %v2238 = vld [vmem:[#allocation10 + $0x240] sm:$0xff]
        %v2239 = vld [vmem:[#allocation10 + $0x248] sm:$0xff]
        %v2240 = vld [vmem:[#allocation10 + $0x250] sm:$0xff]
        %v2241 = vld [vmem:[#allocation10 + $0x258] sm:$0xff]
        %v2242 = vld [vmem:[#allocation10 + $0x260] sm:$0xff]
        %v2243 = vld [vmem:[#allocation10 + $0x268] sm:$0xff]
        %v2244 = vld [vmem:[#allocation10 + $0x270] sm:$0xff]
        %v2245 = vld [vmem:[#allocation10 + $0x278] sm:$0xff]
        %v2246 = vld [vmem:[#allocation10 + $0x280] sm:$0xff]
        %v2247 = vld [vmem:[#allocation10 + $0x288] sm:$0xff]
        %v2248 = vld [vmem:[#allocation10 + $0x290] sm:$0xff]
        %v2249 = vld [vmem:[#allocation10 + $0x298] sm:$0xff]
        %v2250 = vld [vmem:[#allocation10 + $0x2a0] sm:$0xff]
        %v2251 = vld [vmem:[#allocation10 + $0x2a8] sm:$0xff]
        %v2252 = vld [vmem:[#allocation10 + $0x2b0] sm:$0xff]
        %v2253 = vld [vmem:[#allocation10 + $0x2b8] sm:$0xff]
        %v2254 = vld [vmem:[#allocation10 + $0x2c0] sm:$0xff]
        %v2255 = vld [vmem:[#allocation10 + $0x2c8] sm:$0xff]
        %v2256 = vld [vmem:[#allocation10 + $0x2d0] sm:$0xff]
        %v2257 = vld [vmem:[#allocation10 + $0x2d8] sm:$0xff]
        %v2258 = vld [vmem:[#allocation10 + $0x2e0] sm:$0xff]
        %v2259 = vld [vmem:[#allocation10 + $0x2e8] sm:$0xff]
        %v2260 = vld [vmem:[#allocation10 + $0x2f0] sm:$0xff]
        %v2261 = vld [vmem:[#allocation10 + $0x2f8] sm:$0xff]
        %v2262 = vld [vmem:[#allocation10 + $0x300] sm:$0xff]
        %v2263 = vld [vmem:[#allocation10 + $0x308] sm:$0xff]
        %v2264 = vld [vmem:[#allocation10 + $0x310] sm:$0xff]
        %v2265 = vld [vmem:[#allocation10 + $0x318] sm:$0xff]
        %v2266 = vld [vmem:[#allocation10 + $0x320] sm:$0xff]
        %v2267 = vld [vmem:[#allocation10 + $0x328] sm:$0xff]
        %v2268 = vld [vmem:[#allocation10 + $0x330] sm:$0xff]
        %v2269 = vld [vmem:[#allocation10 + $0x338] sm:$0xff]
        %v2270 = vld [vmem:[#allocation10 + $0x340] sm:$0xff]
        %v2271 = vld [vmem:[#allocation10 + $0x348] sm:$0xff]
        %v2272 = vld [vmem:[#allocation10 + $0x350] sm:$0xff]
        %v2273 = vld [vmem:[#allocation10 + $0x358] sm:$0xff]
        %v2274 = vld [vmem:[#allocation10 + $0x360] sm:$0xff]
        %v2275 = vld [vmem:[#allocation10 + $0x368] sm:$0xff]
        %v2276 = vld [vmem:[#allocation10 + $0x370] sm:$0xff]
        %v2277 = vld [vmem:[#allocation10 + $0x378] sm:$0xff]
        %v2278 = vld [vmem:[#allocation10 + $0x380] sm:$0xff]
        %v2279 = vld [vmem:[#allocation10 + $0x388] sm:$0xff]
        %v2280 = vld [vmem:[#allocation10 + $0x390] sm:$0xff]
        %v2281 = vld [vmem:[#allocation10 + $0x398] sm:$0xff]
        %v2282 = vld [vmem:[#allocation10 + $0x3a0] sm:$0xff]
        %v2283 = vld [vmem:[#allocation10 + $0x3a8] sm:$0xff]
        %v2284 = vld [vmem:[#allocation10 + $0x3b0] sm:$0xff]
        %v2285 = vld [vmem:[#allocation10 + $0x3b8] sm:$0xff]
        %v2286 = vld [vmem:[#allocation10 + $0x3c0] sm:$0xff]
        %v2287 = vld [vmem:[#allocation10 + $0x3c8] sm:$0xff]
        %v2288 = vld [vmem:[#allocation10 + $0x3d0] sm:$0xff]
        %v2289 = vld [vmem:[#allocation10 + $0x3d8] sm:$0xff]
        %v2290 = vld [vmem:[#allocation10 + $0x3e0] sm:$0xff]
        %v2291 = vld [vmem:[#allocation10 + $0x3e8] sm:$0xff]
        %v2292 = vld [vmem:[#allocation10 + $0x3f0] sm:$0xff]
        %v2293 = vld [vmem:[#allocation10 + $0x3f8] sm:$0xff]
        %v2294 = vld [vmem:[#allocation10 + $0x400] sm:$0xff]
        %v2295 = vld [vmem:[#allocation10 + $0x408] sm:$0xff]
        %v2296 = vld [vmem:[#allocation10 + $0x410] sm:$0xff]
        %v2297 = vld [vmem:[#allocation10 + $0x418] sm:$0xff]
        %v2298 = vld [vmem:[#allocation10 + $0x420] sm:$0xff]
        %v2299 = vld [vmem:[#allocation10 + $0x428] sm:$0xff]
        %v2300 = vld [vmem:[#allocation10 + $0x430] sm:$0xff]
        %v2301 = vld [vmem:[#allocation10 + $0x438] sm:$0xff]
        %v2302 = vld [vmem:[#allocation10 + $0x440] sm:$0xff]
        %v2303 = vld [vmem:[#allocation10 + $0x448] sm:$0xff]
        %v2304 = vld [vmem:[#allocation10 + $0x450] sm:$0xff]
        %v2305 = vld [vmem:[#allocation10 + $0x458] sm:$0xff]
        %v2306 = vld [vmem:[#allocation10 + $0x460] sm:$0xff]
        %v2307 = vld [vmem:[#allocation10 + $0x468] sm:$0xff]
        %v2308 = vld [vmem:[#allocation10 + $0x470] sm:$0xff]
        %v2309 = vld [vmem:[#allocation10 + $0x478] sm:$0xff]
        %v2310 = vld [vmem:[#allocation10 + $0x480] sm:$0xff]
        %v2311 = vld [vmem:[#allocation10 + $0x488] sm:$0xff]
        %v2312 = vld [vmem:[#allocation10 + $0x490] sm:$0xff]
        %v2313 = vld [vmem:[#allocation10 + $0x498] sm:$0xff]
        %v2314 = vld [vmem:[#allocation10 + $0x4a0] sm:$0xff]
        %v2315 = vld [vmem:[#allocation10 + $0x4a8] sm:$0xff]
        %v2316 = vld [vmem:[#allocation10 + $0x4b0] sm:$0xff]
        %v2317 = vld [vmem:[#allocation10 + $0x4b8] sm:$0xff]
        %v2318 = vld [vmem:[#allocation10 + $0x4c0] sm:$0xff]
        %v2319 = vld [vmem:[#allocation10 + $0x4c8] sm:$0xff]
        %v2320 = vld [vmem:[#allocation10 + $0x4d0] sm:$0xff]
        %v2321 = vld [vmem:[#allocation10 + $0x4d8] sm:$0xff]
        %v2322 = vld [vmem:[#allocation10 + $0x4e0] sm:$0xff]
        %v2323 = vld [vmem:[#allocation10 + $0x4e8] sm:$0xff]
        %v2324 = vld [vmem:[#allocation10 + $0x4f0] sm:$0xff]
        %v2325 = vld [vmem:[#allocation10 + $0x4f8] sm:$0xff]
        %v2326 = vld [vmem:[#allocation10 + $0x500] sm:$0xff]
        %v2327 = vld [vmem:[#allocation10 + $0x508] sm:$0xff]
        %v2328 = vld [vmem:[#allocation10 + $0x510] sm:$0xff]
        %v2329 = vld [vmem:[#allocation10 + $0x518] sm:$0xff]
        %v2330 = vld [vmem:[#allocation10 + $0x520] sm:$0xff]
        %v2331 = vld [vmem:[#allocation10 + $0x528] sm:$0xff]
        %v2332 = vld [vmem:[#allocation10 + $0x530] sm:$0xff]
        %v2333 = vld [vmem:[#allocation10 + $0x538] sm:$0xff]
        %v2334 = vld [vmem:[#allocation10 + $0x540] sm:$0xff]
        %v2335 = vld [vmem:[#allocation10 + $0x548] sm:$0xff]
        %v2336 = vld [vmem:[#allocation10 + $0x550] sm:$0xff]
        %v2337 = vld [vmem:[#allocation10 + $0x558] sm:$0xff]
        %v2338 = vld [vmem:[#allocation10 + $0x560] sm:$0xff]
        %v2339 = vld [vmem:[#allocation10 + $0x568] sm:$0xff]
        %v2340 = vld [vmem:[#allocation10 + $0x570] sm:$0xff]
        %v2341 = vld [vmem:[#allocation10 + $0x578] sm:$0xff]
        %v2342 = vld [vmem:[#allocation10 + $0x580] sm:$0xff]
        %v2343 = vld [vmem:[#allocation10 + $0x588] sm:$0xff]
        %v2344 = vld [vmem:[#allocation10 + $0x590] sm:$0xff]
        %v2345 = vld [vmem:[#allocation10 + $0x598] sm:$0xff]
        %v2346 = vld [vmem:[#allocation10 + $0x5a0] sm:$0xff]
        %v2347 = vld [vmem:[#allocation10 + $0x5a8] sm:$0xff]
        %v2348 = vld [vmem:[#allocation10 + $0x5b0] sm:$0xff]
        %v2349 = vld [vmem:[#allocation10 + $0x5b8] sm:$0xff]
        %v2350 = vld [vmem:[#allocation10 + $0x5c0] sm:$0xff]
        %v2351 = vld [vmem:[#allocation10 + $0x5c8] sm:$0xff]
        %v2352 = vld [vmem:[#allocation10 + $0x5d0] sm:$0xff]
        %v2353 = vld [vmem:[#allocation10 + $0x5d8] sm:$0xff]
        %v2354 = vld [vmem:[#allocation10 + $0x5e0] sm:$0xff]
        %v2355 = vld [vmem:[#allocation10 + $0x5e8] sm:$0xff]
        %v2356 = vld [vmem:[#allocation10 + $0x5f0] sm:$0xff]
        %v2357 = vld [vmem:[#allocation10 + $0x5f8] sm:$0xff]
        %2358 = vmatprep.subr.mxu0 %v2197
        %2359 = vmatpush1.msra.mxu0 %v2196
        %2360 = vmatprep.subr.mxu0 %v2195
        %2361 = vmatpush1.msra.mxu0 %v2194
        %2362 = vmatprep.subr.mxu0 %v2193
        %2363 = vmatpush1.msra.mxu0 %v2192
        %2364 = vmatprep.subr.mxu0 %v2191
        %2365 = vmatpush1.msra.mxu0 %v2190
        %2366 = vmatprep.subr.mxu0 %v2189
        %2367 = vmatpush1.msra.mxu0 %v2188
        %2368 = vmatprep.subr.mxu0 %v2187
        %2369 = vmatpush1.msra.mxu0 %v2186
        %2370 = vmatprep.subr.mxu0 %v2185
        %2371 = vmatpush1.msra.mxu0 %v2184
        %2372 = vmatprep.subr.mxu0 %v2183
        %2373 = vmatpush1.msra.mxu0 %v2182
        %2374 = vmatprep.subr.mxu0 %v2181
        %2375 = vmatpush1.msra.mxu0 %v2180
        %2376 = vmatprep.subr.mxu0 %v2179
        %2377 = vmatpush1.msra.mxu0 %v2178
        %2378 = vmatprep.subr.mxu0 %v2177
        %2379 = vmatpush1.msra.mxu0 %v2176
        %2380 = vmatprep.subr.mxu0 %v2175
        %2381 = vmatpush1.msra.mxu0 %v2174
        %2382 = vmatprep.subr.mxu0 %v2173
        %2383 = vmatpush1.msra.mxu0 %v2172
        %2384 = vmatprep.subr.mxu0 %v2171
        %2385 = vmatpush1.msra.mxu0 %v2170
        %2386 = vmatprep.subr.mxu0 %v2169
        %2387 = vmatpush1.msra.mxu0 %v2168
        %2388 = vmatprep.subr.mxu0 %v2167
        %2389 = vmatpush1.msra.mxu0 %v2166
        %2390 = vmatprep.subr.mxu0 %v2229
        %2391 = vmatpush2.msra.mxu0 %v2228
        %2392 = vmatprep.subr.mxu0 %v2227
        %2393 = vmatpush2.msra.mxu0 %v2226
        %2394 = vmatprep.subr.mxu0 %v2225
        %2395 = vmatpush2.msra.mxu0 %v2224
        %2396 = vmatprep.subr.mxu0 %v2223
        %2397 = vmatpush2.msra.mxu0 %v2222
        %2398 = vmatprep.subr.mxu0 %v2221
        %2399 = vmatpush2.msra.mxu0 %v2220
        %2400 = vmatprep.subr.mxu0 %v2219
        %2401 = vmatpush2.msra.mxu0 %v2218
        %2402 = vmatprep.subr.mxu0 %v2217
        %2403 = vmatpush2.msra.mxu0 %v2216
        %2404 = vmatprep.subr.mxu0 %v2215
        %2405 = vmatpush2.msra.mxu0 %v2214
        %2406 = vmatprep.subr.mxu0 %v2213
        %2407 = vmatpush2.msra.mxu0 %v2212
        %2408 = vmatprep.subr.mxu0 %v2211
        %2409 = vmatpush2.msra.mxu0 %v2210
        %2410 = vmatprep.subr.mxu0 %v2209
        %2411 = vmatpush2.msra.mxu0 %v2208
        %2412 = vmatprep.subr.mxu0 %v2207
        %2413 = vmatpush2.msra.mxu0 %v2206
        %2414 = vmatprep.subr.mxu0 %v2205
        %2415 = vmatpush2.msra.mxu0 %v2204
        %2416 = vmatprep.subr.mxu0 %v2203
        %2417 = vmatpush2.msra.mxu0 %v2202
        %2418 = vmatprep.subr.mxu0 %v2201
        %2419 = vmatpush2.msra.mxu0 %v2200
        %2420 = vmatprep.subr.mxu0 %v2199
        %2421 = vmatpush2.msra.mxu0 %v2198
        %2422 = vmatprep.mubr.f32.mxu0 %v2161
        %2423 = vmatmul.mubr.f32.gmra.mxu0 %v2160
        %v2424 = vpop.f32.mrf.mxu0
        %v2425 = vadd.f32 0.0, %v2424
        %v2426 = vpop.f32.mrf.mxu0
        %v2427 = vadd.f32 0.0, %v2426
        %2428 = vdwg.mxu0
        %2429 = vmatprep.subr.mxu0 %v2261
        %2430 = vmatpush1.msra.mxu0 %v2260
        %2431 = vmatprep.subr.mxu0 %v2259
        %2432 = vmatpush1.msra.mxu0 %v2258
        %2433 = vmatprep.subr.mxu0 %v2257
        %2434 = vmatpush1.msra.mxu0 %v2256
        %2435 = vmatprep.subr.mxu0 %v2255
        %2436 = vmatpush1.msra.mxu0 %v2254
        %2437 = vmatprep.subr.mxu0 %v2253
        %2438 = vmatpush1.msra.mxu0 %v2252
        %2439 = vmatprep.subr.mxu0 %v2251
        %2440 = vmatpush1.msra.mxu0 %v2250
        %2441 = vmatprep.subr.mxu0 %v2249
        %2442 = vmatpush1.msra.mxu0 %v2248
        %2443 = vmatprep.subr.mxu0 %v2247
        %2444 = vmatpush1.msra.mxu0 %v2246
        %2445 = vmatprep.subr.mxu0 %v2245
        %2446 = vmatpush1.msra.mxu0 %v2244
        %2447 = vmatprep.subr.mxu0 %v2243
        %2448 = vmatpush1.msra.mxu0 %v2242
        %2449 = vmatprep.subr.mxu0 %v2241
        %2450 = vmatpush1.msra.mxu0 %v2240
        %2451 = vmatprep.subr.mxu0 %v2239
        %2452 = vmatpush1.msra.mxu0 %v2238
        %2453 = vmatprep.subr.mxu0 %v2237
        %2454 = vmatpush1.msra.mxu0 %v2236
        %2455 = vmatprep.subr.mxu0 %v2235
        %2456 = vmatpush1.msra.mxu0 %v2234
        %2457 = vmatprep.subr.mxu0 %v2233
        %2458 = vmatpush1.msra.mxu0 %v2232
        %2459 = vmatprep.subr.mxu0 %v2231
        %2460 = vmatpush1.msra.mxu0 %v2230
        %2461 = vmatprep.subr.mxu0 %v2293
        %2462 = vmatpush2.msra.mxu0 %v2292
        %2463 = vmatprep.subr.mxu0 %v2291
        %2464 = vmatpush2.msra.mxu0 %v2290
        %2465 = vmatprep.subr.mxu0 %v2289
        %2466 = vmatpush2.msra.mxu0 %v2288
        %2467 = vmatprep.subr.mxu0 %v2287
        %2468 = vmatpush2.msra.mxu0 %v2286
        %2469 = vmatprep.subr.mxu0 %v2285
        %2470 = vmatpush2.msra.mxu0 %v2284
        %2471 = vmatprep.subr.mxu0 %v2283
        %2472 = vmatpush2.msra.mxu0 %v2282
        %2473 = vmatprep.subr.mxu0 %v2281
        %2474 = vmatpush2.msra.mxu0 %v2280
        %2475 = vmatprep.subr.mxu0 %v2279
        %2476 = vmatpush2.msra.mxu0 %v2278
        %2477 = vmatprep.subr.mxu0 %v2277
        %2478 = vmatpush2.msra.mxu0 %v2276
        %2479 = vmatprep.subr.mxu0 %v2275
        %2480 = vmatpush2.msra.mxu0 %v2274
        %2481 = vmatprep.subr.mxu0 %v2273
        %2482 = vmatpush2.msra.mxu0 %v2272
        %2483 = vmatprep.subr.mxu0 %v2271
        %2484 = vmatpush2.msra.mxu0 %v2270
        %2485 = vmatprep.subr.mxu0 %v2269
        %2486 = vmatpush2.msra.mxu0 %v2268
        %2487 = vmatprep.subr.mxu0 %v2267
        %2488 = vmatpush2.msra.mxu0 %v2266
        %2489 = vmatprep.subr.mxu0 %v2265
        %2490 = vmatpush2.msra.mxu0 %v2264
        %2491 = vmatprep.subr.mxu0 %v2263
        %2492 = vmatpush2.msra.mxu0 %v2262
        %2493 = vmatprep.mubr.f32.mxu0 %v2163
        %2494 = vmatmul.mubr.f32.gmra.mxu0 %v2162
        %v2495 = vpop.f32.mrf.mxu0
        %v2496 = vadd.f32 %v2425, %v2495
        %v2497 = vpop.f32.mrf.mxu0
        %v2498 = vadd.f32 %v2427, %v2497
        %2499 = vdwg.mxu0
        %2500 = vmatprep.subr.mxu0 %v2325
        %2501 = vmatpush1.msra.mxu0 %v2324
        %2502 = vmatprep.subr.mxu0 %v2323
        %2503 = vmatpush1.msra.mxu0 %v2322
        %2504 = vmatprep.subr.mxu0 %v2321
        %2505 = vmatpush1.msra.mxu0 %v2320
        %2506 = vmatprep.subr.mxu0 %v2319
        %2507 = vmatpush1.msra.mxu0 %v2318
        %2508 = vmatprep.subr.mxu0 %v2317
        %2509 = vmatpush1.msra.mxu0 %v2316
        %2510 = vmatprep.subr.mxu0 %v2315
        %2511 = vmatpush1.msra.mxu0 %v2314
        %2512 = vmatprep.subr.mxu0 %v2313
        %2513 = vmatpush1.msra.mxu0 %v2312
        %2514 = vmatprep.subr.mxu0 %v2311
        %2515 = vmatpush1.msra.mxu0 %v2310
        %2516 = vmatprep.subr.mxu0 %v2309
        %2517 = vmatpush1.msra.mxu0 %v2308
        %2518 = vmatprep.subr.mxu0 %v2307
        %2519 = vmatpush1.msra.mxu0 %v2306
        %2520 = vmatprep.subr.mxu0 %v2305
        %2521 = vmatpush1.msra.mxu0 %v2304
        %2522 = vmatprep.subr.mxu0 %v2303
        %2523 = vmatpush1.msra.mxu0 %v2302
        %2524 = vmatprep.subr.mxu0 %v2301
        %2525 = vmatpush1.msra.mxu0 %v2300
        %2526 = vmatprep.subr.mxu0 %v2299
        %2527 = vmatpush1.msra.mxu0 %v2298
        %2528 = vmatprep.subr.mxu0 %v2297
        %2529 = vmatpush1.msra.mxu0 %v2296
        %2530 = vmatprep.subr.mxu0 %v2295
        %2531 = vmatpush1.msra.mxu0 %v2294
        %2532 = vmatprep.subr.mxu0 %v2357
        %2533 = vmatpush2.msra.mxu0 %v2356
        %2534 = vmatprep.subr.mxu0 %v2355
        %2535 = vmatpush2.msra.mxu0 %v2354
        %2536 = vmatprep.subr.mxu0 %v2353
        %2537 = vmatpush2.msra.mxu0 %v2352
        %2538 = vmatprep.subr.mxu0 %v2351
        %2539 = vmatpush2.msra.mxu0 %v2350
        %2540 = vmatprep.subr.mxu0 %v2349
        %2541 = vmatpush2.msra.mxu0 %v2348
        %2542 = vmatprep.subr.mxu0 %v2347
        %2543 = vmatpush2.msra.mxu0 %v2346
        %2544 = vmatprep.subr.mxu0 %v2345
        %2545 = vmatpush2.msra.mxu0 %v2344
        %2546 = vmatprep.subr.mxu0 %v2343
        %2547 = vmatpush2.msra.mxu0 %v2342
        %2548 = vmatprep.subr.mxu0 %v2341
        %2549 = vmatpush2.msra.mxu0 %v2340
        %2550 = vmatprep.subr.mxu0 %v2339
        %2551 = vmatpush2.msra.mxu0 %v2338
        %2552 = vmatprep.subr.mxu0 %v2337
        %2553 = vmatpush2.msra.mxu0 %v2336
        %2554 = vmatprep.subr.mxu0 %v2335
        %2555 = vmatpush2.msra.mxu0 %v2334
        %2556 = vmatprep.subr.mxu0 %v2333
        %2557 = vmatpush2.msra.mxu0 %v2332
        %2558 = vmatprep.subr.mxu0 %v2331
        %2559 = vmatpush2.msra.mxu0 %v2330
        %2560 = vmatprep.subr.mxu0 %v2329
        %2561 = vmatpush2.msra.mxu0 %v2328
        %2562 = vmatprep.subr.mxu0 %v2327
        %2563 = vmatpush2.msra.mxu0 %v2326
        %2564 = vmatprep.mubr.f32.mxu0 %v2165
        %2565 = vmatmul.mubr.f32.gmra.mxu0 %v2164
        %v2566 = vpop.f32.mrf.mxu0
        %v2567 = vadd.f32 %v2496, %v2566
        %v2568 = vpop.f32.mrf.mxu0
        %v2569 = vadd.f32 %v2498, %v2568
        %2570 = vdwg.mxu0
        %v2571 = vadd.f32 %v1288, %v2567
        %v2572 = vadd.f32 %v1289, %v2569
        %2573 = vst [vmem:[%s456] sm:$0xff] %v2571
        %2574 = vst [vmem:[%s456 + $0x8] sm:$0xff] %v2572
        %s2575 = sand.u32 %s232, 1
        %s2576 = scalar_lea.sflag [#allocation4], %s2575
        %s2577 = sand.u32 %s232, 1
        %s2578 = smul.addr %s2577, 16
        %s2579 = scalar_lea.vmem [#allocation17], %s2578
        // Predicated region
        $region93: #{tpu_custom_call.1} parent=55 // pred_check
          %p2580 = pneg %p242
        $region94: #{tpu_custom_call.1} parent=55 // pred_check_branch
          %2582 = sbr.rel (%p2580) target = $region96
        $region95: #{tpu_custom_call.1} parent=55 // pred_region
          %s2584 = ssub.s32 256, 256
          %2585 = vsyncadd %s2576, %s2584
          %s2586 = smul.addr %s30, 2
          %s2587 = smul.addr %s2586, 128
          %s2588 = scalar_lea.hbm %s9, %s2587
          %s2590 = sshll.u32 %s2579, 4
          %s2591 = int_to_ptr.vmem [resolvable:$true] %s2590
          %2593 = dma.vmem_to_hbm [thread:$0]  %s2591, 256, %s2588, %s2576
        $region96: #{tpu_custom_call.1} parent=55 // pred_fallthru
          _
      $region56: #{tpu_custom_call.1} parent=5 // pred_fallthru
        _
      %p2594 = scmp.le.s32.totalorder 2, %s25
      // Predicated region
      $region97: #{tpu_custom_call.1} parent=5 // pred_check
        %p2595 = pneg %p2594
      $region98: #{tpu_custom_call.1} parent=5 // pred_check_branch
        %2597 = sbr.rel (%p2595) target = $region100
      $region99: #{tpu_custom_call.1} parent=5 // pred_region
        %s2598 = ssub.s32 %s25, 2
        // Predicated region
        $region101: #{tpu_custom_call.1} parent=99 // pred_check
          %p2599 = pneg %p248
        $region102: #{tpu_custom_call.1} parent=99 // pred_check_branch
          %2601 = sbr.rel (%p2599) target = $region104
        $region103: #{tpu_custom_call.1} parent=99 // pred_region
          %s2602 = sand.u32 %s233, 1
          %s2603 = scalar_lea.sflag [#allocation4], %s2602
          %s2604 = sand.u32 %s233, 1
          %s2605 = smul.addr %s2604, 16
          %s2606 = scalar_lea.vmem [#allocation17], %s2605
          %2607 = dma.done %s2603, 256
        $region104: #{tpu_custom_call.1} parent=99 // pred_fallthru
          _
      $region100: #{tpu_custom_call.1} parent=5 // pred_fallthru
        _
    $region6: #{tpu_custom_call.1} parent=1 // loop_footer
      %s29 = sadd.s32 1, %s25
    $region7: #{tpu_custom_call.1} parent=1 // loop_footer_branch
      %24 = sbr.rel target = $region3
    $region8: #{tpu_custom_call.1} parent=1 // loop_exit
      _
    %2608 = vsyncpa [#allocation3], 1
    %s2609 = scalar_lea.sflag [#allocation3], 1
    %2610 = vsyncpa %s2609, 1
    %2611 = vsyncpa [#allocation6], 1
    %2612 = vsyncpa [#allocation9], 1
    %2613 = vsyncpa [#allocation12], 1
    %2614 = vsyncpa [#allocation15], 1
    %2615 = vsyncpa [#allocation4], 1
    %s2616 = scalar_lea.sflag [#allocation4], 1
    %2617 = vsyncpa %s2616, 1

</llo_original>
